<compile_context>
chip_gen: v7x
topology: tpu7x:2x2x1
jax: 0.10.0
libtpu: 0.0.40
codegen_flags: <defaults>
</compile_context>

<pallas_src>
import functools

import jax
import jax.numpy as jnp
from jax.experimental import pallas as pl
from jax.experimental.pallas import tpu as pltpu


# ----------------------------------------------------------------------------
# Kernel 1: fused  tanh(z @ W1 + b1) @ W_ih_all(layer0) + b_all(layer0)
# Bulk over tokens (grid axis "parallel"); nothing of it stays in the time loop.
# ----------------------------------------------------------------------------
def _zproj_kernel(z_ref, w1_ref, b1_ref, wih_ref, b_ref, o_ref):
    x = jnp.tanh(
        jnp.dot(z_ref[...], w1_ref[...], preferred_element_type=jnp.float32)
        + b1_ref[...])
    g = jnp.dot(x, wih_ref[...], preferred_element_type=jnp.float32) + b_ref[...]
    o_ref[0] = g.astype(o_ref.dtype)


def pallas_layer0_gates(z_flat, w1T, b1, w_ihT0, b_all0, *, tokens_per_block):
    """z_flat: (S*Bp, z_dim) time-major tokens -> (nb, tokens_per_block, 4H)."""
    M, z_dim = z_flat.shape
    hidden = w1T.shape[1]
    G = w_ihT0.shape[1]                       # 4H
    nb = M // tokens_per_block

    grid_spec = pltpu.PrefetchScalarGridSpec(
        num_scalar_prefetch=0,
        grid=(nb,),
        in_specs=[
            pl.BlockSpec((tokens_per_block, z_dim), lambda i: (i, 0)),
            pl.BlockSpec((z_dim, hidden), lambda i: (0, 0)),
            pl.BlockSpec((1, hidden), lambda i: (0, 0)),
            pl.BlockSpec((hidden, G), lambda i: (0, 0)),
            pl.BlockSpec((1, G), lambda i: (0, 0)),
        ],
        out_specs=pl.BlockSpec((1, tokens_per_block, G), lambda i: (i, 0, 0)),
    )
    return pl.pallas_call(
        _zproj_kernel,
        out_shape=jax.ShapeDtypeStruct((nb, tokens_per_block, G), jnp.float32),
        grid_spec=grid_spec,
        compiler_params=pltpu.CompilerParams(
            dimension_semantics=("parallel",)),
    )(z_flat, w1T, b1, w_ihT0, b_all0)


# ----------------------------------------------------------------------------
# Kernel 2: one LSTM layer over a block of T_blk timesteps per grid step.
#   - gx_ref holds pre-projected x-gates (+ folded bias) for the block.
#   - only h @ W_hh_all (one lane-dense 4H matmul) sits in the unrolled loop.
#   - epilogue projects the whole block of hidden states at once with W_out:
#     W_out is the NEXT layer's W_ih_all (so its x-projection is also hoisted)
#     or linear2's weight for the last layer.
# Gate order follows PyTorch packing: i, f, g, o.
# ----------------------------------------------------------------------------
def _lstm_block_kernel(gx_ref, whh_ref, wout_ref, bout_ref, o_ref,
                       h_scr, c_scr, *, t_blk, b_pad, hdim):
    tb = pl.program_id(0)

    @pl.when(tb == 0)
    def _():
        h_scr[...] = jnp.zeros_like(h_scr)
        c_scr[...] = jnp.zeros_like(c_scr)

    gx_all = gx_ref[0]                        # (t_blk*b_pad, 4H)
    whh = whh_ref[...]                        # (H, 4H)
    h = h_scr[...]
    c = c_scr[...]

    hs = []
    for tt in range(t_blk):                   # statically unrolled recurrence
        gates = gx_all[tt * b_pad:(tt + 1) * b_pad, :] + jnp.dot(
            h, whh, preferred_element_type=jnp.float32)          # (b_pad, 4H)
        i = jax.nn.sigmoid(gates[:, 0 * hdim:1 * hdim])
        f = jax.nn.sigmoid(gates[:, 1 * hdim:2 * hdim])
        g = jnp.tanh(gates[:, 2 * hdim:3 * hdim])
        o = jax.nn.sigmoid(gates[:, 3 * hdim:4 * hdim])
        c = f * c + i * g
        h = o * jnp.tanh(c)
        hs.append(h)

    h_scr[...] = h
    c_scr[...] = c

    # Fused block epilogue: one (t_blk*b_pad, H) @ (H, N_out) matmul, written
    # as a single lane-dense slab.
    hs_all = jnp.concatenate(hs, axis=0)                          # (t_blk*b_pad, H)
    y = jnp.dot(hs_all, wout_ref[...], preferred_element_type=jnp.float32)
    y = y + bout_ref[...]
    o_ref[0] = y.astype(o_ref.dtype)


def pallas_lstm_layer(gates_x, w_hhT, w_outT, b_out, *, t_blk, b_pad):
    """gates_x: (nb, t_blk*b_pad, 4H) pre-projected x-gates (+bias) of this layer.
    Returns (nb, t_blk*b_pad, N_out); N_out = 4H of the next layer, or inp_dim."""
    nb, rows, G = gates_x.shape
    hdim = w_hhT.shape[0]
    n_out = w_outT.shape[1]

    grid_spec = pltpu.PrefetchScalarGridSpec(
        num_scalar_prefetch=0,
        grid=(nb,),
        in_specs=[
            pl.BlockSpec((1, rows, G), lambda i: (i, 0, 0)),
            pl.BlockSpec((hdim, G), lambda i: (0, 0)),
            pl.BlockSpec((hdim, n_out), lambda i: (0, 0)),
            pl.BlockSpec((1, n_out), lambda i: (0, 0)),
        ],
        out_specs=pl.BlockSpec((1, rows, n_out), lambda i: (i, 0, 0)),
        scratch_shapes=[pltpu.VMEM((b_pad, hdim), jnp.float32),   # h carry
                        pltpu.VMEM((b_pad, hdim), jnp.float32)],  # c carry
    )
    return pl.pallas_call(
        functools.partial(_lstm_block_kernel, t_blk=t_blk, b_pad=b_pad, hdim=hdim),
        out_shape=jax.ShapeDtypeStruct((nb, rows, n_out), jnp.float32),
        grid_spec=grid_spec,
        compiler_params=pltpu.CompilerParams(
            dimension_semantics=("arbitrary",)),   # recurrence => sequential grid
    )(gates_x, w_hhT, w_outT, b_out)


# ----------------------------------------------------------------------------
# Parameters: PyTorch-shaped construction + one-time host-side preparation
# (transposes, gate concatenation, bias folding) so no per-forward reshuffling.
# ----------------------------------------------------------------------------
def init_params(key, inp_dim, z_dim, hidden_dim, rnn_hidden_dim, num_layers):
    keys = jax.random.split(key, 4 + 4 * num_layers)
    k = iter(keys)

    def rnd(kk, shape, scale=0.1):
        return (scale * jax.random.normal(kk, shape)).astype(jnp.float32)

    params = {
        "w1": rnd(next(k), (hidden_dim, z_dim)),     # nn.Linear(z_dim, hidden_dim).weight
        "b1": rnd(next(k), (hidden_dim,)),
        "w2": rnd(next(k), (inp_dim, rnn_hidden_dim)),
        "b2": rnd(next(k), (inp_dim,)),
        "lstm": [],
    }
    for layer in range(num_layers):
        in_dim = hidden_dim if layer == 0 else rnn_hidden_dim
        params["lstm"].append({
            "w_ih": rnd(next(k), (4 * rnn_hidden_dim, in_dim)),
            "w_hh": rnd(next(k), (4 * rnn_hidden_dim, rnn_hidden_dim)),
            "b_ih": rnd(next(k), (4 * rnn_hidden_dim,)),
            "b_hh": rnd(next(k), (4 * rnn_hidden_dim,)),
        })
    return params


def prepare_params(params, weight_dtype=jnp.float32):
    """One-time prep.  weight_dtype=jnp.bfloat16 halves weight DMA/VMEM on
    v6e/v7x (accumulation stays f32 via preferred_element_type)."""
    prepared = {
        "w1T": params["w1"].T.astype(weight_dtype),              # (z_dim, hidden)
        "b1": params["b1"].reshape(1, -1).astype(jnp.float32),
        "w2T": params["w2"].T.astype(weight_dtype),              # (H, inp_dim)
        "b2": params["b2"].reshape(1, -1).astype(jnp.float32),
        "layers": [],
    }
    for lp in params["lstm"]:
        # PyTorch packs gate rows as [i; f; g; o] along dim 0 of (4H, *);
        # transposing keeps that order along lanes of the (in, 4H) matrices.
        prepared["layers"].append({
            "w_ihT": lp["w_ih"].T.astype(weight_dtype),          # (Hin, 4H)
            "w_hhT": lp["w_hh"].T.astype(weight_dtype),          # (H, 4H)
            "b": (lp["b_ih"] + lp["b_hh"]).reshape(1, -1).astype(jnp.float32),
        })
    return prepared


def _pick_time_block(seq_len, target=16):
    t = max(1, min(target, seq_len))
    while seq_len % t != 0:
        t -= 1
    return t


def rnn_decoder_forward(prepared, z, *, time_block_target=16):
    """z: (B, S, z_dim) -> (B, S, inp_dim), matching PyTorch RNNDecoder.forward."""
    B, S, z_dim = z.shape
    inp_dim = prepared["w2T"].shape[1]
    num_layers = len(prepared["layers"])

    # Pad batch (sublane dim) to a multiple of 8 so vregs / stores are full.
    b_pad = ((B + 7) // 8) * 8
    t_blk = _pick_time_block(S, time_block_target)
    rows = t_blk * b_pad

    z_p = jnp.pad(z.astype(jnp.float32), ((0, b_pad - B), (0, 0), (0, 0)))
    # permute(1, 0, 2): batch-major -> time-major; flatten tokens (row = s*b_pad + b)
    z_flat = jnp.transpose(z_p, (1, 0, 2)).reshape(S * b_pad, z_dim)

    # Fused linear1 + tanh + layer-0 input projection (+ folded gate bias).
    gx = pallas_layer0_gates(
        z_flat, prepared["w1T"], prepared["b1"],
        prepared["layers"][0]["w_ihT"], prepared["layers"][0]["b"],
        tokens_per_block=rows)                                   # (nb, rows, 4H)

    # Stacked LSTM layers.  Each layer's kernel also performs the NEXT layer's
    # input projection (or linear2 for the last layer) as a fused, lane-dense
    # block epilogue, so raw hidden states never round-trip HBM.
    for layer_idx in range(num_layers):
        last = layer_idx == num_layers - 1
        w_out = prepared["w2T"] if last else prepared["layers"][layer_idx + 1]["w_ihT"]
        b_out = prepared["b2"] if last else prepared["layers"][layer_idx + 1]["b"]
        gx = pallas_lstm_layer(
            gx, prepared["layers"][layer_idx]["w_hhT"], w_out, b_out,
            t_blk=t_blk, b_pad=b_pad)                            # (nb, rows, ...)

    re_x = gx.reshape(S, b_pad, inp_dim)[:, :B, :]               # drop batch padding
    return jnp.transpose(re_x, (1, 0, 2))                        # (B, S, inp_dim)


# ----------------------------------------------------------------------------
# Pure-JAX reference (lax.scan LSTM) for the correctness check.
# ----------------------------------------------------------------------------
def rnn_decoder_reference(params, z):
    zt = jnp.transpose(z, (1, 0, 2)).astype(jnp.float32)
    x = jnp.tanh(zt @ params["w1"].T + params["b1"])
    H = params["lstm"][0]["w_hh"].shape[1]
    B = z.shape[0]

    for lp in params["lstm"]:
        w_ih, w_hh = lp["w_ih"], lp["w_hh"]
        b = lp["b_ih"] + lp["b_hh"]

        def step(carry, xt):
            h, c = carry
            gates = xt @ w_ih.T + h @ w_hh.T + b
            i, f, g, o = jnp.split(gates, 4, axis=-1)
            i, f, o = jax.nn.sigmoid(i), jax.nn.sigmoid(f), jax.nn.sigmoid(o)
            g = jnp.tanh(g)
            c = f * c + i * g
            h = o * jnp.tanh(c)
            return (h, c), h

        init = (jnp.zeros((B, H), jnp.float32), jnp.zeros((B, H), jnp.float32))
        _, x = jax.lax.scan(step, init, x)

    out = x @ params["w2"].T + params["b2"]
    return jnp.transpose(out, (1, 0, 2))


if __name__ == "__main__":
    # small deterministic configuration
    batch, seq = 2, 8
    inp_dim, z_dim, hidden_dim, rnn_hidden_dim, num_layers = 6, 4, 16, 32, 2

    key = jax.random.PRNGKey(0)
    pkey, zkey = jax.random.split(key)
    params = init_params(pkey, inp_dim, z_dim, hidden_dim, rnn_hidden_dim, num_layers)
    prepared = prepare_params(params)                            # f32 for exact check
    z = jax.random.normal(zkey, (batch, seq, z_dim), dtype=jnp.float32)

    fwd = jax.jit(rnn_decoder_forward)
    out = jax.block_until_ready(fwd(prepared, z))
    ref = jax.block_until_ready(rnn_decoder_reference(params, z))

    assert out.shape == (batch, seq, inp_dim), out.shape
    max_err = float(jnp.max(jnp.abs(out - ref)))
    assert jnp.allclose(out, ref, atol=1e-4, rtol=1e-4), max_err
    print("KERNEL_OK")
</pallas_src>

<mosaic_0001>
module attributes {stable_mosaic.version = 11 : i64} {
  func.func @_zproj_kernel(%arg0: i32, %arg1: memref<64x4xf32, #tpu.memory_space<vmem>>, %arg2: memref<4x16xf32, #tpu.memory_space<vmem>>, %arg3: memref<1x16xf32, #tpu.memory_space<vmem>>, %arg4: memref<16x128xf32, #tpu.memory_space<vmem>>, %arg5: memref<1x128xf32, #tpu.memory_space<vmem>>, %arg6: memref<1x64x128xf32, #tpu.memory_space<vmem>>) attributes {dimension_semantics = [#tpu.dimension_semantics<parallel>], iteration_bounds = array<i64: 1>, scalar_prefetch = 0 : i64, scratch_operands = 0 : i64, tpu.core_type = #tpu.core_type<tc>, window_params = [{transform_indices = @transform_0, window_bounds = array<i64: 64, 4>}, {pipeline_mode = #tpu.pipeline_mode<synchronous>, transform_indices = @transform_1, window_bounds = array<i64: 4, 16>}, {pipeline_mode = #tpu.pipeline_mode<synchronous>, transform_indices = @transform_2, window_bounds = array<i64: 1, 16>}, {pipeline_mode = #tpu.pipeline_mode<synchronous>, transform_indices = @transform_3, window_bounds = array<i64: 16, 128>}, {pipeline_mode = #tpu.pipeline_mode<synchronous>, transform_indices = @transform_4, window_bounds = array<i64: 1, 128>}, {transform_indices = @transform_5, window_bounds = array<i64: 1, 64, 128>}]} {
    %c0 = arith.constant 0 : index
    %c0_0 = arith.constant 0 : index
    %0 = vector.load %arg1[%c0, %c0_0] : memref<64x4xf32, #tpu.memory_space<vmem>>, vector<64x4xf32>
    %c0_1 = arith.constant 0 : index
    %c0_2 = arith.constant 0 : index
    %1 = vector.load %arg2[%c0_1, %c0_2] : memref<4x16xf32, #tpu.memory_space<vmem>>, vector<4x16xf32>
    %cst = arith.constant dense<0.000000e+00> : vector<64x16xf32>
    %2 = tpu.matmul %0, %1, %cst {dimension_numbers = #tpu.dot_dimension_numbers<[1], [0], [0], [1], [0, 0, 1, 1], [], []>} : vector<64x4xf32>, vector<4x16xf32>, vector<64x16xf32> -> vector<64x16xf32>
    %c0_3 = arith.constant 0 : index
    %c0_4 = arith.constant 0 : index
    %3 = vector.load %arg3[%c0_3, %c0_4] : memref<1x16xf32, #tpu.memory_space<vmem>>, vector<1x16xf32>
    %4 = vector.broadcast %3 : vector<1x16xf32> to vector<64x16xf32>
    %5 = arith.addf %2, %4 : vector<64x16xf32>
    %6 = math.tanh %5 : vector<64x16xf32>
    %c0_5 = arith.constant 0 : index
    %c0_6 = arith.constant 0 : index
    %7 = vector.load %arg4[%c0_5, %c0_6] : memref<16x128xf32, #tpu.memory_space<vmem>>, vector<16x128xf32>
    %cst_7 = arith.constant dense<0.000000e+00> : vector<64x128xf32>
    %8 = tpu.matmul %6, %7, %cst_7 {dimension_numbers = #tpu.dot_dimension_numbers<[1], [0], [0], [1], [0, 0, 1, 1], [], []>} : vector<64x16xf32>, vector<16x128xf32>, vector<64x128xf32> -> vector<64x128xf32>
    %c0_8 = arith.constant 0 : index
    %c0_9 = arith.constant 0 : index
    %9 = vector.load %arg5[%c0_8, %c0_9] : memref<1x128xf32, #tpu.memory_space<vmem>>, vector<1x128xf32>
    %10 = vector.broadcast %9 : vector<1x128xf32> to vector<64x128xf32>
    %11 = arith.addf %8, %10 : vector<64x128xf32>
    %c0_10 = arith.constant 0 : index
    %c0_11 = arith.constant 0 : index
    %c0_12 = arith.constant 0 : index
    %12 = vector.load %arg6[%c0_10, %c0_11, %c0_12] : memref<1x64x128xf32, #tpu.memory_space<vmem>>, vector<1x64x128xf32>
    %13 = vector.shape_cast %12 : vector<1x64x128xf32> to vector<64x128xf32>
    %14 = vector.shape_cast %11 : vector<64x128xf32> to vector<1x64x128xf32>
    tpu.vector_store %arg6[%c0_10, %c0_11, %c0_12], %14 {strides = array<i32>} : memref<1x64x128xf32, #tpu.memory_space<vmem>>, vector<1x64x128xf32>,
    return
  }
  func.func @transform_0(%arg0: i32) -> (i32, i32) {
    %c0_i32 = arith.constant 0 : i32
    %c0_i32_0 = arith.constant 0 : i32
    return %arg0, %c0_i32 : i32, i32
  }
  func.func @transform_1(%arg0: i32) -> (i32, i32) {
    %c0_i32 = arith.constant 0 : i32
    %c0_i32_0 = arith.constant 0 : i32
    %c0_i32_1 = arith.constant 0 : i32
    return %c0_i32, %c0_i32_0 : i32, i32
  }
  func.func @transform_2(%arg0: i32) -> (i32, i32) {
    %c0_i32 = arith.constant 0 : i32
    %c0_i32_0 = arith.constant 0 : i32
    %c0_i32_1 = arith.constant 0 : i32
    return %c0_i32, %c0_i32_0 : i32, i32
  }
  func.func @transform_3(%arg0: i32) -> (i32, i32) {
    %c0_i32 = arith.constant 0 : i32
    %c0_i32_0 = arith.constant 0 : i32
    %c0_i32_1 = arith.constant 0 : i32
    return %c0_i32, %c0_i32_0 : i32, i32
  }
  func.func @transform_4(%arg0: i32) -> (i32, i32) {
    %c0_i32 = arith.constant 0 : i32
    %c0_i32_0 = arith.constant 0 : i32
    %c0_i32_1 = arith.constant 0 : i32
    return %c0_i32, %c0_i32_0 : i32, i32
  }
  func.func @transform_5(%arg0: i32) -> (i32, i32, i32) {
    %c0_i32 = arith.constant 0 : i32
    %c0_i32_0 = arith.constant 0 : i32
    %c0_i32_1 = arith.constant 0 : i32
    return %arg0, %c0_i32, %c0_i32_0 : i32, i32, i32
  }
}

module attributes {stable_mosaic.version = 11 : i64} {
  func.func @_lstm_block_kernel(%arg0: i32, %arg1: memref<1x64x128xf32, #tpu.memory_space<vmem>>, %arg2: memref<32x128xf32, #tpu.memory_space<vmem>>, %arg3: memref<32x128xf32, #tpu.memory_space<vmem>>, %arg4: memref<1x128xf32, #tpu.memory_space<vmem>>, %arg5: memref<1x64x128xf32, #tpu.memory_space<vmem>>, %arg6: memref<8x32xf32, #tpu.memory_space<vmem>>, %arg7: memref<8x32xf32, #tpu.memory_space<vmem>>) attributes {dimension_semantics = [#tpu.dimension_semantics<arbitrary>], iteration_bounds = array<i64: 1>, scalar_prefetch = 0 : i64, scratch_operands = 2 : i64, tpu.core_type = #tpu.core_type<tc>, window_params = [{transform_indices = @transform_0, window_bounds = array<i64: 1, 64, 128>}, {pipeline_mode = #tpu.pipeline_mode<synchronous>, transform_indices = @transform_1, window_bounds = array<i64: 32, 128>}, {pipeline_mode = #tpu.pipeline_mode<synchronous>, transform_indices = @transform_2, window_bounds = array<i64: 32, 128>}, {pipeline_mode = #tpu.pipeline_mode<synchronous>, transform_indices = @transform_3, window_bounds = array<i64: 1, 128>}, {transform_indices = @transform_4, window_bounds = array<i64: 1, 64, 128>}]} {
    %c0_i32 = arith.constant 0 : i32
    %0 = arith.cmpi eq, %arg0, %c0_i32 : i32
    %1 = arith.extui %0 : i1 to i32
    %c0_i32_0 = arith.constant 0 : i32
    %2 = arith.cmpi ne, %1, %c0_i32_0 : i32
    scf.if %2 {
      %cst_52 = arith.constant 0.000000e+00 : f32
      %243 = vector.broadcast %cst_52 : f32 to vector<8x32xf32>
      %c0_53 = arith.constant 0 : index
      %c0_54 = arith.constant 0 : index
      %244 = vector.load %arg6[%c0_53, %c0_54] : memref<8x32xf32, #tpu.memory_space<vmem>>, vector<8x32xf32>
      tpu.vector_store %arg6[%c0_53, %c0_54], %243 {strides = array<i32>} : memref<8x32xf32, #tpu.memory_space<vmem>>, vector<8x32xf32>,
      %cst_55 = arith.constant 0.000000e+00 : f32
      %245 = vector.broadcast %cst_55 : f32 to vector<8x32xf32>
      %c0_56 = arith.constant 0 : index
      %c0_57 = arith.constant 0 : index
      %246 = vector.load %arg7[%c0_56, %c0_57] : memref<8x32xf32, #tpu.memory_space<vmem>>, vector<8x32xf32>
      tpu.vector_store %arg7[%c0_56, %c0_57], %245 {strides = array<i32>} : memref<8x32xf32, #tpu.memory_space<vmem>>, vector<8x32xf32>,
    } else {
    }
    %c0 = arith.constant 0 : index
    %c0_1 = arith.constant 0 : index
    %c0_2 = arith.constant 0 : index
    %3 = vector.load %arg1[%c0, %c0_1, %c0_2] : memref<1x64x128xf32, #tpu.memory_space<vmem>>, vector<1x64x128xf32>
    %4 = vector.shape_cast %3 : vector<1x64x128xf32> to vector<64x128xf32>
    %c0_3 = arith.constant 0 : index
    %c0_4 = arith.constant 0 : index
    %5 = vector.load %arg2[%c0_3, %c0_4] : memref<32x128xf32, #tpu.memory_space<vmem>>, vector<32x128xf32>
    %c0_5 = arith.constant 0 : index
    %c0_6 = arith.constant 0 : index
    %6 = vector.load %arg6[%c0_5, %c0_6] : memref<8x32xf32, #tpu.memory_space<vmem>>, vector<8x32xf32>
    %c0_7 = arith.constant 0 : index
    %c0_8 = arith.constant 0 : index
    %7 = vector.load %arg7[%c0_7, %c0_8] : memref<8x32xf32, #tpu.memory_space<vmem>>, vector<8x32xf32>
    %8 = vector.extract_strided_slice %4 {offsets = [0, 0], sizes = [8, 128], strides = [1, 1]} : vector<64x128xf32> to vector<8x128xf32>
    %cst = arith.constant dense<0.000000e+00> : vector<8x128xf32>
    %9 = tpu.matmul %6, %5, %cst {dimension_numbers = #tpu.dot_dimension_numbers<[1], [0], [0], [1], [0, 0, 1, 1], [], []>} : vector<8x32xf32>, vector<32x128xf32>, vector<8x128xf32> -> vector<8x128xf32>
    %10 = arith.addf %8, %9 : vector<8x128xf32>
    %11 = vector.extract_strided_slice %10 {offsets = [0, 0], sizes = [8, 32], strides = [1, 1]} : vector<8x128xf32> to vector<8x32xf32>
    %12 = arith.negf %11 : vector<8x32xf32>
    %13 = math.exp %12 : vector<8x32xf32>
    %cst_9 = arith.constant 1.000000e+00 : f32
    %14 = vector.broadcast %cst_9 : f32 to vector<8x32xf32>
    %15 = arith.addf %14, %13 : vector<8x32xf32>
    %16 = arith.divf %14, %15 : vector<8x32xf32>
    %17 = vector.extract_strided_slice %10 {offsets = [0, 32], sizes = [8, 32], strides = [1, 1]} : vector<8x128xf32> to vector<8x32xf32>
    %18 = arith.negf %17 : vector<8x32xf32>
    %19 = math.exp %18 : vector<8x32xf32>
    %cst_10 = arith.constant 1.000000e+00 : f32
    %20 = vector.broadcast %cst_10 : f32 to vector<8x32xf32>
    %21 = arith.addf %20, %19 : vector<8x32xf32>
    %22 = arith.divf %20, %21 : vector<8x32xf32>
    %23 = vector.extract_strided_slice %10 {offsets = [0, 64], sizes = [8, 32], strides = [1, 1]} : vector<8x128xf32> to vector<8x32xf32>
    %24 = math.tanh %23 : vector<8x32xf32>
    %25 = vector.extract_strided_slice %10 {offsets = [0, 96], sizes = [8, 32], strides = [1, 1]} : vector<8x128xf32> to vector<8x32xf32>
    %26 = arith.negf %25 : vector<8x32xf32>
    %27 = math.exp %26 : vector<8x32xf32>
    %cst_11 = arith.constant 1.000000e+00 : f32
    %28 = vector.broadcast %cst_11 : f32 to vector<8x32xf32>
    %29 = arith.addf %28, %27 : vector<8x32xf32>
    %30 = arith.divf %28, %29 : vector<8x32xf32>
    %31 = arith.mulf %22, %7 : vector<8x32xf32>
    %32 = arith.mulf %16, %24 : vector<8x32xf32>
    %33 = arith.addf %31, %32 : vector<8x32xf32>
    %34 = math.tanh %33 : vector<8x32xf32>
    %35 = arith.mulf %30, %34 : vector<8x32xf32>
    %36 = vector.extract_strided_slice %4 {offsets = [8, 0], sizes = [8, 128], strides = [1, 1]} : vector<64x128xf32> to vector<8x128xf32>
    %cst_12 = arith.constant dense<0.000000e+00> : vector<8x128xf32>
    %37 = tpu.matmul %35, %5, %cst_12 {dimension_numbers = #tpu.dot_dimension_numbers<[1], [0], [0], [1], [0, 0, 1, 1], [], []>} : vector<8x32xf32>, vector<32x128xf32>, vector<8x128xf32> -> vector<8x128xf32>
    %38 = arith.addf %36, %37 : vector<8x128xf32>
    %39 = vector.extract_strided_slice %38 {offsets = [0, 0], sizes = [8, 32], strides = [1, 1]} : vector<8x128xf32> to vector<8x32xf32>
    %40 = arith.negf %39 : vector<8x32xf32>
    %41 = math.exp %40 : vector<8x32xf32>
    %cst_13 = arith.constant 1.000000e+00 : f32
    %42 = vector.broadcast %cst_13 : f32 to vector<8x32xf32>
    %43 = arith.addf %42, %41 : vector<8x32xf32>
    %44 = arith.divf %42, %43 : vector<8x32xf32>
    %45 = vector.extract_strided_slice %38 {offsets = [0, 32], sizes = [8, 32], strides = [1, 1]} : vector<8x128xf32> to vector<8x32xf32>
    %46 = arith.negf %45 : vector<8x32xf32>
    %47 = math.exp %46 : vector<8x32xf32>
    %cst_14 = arith.constant 1.000000e+00 : f32
    %48 = vector.broadcast %cst_14 : f32 to vector<8x32xf32>
    %49 = arith.addf %48, %47 : vector<8x32xf32>
    %50 = arith.divf %48, %49 : vector<8x32xf32>
    %51 = vector.extract_strided_slice %38 {offsets = [0, 64], sizes = [8, 32], strides = [1, 1]} : vector<8x128xf32> to vector<8x32xf32>
    %52 = math.tanh %51 : vector<8x32xf32>
    %53 = vector.extract_strided_slice %38 {offsets = [0, 96], sizes = [8, 32], strides = [1, 1]} : vector<8x128xf32> to vector<8x32xf32>
    %54 = arith.negf %53 : vector<8x32xf32>
    %55 = math.exp %54 : vector<8x32xf32>
    %cst_15 = arith.constant 1.000000e+00 : f32
    %56 = vector.broadcast %cst_15 : f32 to vector<8x32xf32>
    %57 = arith.addf %56, %55 : vector<8x32xf32>
    %58 = arith.divf %56, %57 : vector<8x32xf32>
    %59 = arith.mulf %50, %33 : vector<8x32xf32>
    %60 = arith.mulf %44, %52 : vector<8x32xf32>
    %61 = arith.addf %59, %60 : vector<8x32xf32>
    %62 = math.tanh %61 : vector<8x32xf32>
    %63 = arith.mulf %58, %62 : vector<8x32xf32>
    %64 = vector.extract_strided_slice %4 {offsets = [16, 0], sizes = [8, 128], strides = [1, 1]} : vector<64x128xf32> to vector<8x128xf32>
    %cst_16 = arith.constant dense<0.000000e+00> : vector<8x128xf32>
    %65 = tpu.matmul %63, %5, %cst_16 {dimension_numbers = #tpu.dot_dimension_numbers<[1], [0], [0], [1], [0, 0, 1, 1], [], []>} : vector<8x32xf32>, vector<32x128xf32>, vector<8x128xf32> -> vector<8x128xf32>
    %66 = arith.addf %64, %65 : vector<8x128xf32>
    %67 = vector.extract_strided_slice %66 {offsets = [0, 0], sizes = [8, 32], strides = [1, 1]} : vector<8x128xf32> to vector<8x32xf32>
    %68 = arith.negf %67 : vector<8x32xf32>
    %69 = math.exp %68 : vector<8x32xf32>
    %cst_17 = arith.constant 1.000000e+00 : f32
    %70 = vector.broadcast %cst_17 : f32 to vector<8x32xf32>
    %71 = arith.addf %70, %69 : vector<8x32xf32>
    %72 = arith.divf %70, %71 : vector<8x32xf32>
    %73 = vector.extract_strided_slice %66 {offsets = [0, 32], sizes = [8, 32], strides = [1, 1]} : vector<8x128xf32> to vector<8x32xf32>
    %74 = arith.negf %73 : vector<8x32xf32>
    %75 = math.exp %74 : vector<8x32xf32>
    %cst_18 = arith.constant 1.000000e+00 : f32
    %76 = vector.broadcast %cst_18 : f32 to vector<8x32xf32>
    %77 = arith.addf %76, %75 : vector<8x32xf32>
    %78 = arith.divf %76, %77 : vector<8x32xf32>
    %79 = vector.extract_strided_slice %66 {offsets = [0, 64], sizes = [8, 32], strides = [1, 1]} : vector<8x128xf32> to vector<8x32xf32>
    %80 = math.tanh %79 : vector<8x32xf32>
    %81 = vector.extract_strided_slice %66 {offsets = [0, 96], sizes = [8, 32], strides = [1, 1]} : vector<8x128xf32> to vector<8x32xf32>
    %82 = arith.negf %81 : vector<8x32xf32>
    %83 = math.exp %82 : vector<8x32xf32>
    %cst_19 = arith.constant 1.000000e+00 : f32
    %84 = vector.broadcast %cst_19 : f32 to vector<8x32xf32>
    %85 = arith.addf %84, %83 : vector<8x32xf32>
    %86 = arith.divf %84, %85 : vector<8x32xf32>
    %87 = arith.mulf %78, %61 : vector<8x32xf32>
    %88 = arith.mulf %72, %80 : vector<8x32xf32>
    %89 = arith.addf %87, %88 : vector<8x32xf32>
    %90 = math.tanh %89 : vector<8x32xf32>
    %91 = arith.mulf %86, %90 : vector<8x32xf32>
    %92 = vector.extract_strided_slice %4 {offsets = [24, 0], sizes = [8, 128], strides = [1, 1]} : vector<64x128xf32> to vector<8x128xf32>
    %cst_20 = arith.constant dense<0.000000e+00> : vector<8x128xf32>
    %93 = tpu.matmul %91, %5, %cst_20 {dimension_numbers = #tpu.dot_dimension_numbers<[1], [0], [0], [1], [0, 0, 1, 1], [], []>} : vector<8x32xf32>, vector<32x128xf32>, vector<8x128xf32> -> vector<8x128xf32>
    %94 = arith.addf %92, %93 : vector<8x128xf32>
    %95 = vector.extract_strided_slice %94 {offsets = [0, 0], sizes = [8, 32], strides = [1, 1]} : vector<8x128xf32> to vector<8x32xf32>
    %96 = arith.negf %95 : vector<8x32xf32>
    %97 = math.exp %96 : vector<8x32xf32>
    %cst_21 = arith.constant 1.000000e+00 : f32
    %98 = vector.broadcast %cst_21 : f32 to vector<8x32xf32>
    %99 = arith.addf %98, %97 : vector<8x32xf32>
    %100 = arith.divf %98, %99 : vector<8x32xf32>
    %101 = vector.extract_strided_slice %94 {offsets = [0, 32], sizes = [8, 32], strides = [1, 1]} : vector<8x128xf32> to vector<8x32xf32>
    %102 = arith.negf %101 : vector<8x32xf32>
    %103 = math.exp %102 : vector<8x32xf32>
    %cst_22 = arith.constant 1.000000e+00 : f32
    %104 = vector.broadcast %cst_22 : f32 to vector<8x32xf32>
    %105 = arith.addf %104, %103 : vector<8x32xf32>
    %106 = arith.divf %104, %105 : vector<8x32xf32>
    %107 = vector.extract_strided_slice %94 {offsets = [0, 64], sizes = [8, 32], strides = [1, 1]} : vector<8x128xf32> to vector<8x32xf32>
    %108 = math.tanh %107 : vector<8x32xf32>
    %109 = vector.extract_strided_slice %94 {offsets = [0, 96], sizes = [8, 32], strides = [1, 1]} : vector<8x128xf32> to vector<8x32xf32>
    %110 = arith.negf %109 : vector<8x32xf32>
    %111 = math.exp %110 : vector<8x32xf32>
    %cst_23 = arith.constant 1.000000e+00 : f32
    %112 = vector.broadcast %cst_23 : f32 to vector<8x32xf32>
    %113 = arith.addf %112, %111 : vector<8x32xf32>
    %114 = arith.divf %112, %113 : vector<8x32xf32>
    %115 = arith.mulf %106, %89 : vector<8x32xf32>
    %116 = arith.mulf %100, %108 : vector<8x32xf32>
    %117 = arith.addf %115, %116 : vector<8x32xf32>
    %118 = math.tanh %117 : vector<8x32xf32>
    %119 = arith.mulf %114, %118 : vector<8x32xf32>
    %120 = vector.extract_strided_slice %4 {offsets = [32, 0], sizes = [8, 128], strides = [1, 1]} : vector<64x128xf32> to vector<8x128xf32>
    %cst_24 = arith.constant dense<0.000000e+00> : vector<8x128xf32>
    %121 = tpu.matmul %119, %5, %cst_24 {dimension_numbers = #tpu.dot_dimension_numbers<[1], [0], [0], [1], [0, 0, 1, 1], [], []>} : vector<8x32xf32>, vector<32x128xf32>, vector<8x128xf32> -> vector<8x128xf32>
    %122 = arith.addf %120, %121 : vector<8x128xf32>
    %123 = vector.extract_strided_slice %122 {offsets = [0, 0], sizes = [8, 32], strides = [1, 1]} : vector<8x128xf32> to vector<8x32xf32>
    %124 = arith.negf %123 : vector<8x32xf32>
    %125 = math.exp %124 : vector<8x32xf32>
    %cst_25 = arith.constant 1.000000e+00 : f32
    %126 = vector.broadcast %cst_25 : f32 to vector<8x32xf32>
    %127 = arith.addf %126, %125 : vector<8x32xf32>
    %128 = arith.divf %126, %127 : vector<8x32xf32>
    %129 = vector.extract_strided_slice %122 {offsets = [0, 32], sizes = [8, 32], strides = [1, 1]} : vector<8x128xf32> to vector<8x32xf32>
    %130 = arith.negf %129 : vector<8x32xf32>
    %131 = math.exp %130 : vector<8x32xf32>
    %cst_26 = arith.constant 1.000000e+00 : f32
    %132 = vector.broadcast %cst_26 : f32 to vector<8x32xf32>
    %133 = arith.addf %132, %131 : vector<8x32xf32>
    %134 = arith.divf %132, %133 : vector<8x32xf32>
    %135 = vector.extract_strided_slice %122 {offsets = [0, 64], sizes = [8, 32], strides = [1, 1]} : vector<8x128xf32> to vector<8x32xf32>
    %136 = math.tanh %135 : vector<8x32xf32>
    %137 = vector.extract_strided_slice %122 {offsets = [0, 96], sizes = [8, 32], strides = [1, 1]} : vector<8x128xf32> to vector<8x32xf32>
    %138 = arith.negf %137 : vector<8x32xf32>
    %139 = math.exp %138 : vector<8x32xf32>
    %cst_27 = arith.constant 1.000000e+00 : f32
    %140 = vector.broadcast %cst_27 : f32 to vector<8x32xf32>
    %141 = arith.addf %140, %139 : vector<8x32xf32>
    %142 = arith.divf %140, %141 : vector<8x32xf32>
    %143 = arith.mulf %134, %117 : vector<8x32xf32>
    %144 = arith.mulf %128, %136 : vector<8x32xf32>
    %145 = arith.addf %143, %144 : vector<8x32xf32>
    %146 = math.tanh %145 : vector<8x32xf32>
    %147 = arith.mulf %142, %146 : vector<8x32xf32>
    %148 = vector.extract_strided_slice %4 {offsets = [40, 0], sizes = [8, 128], strides = [1, 1]} : vector<64x128xf32> to vector<8x128xf32>
    %cst_28 = arith.constant dense<0.000000e+00> : vector<8x128xf32>
    %149 = tpu.matmul %147, %5, %cst_28 {dimension_numbers = #tpu.dot_dimension_numbers<[1], [0], [0], [1], [0, 0, 1, 1], [], []>} : vector<8x32xf32>, vector<32x128xf32>, vector<8x128xf32> -> vector<8x128xf32>
    %150 = arith.addf %148, %149 : vector<8x128xf32>
    %151 = vector.extract_strided_slice %150 {offsets = [0, 0], sizes = [8, 32], strides = [1, 1]} : vector<8x128xf32> to vector<8x32xf32>
    %152 = arith.negf %151 : vector<8x32xf32>
    %153 = math.exp %152 : vector<8x32xf32>
    %cst_29 = arith.constant 1.000000e+00 : f32
    %154 = vector.broadcast %cst_29 : f32 to vector<8x32xf32>
    %155 = arith.addf %154, %153 : vector<8x32xf32>
    %156 = arith.divf %154, %155 : vector<8x32xf32>
    %157 = vector.extract_strided_slice %150 {offsets = [0, 32], sizes = [8, 32], strides = [1, 1]} : vector<8x128xf32> to vector<8x32xf32>
    %158 = arith.negf %157 : vector<8x32xf32>
    %159 = math.exp %158 : vector<8x32xf32>
    %cst_30 = arith.constant 1.000000e+00 : f32
    %160 = vector.broadcast %cst_30 : f32 to vector<8x32xf32>
    %161 = arith.addf %160, %159 : vector<8x32xf32>
    %162 = arith.divf %160, %161 : vector<8x32xf32>
    %163 = vector.extract_strided_slice %150 {offsets = [0, 64], sizes = [8, 32], strides = [1, 1]} : vector<8x128xf32> to vector<8x32xf32>
    %164 = math.tanh %163 : vector<8x32xf32>
    %165 = vector.extract_strided_slice %150 {offsets = [0, 96], sizes = [8, 32], strides = [1, 1]} : vector<8x128xf32> to vector<8x32xf32>
    %166 = arith.negf %165 : vector<8x32xf32>
    %167 = math.exp %166 : vector<8x32xf32>
    %cst_31 = arith.constant 1.000000e+00 : f32
    %168 = vector.broadcast %cst_31 : f32 to vector<8x32xf32>
    %169 = arith.addf %168, %167 : vector<8x32xf32>
    %170 = arith.divf %168, %169 : vector<8x32xf32>
    %171 = arith.mulf %162, %145 : vector<8x32xf32>
    %172 = arith.mulf %156, %164 : vector<8x32xf32>
    %173 = arith.addf %171, %172 : vector<8x32xf32>
    %174 = math.tanh %173 : vector<8x32xf32>
    %175 = arith.mulf %170, %174 : vector<8x32xf32>
    %176 = vector.extract_strided_slice %4 {offsets = [48, 0], sizes = [8, 128], strides = [1, 1]} : vector<64x128xf32> to vector<8x128xf32>
    %cst_32 = arith.constant dense<0.000000e+00> : vector<8x128xf32>
    %177 = tpu.matmul %175, %5, %cst_32 {dimension_numbers = #tpu.dot_dimension_numbers<[1], [0], [0], [1], [0, 0, 1, 1], [], []>} : vector<8x32xf32>, vector<32x128xf32>, vector<8x128xf32> -> vector<8x128xf32>
    %178 = arith.addf %176, %177 : vector<8x128xf32>
    %179 = vector.extract_strided_slice %178 {offsets = [0, 0], sizes = [8, 32], strides = [1, 1]} : vector<8x128xf32> to vector<8x32xf32>
    %180 = arith.negf %179 : vector<8x32xf32>
    %181 = math.exp %180 : vector<8x32xf32>
    %cst_33 = arith.constant 1.000000e+00 : f32
    %182 = vector.broadcast %cst_33 : f32 to vector<8x32xf32>
    %183 = arith.addf %182, %181 : vector<8x32xf32>
    %184 = arith.divf %182, %183 : vector<8x32xf32>
    %185 = vector.extract_strided_slice %178 {offsets = [0, 32], sizes = [8, 32], strides = [1, 1]} : vector<8x128xf32> to vector<8x32xf32>
    %186 = arith.negf %185 : vector<8x32xf32>
    %187 = math.exp %186 : vector<8x32xf32>
    %cst_34 = arith.constant 1.000000e+00 : f32
    %188 = vector.broadcast %cst_34 : f32 to vector<8x32xf32>
    %189 = arith.addf %188, %187 : vector<8x32xf32>
    %190 = arith.divf %188, %189 : vector<8x32xf32>
    %191 = vector.extract_strided_slice %178 {offsets = [0, 64], sizes = [8, 32], strides = [1, 1]} : vector<8x128xf32> to vector<8x32xf32>
    %192 = math.tanh %191 : vector<8x32xf32>
    %193 = vector.extract_strided_slice %178 {offsets = [0, 96], sizes = [8, 32], strides = [1, 1]} : vector<8x128xf32> to vector<8x32xf32>
    %194 = arith.negf %193 : vector<8x32xf32>
    %195 = math.exp %194 : vector<8x32xf32>
    %cst_35 = arith.constant 1.000000e+00 : f32
    %196 = vector.broadcast %cst_35 : f32 to vector<8x32xf32>
    %197 = arith.addf %196, %195 : vector<8x32xf32>
    %198 = arith.divf %196, %197 : vector<8x32xf32>
    %199 = arith.mulf %190, %173 : vector<8x32xf32>
    %200 = arith.mulf %184, %192 : vector<8x32xf32>
    %201 = arith.addf %199, %200 : vector<8x32xf32>
    %202 = math.tanh %201 : vector<8x32xf32>
    %203 = arith.mulf %198, %202 : vector<8x32xf32>
    %204 = vector.extract_strided_slice %4 {offsets = [56, 0], sizes = [8, 128], strides = [1, 1]} : vector<64x128xf32> to vector<8x128xf32>
    %cst_36 = arith.constant dense<0.000000e+00> : vector<8x128xf32>
    %205 = tpu.matmul %203, %5, %cst_36 {dimension_numbers = #tpu.dot_dimension_numbers<[1], [0], [0], [1], [0, 0, 1, 1], [], []>} : vector<8x32xf32>, vector<32x128xf32>, vector<8x128xf32> -> vector<8x128xf32>
    %206 = arith.addf %204, %205 : vector<8x128xf32>
    %207 = vector.extract_strided_slice %206 {offsets = [0, 0], sizes = [8, 32], strides = [1, 1]} : vector<8x128xf32> to vector<8x32xf32>
    %208 = arith.negf %207 : vector<8x32xf32>
    %209 = math.exp %208 : vector<8x32xf32>
    %cst_37 = arith.constant 1.000000e+00 : f32
    %210 = vector.broadcast %cst_37 : f32 to vector<8x32xf32>
    %211 = arith.addf %210, %209 : vector<8x32xf32>
    %212 = arith.divf %210, %211 : vector<8x32xf32>
    %213 = vector.extract_strided_slice %206 {offsets = [0, 32], sizes = [8, 32], strides = [1, 1]} : vector<8x128xf32> to vector<8x32xf32>
    %214 = arith.negf %213 : vector<8x32xf32>
    %215 = math.exp %214 : vector<8x32xf32>
    %cst_38 = arith.constant 1.000000e+00 : f32
    %216 = vector.broadcast %cst_38 : f32 to vector<8x32xf32>
    %217 = arith.addf %216, %215 : vector<8x32xf32>
    %218 = arith.divf %216, %217 : vector<8x32xf32>
    %219 = vector.extract_strided_slice %206 {offsets = [0, 64], sizes = [8, 32], strides = [1, 1]} : vector<8x128xf32> to vector<8x32xf32>
    %220 = math.tanh %219 : vector<8x32xf32>
    %221 = vector.extract_strided_slice %206 {offsets = [0, 96], sizes = [8, 32], strides = [1, 1]} : vector<8x128xf32> to vector<8x32xf32>
    %222 = arith.negf %221 : vector<8x32xf32>
    %223 = math.exp %222 : vector<8x32xf32>
    %cst_39 = arith.constant 1.000000e+00 : f32
    %224 = vector.broadcast %cst_39 : f32 to vector<8x32xf32>
    %225 = arith.addf %224, %223 : vector<8x32xf32>
    %226 = arith.divf %224, %225 : vector<8x32xf32>
    %227 = arith.mulf %218, %201 : vector<8x32xf32>
    %228 = arith.mulf %212, %220 : vector<8x32xf32>
    %229 = arith.addf %227, %228 : vector<8x32xf32>
    %230 = math.tanh %229 : vector<8x32xf32>
    %231 = arith.mulf %226, %230 : vector<8x32xf32>
    %c0_40 = arith.constant 0 : index
    %c0_41 = arith.constant 0 : index
    %232 = vector.load %arg6[%c0_40, %c0_41] : memref<8x32xf32, #tpu.memory_space<vmem>>, vector<8x32xf32>
    tpu.vector_store %arg6[%c0_40, %c0_41], %231 {strides = array<i32>} : memref<8x32xf32, #tpu.memory_space<vmem>>, vector<8x32xf32>,
    %c0_42 = arith.constant 0 : index
    %c0_43 = arith.constant 0 : index
    %233 = vector.load %arg7[%c0_42, %c0_43] : memref<8x32xf32, #tpu.memory_space<vmem>>, vector<8x32xf32>
    tpu.vector_store %arg7[%c0_42, %c0_43], %229 {strides = array<i32>} : memref<8x32xf32, #tpu.memory_space<vmem>>, vector<8x32xf32>,
    %234 = tpu.concatenate %35, %63, %91, %119, %147, %175, %203, %231 in 0 : vector<8x32xf32>, vector<8x32xf32>, vector<8x32xf32>, vector<8x32xf32>, vector<8x32xf32>, vector<8x32xf32>, vector<8x32xf32>, vector<8x32xf32> -> vector<64x32xf32>
    %c0_44 = arith.constant 0 : index
    %c0_45 = arith.constant 0 : index
    %235 = vector.load %arg3[%c0_44, %c0_45] : memref<32x128xf32, #tpu.memory_space<vmem>>, vector<32x128xf32>
    %cst_46 = arith.constant dense<0.000000e+00> : vector<64x128xf32>
    %236 = tpu.matmul %234, %235, %cst_46 {dimension_numbers = #tpu.dot_dimension_numbers<[1], [0], [0], [1], [0, 0, 1, 1], [], []>} : vector<64x32xf32>, vector<32x128xf32>, vector<64x128xf32> -> vector<64x128xf32>
    %c0_47 = arith.constant 0 : index
    %c0_48 = arith.constant 0 : index
    %237 = vector.load %arg4[%c0_47, %c0_48] : memref<1x128xf32, #tpu.memory_space<vmem>>, vector<1x128xf32>
    %238 = vector.broadcast %237 : vector<1x128xf32> to vector<64x128xf32>
    %239 = arith.addf %236, %238 : vector<64x128xf32>
    %c0_49 = arith.constant 0 : index
    %c0_50 = arith.constant 0 : index
    %c0_51 = arith.constant 0 : index
    %240 = vector.load %arg5[%c0_49, %c0_50, %c0_51] : memref<1x64x128xf32, #tpu.memory_space<vmem>>, vector<1x64x128xf32>
    %241 = vector.shape_cast %240 : vector<1x64x128xf32> to vector<64x128xf32>
    %242 = vector.shape_cast %239 : vector<64x128xf32> to vector<1x64x128xf32>
    tpu.vector_store %arg5[%c0_49, %c0_50, %c0_51], %242 {strides = array<i32>} : memref<1x64x128xf32, #tpu.memory_space<vmem>>, vector<1x64x128xf32>,
    return
  }
  func.func @transform_0(%arg0: i32) -> (i32, i32, i32) {
    %c0_i32 = arith.constant 0 : i32
    %c0_i32_0 = arith.constant 0 : i32
    %c0_i32_1 = arith.constant 0 : i32
    return %arg0, %c0_i32, %c0_i32_0 : i32, i32, i32
  }
  func.func @transform_1(%arg0: i32) -> (i32, i32) {
    %c0_i32 = arith.constant 0 : i32
    %c0_i32_0 = arith.constant 0 : i32
    %c0_i32_1 = arith.constant 0 : i32
    return %c0_i32, %c0_i32_0 : i32, i32
  }
  func.func @transform_2(%arg0: i32) -> (i32, i32) {
    %c0_i32 = arith.constant 0 : i32
    %c0_i32_0 = arith.constant 0 : i32
    %c0_i32_1 = arith.constant 0 : i32
    return %c0_i32, %c0_i32_0 : i32, i32
  }
  func.func @transform_3(%arg0: i32) -> (i32, i32) {
    %c0_i32 = arith.constant 0 : i32
    %c0_i32_0 = arith.constant 0 : i32
    %c0_i32_1 = arith.constant 0 : i32
    return %c0_i32, %c0_i32_0 : i32, i32
  }
  func.func @transform_4(%arg0: i32) -> (i32, i32, i32) {
    %c0_i32 = arith.constant 0 : i32
    %c0_i32_0 = arith.constant 0 : i32
    %c0_i32_1 = arith.constant 0 : i32
    return %arg0, %c0_i32, %c0_i32_0 : i32, i32, i32
  }
}

module attributes {stable_mosaic.version = 11 : i64} {
  func.func @_lstm_block_kernel(%arg0: i32, %arg1: memref<1x64x128xf32, #tpu.memory_space<vmem>>, %arg2: memref<32x128xf32, #tpu.memory_space<vmem>>, %arg3: memref<32x6xf32, #tpu.memory_space<vmem>>, %arg4: memref<1x6xf32, #tpu.memory_space<vmem>>, %arg5: memref<1x64x6xf32, #tpu.memory_space<vmem>>, %arg6: memref<8x32xf32, #tpu.memory_space<vmem>>, %arg7: memref<8x32xf32, #tpu.memory_space<vmem>>) attributes {dimension_semantics = [#tpu.dimension_semantics<arbitrary>], iteration_bounds = array<i64: 1>, scalar_prefetch = 0 : i64, scratch_operands = 2 : i64, tpu.core_type = #tpu.core_type<tc>, window_params = [{transform_indices = @transform_0, window_bounds = array<i64: 1, 64, 128>}, {pipeline_mode = #tpu.pipeline_mode<synchronous>, transform_indices = @transform_1, window_bounds = array<i64: 32, 128>}, {pipeline_mode = #tpu.pipeline_mode<synchronous>, transform_indices = @transform_2, window_bounds = array<i64: 32, 6>}, {pipeline_mode = #tpu.pipeline_mode<synchronous>, transform_indices = @transform_3, window_bounds = array<i64: 1, 6>}, {transform_indices = @transform_4, window_bounds = array<i64: 1, 64, 6>}]} {
    %c0_i32 = arith.constant 0 : i32
    %0 = arith.cmpi eq, %arg0, %c0_i32 : i32
    %1 = arith.extui %0 : i1 to i32
    %c0_i32_0 = arith.constant 0 : i32
    %2 = arith.cmpi ne, %1, %c0_i32_0 : i32
    scf.if %2 {
      %cst_52 = arith.constant 0.000000e+00 : f32
      %243 = vector.broadcast %cst_52 : f32 to vector<8x32xf32>
      %c0_53 = arith.constant 0 : index
      %c0_54 = arith.constant 0 : index
      %244 = vector.load %arg6[%c0_53, %c0_54] : memref<8x32xf32, #tpu.memory_space<vmem>>, vector<8x32xf32>
      tpu.vector_store %arg6[%c0_53, %c0_54], %243 {strides = array<i32>} : memref<8x32xf32, #tpu.memory_space<vmem>>, vector<8x32xf32>,
      %cst_55 = arith.constant 0.000000e+00 : f32
      %245 = vector.broadcast %cst_55 : f32 to vector<8x32xf32>
      %c0_56 = arith.constant 0 : index
      %c0_57 = arith.constant 0 : index
      %246 = vector.load %arg7[%c0_56, %c0_57] : memref<8x32xf32, #tpu.memory_space<vmem>>, vector<8x32xf32>
      tpu.vector_store %arg7[%c0_56, %c0_57], %245 {strides = array<i32>} : memref<8x32xf32, #tpu.memory_space<vmem>>, vector<8x32xf32>,
    } else {
    }
    %c0 = arith.constant 0 : index
    %c0_1 = arith.constant 0 : index
    %c0_2 = arith.constant 0 : index
    %3 = vector.load %arg1[%c0, %c0_1, %c0_2] : memref<1x64x128xf32, #tpu.memory_space<vmem>>, vector<1x64x128xf32>
    %4 = vector.shape_cast %3 : vector<1x64x128xf32> to vector<64x128xf32>
    %c0_3 = arith.constant 0 : index
    %c0_4 = arith.constant 0 : index
    %5 = vector.load %arg2[%c0_3, %c0_4] : memref<32x128xf32, #tpu.memory_space<vmem>>, vector<32x128xf32>
    %c0_5 = arith.constant 0 : index
    %c0_6 = arith.constant 0 : index
    %6 = vector.load %arg6[%c0_5, %c0_6] : memref<8x32xf32, #tpu.memory_space<vmem>>, vector<8x32xf32>
    %c0_7 = arith.constant 0 : index
    %c0_8 = arith.constant 0 : index
    %7 = vector.load %arg7[%c0_7, %c0_8] : memref<8x32xf32, #tpu.memory_space<vmem>>, vector<8x32xf32>
    %8 = vector.extract_strided_slice %4 {offsets = [0, 0], sizes = [8, 128], strides = [1, 1]} : vector<64x128xf32> to vector<8x128xf32>
    %cst = arith.constant dense<0.000000e+00> : vector<8x128xf32>
    %9 = tpu.matmul %6, %5, %cst {dimension_numbers = #tpu.dot_dimension_numbers<[1], [0], [0], [1], [0, 0, 1, 1], [], []>} : vector<8x32xf32>, vector<32x128xf32>, vector<8x128xf32> -> vector<8x128xf32>
    %10 = arith.addf %8, %9 : vector<8x128xf32>
    %11 = vector.extract_strided_slice %10 {offsets = [0, 0], sizes = [8, 32], strides = [1, 1]} : vector<8x128xf32> to vector<8x32xf32>
    %12 = arith.negf %11 : vector<8x32xf32>
    %13 = math.exp %12 : vector<8x32xf32>
    %cst_9 = arith.constant 1.000000e+00 : f32
    %14 = vector.broadcast %cst_9 : f32 to vector<8x32xf32>
    %15 = arith.addf %14, %13 : vector<8x32xf32>
    %16 = arith.divf %14, %15 : vector<8x32xf32>
    %17 = vector.extract_strided_slice %10 {offsets = [0, 32], sizes = [8, 32], strides = [1, 1]} : vector<8x128xf32> to vector<8x32xf32>
    %18 = arith.negf %17 : vector<8x32xf32>
    %19 = math.exp %18 : vector<8x32xf32>
    %cst_10 = arith.constant 1.000000e+00 : f32
    %20 = vector.broadcast %cst_10 : f32 to vector<8x32xf32>
    %21 = arith.addf %20, %19 : vector<8x32xf32>
    %22 = arith.divf %20, %21 : vector<8x32xf32>
    %23 = vector.extract_strided_slice %10 {offsets = [0, 64], sizes = [8, 32], strides = [1, 1]} : vector<8x128xf32> to vector<8x32xf32>
    %24 = math.tanh %23 : vector<8x32xf32>
    %25 = vector.extract_strided_slice %10 {offsets = [0, 96], sizes = [8, 32], strides = [1, 1]} : vector<8x128xf32> to vector<8x32xf32>
    %26 = arith.negf %25 : vector<8x32xf32>
    %27 = math.exp %26 : vector<8x32xf32>
    %cst_11 = arith.constant 1.000000e+00 : f32
    %28 = vector.broadcast %cst_11 : f32 to vector<8x32xf32>
    %29 = arith.addf %28, %27 : vector<8x32xf32>
    %30 = arith.divf %28, %29 : vector<8x32xf32>
    %31 = arith.mulf %22, %7 : vector<8x32xf32>
    %32 = arith.mulf %16, %24 : vector<8x32xf32>
    %33 = arith.addf %31, %32 : vector<8x32xf32>
    %34 = math.tanh %33 : vector<8x32xf32>
    %35 = arith.mulf %30, %34 : vector<8x32xf32>
    %36 = vector.extract_strided_slice %4 {offsets = [8, 0], sizes = [8, 128], strides = [1, 1]} : vector<64x128xf32> to vector<8x128xf32>
    %cst_12 = arith.constant dense<0.000000e+00> : vector<8x128xf32>
    %37 = tpu.matmul %35, %5, %cst_12 {dimension_numbers = #tpu.dot_dimension_numbers<[1], [0], [0], [1], [0, 0, 1, 1], [], []>} : vector<8x32xf32>, vector<32x128xf32>, vector<8x128xf32> -> vector<8x128xf32>
    %38 = arith.addf %36, %37 : vector<8x128xf32>
    %39 = vector.extract_strided_slice %38 {offsets = [0, 0], sizes = [8, 32], strides = [1, 1]} : vector<8x128xf32> to vector<8x32xf32>
    %40 = arith.negf %39 : vector<8x32xf32>
    %41 = math.exp %40 : vector<8x32xf32>
    %cst_13 = arith.constant 1.000000e+00 : f32
    %42 = vector.broadcast %cst_13 : f32 to vector<8x32xf32>
    %43 = arith.addf %42, %41 : vector<8x32xf32>
    %44 = arith.divf %42, %43 : vector<8x32xf32>
    %45 = vector.extract_strided_slice %38 {offsets = [0, 32], sizes = [8, 32], strides = [1, 1]} : vector<8x128xf32> to vector<8x32xf32>
    %46 = arith.negf %45 : vector<8x32xf32>
    %47 = math.exp %46 : vector<8x32xf32>
    %cst_14 = arith.constant 1.000000e+00 : f32
    %48 = vector.broadcast %cst_14 : f32 to vector<8x32xf32>
    %49 = arith.addf %48, %47 : vector<8x32xf32>
    %50 = arith.divf %48, %49 : vector<8x32xf32>
    %51 = vector.extract_strided_slice %38 {offsets = [0, 64], sizes = [8, 32], strides = [1, 1]} : vector<8x128xf32> to vector<8x32xf32>
    %52 = math.tanh %51 : vector<8x32xf32>
    %53 = vector.extract_strided_slice %38 {offsets = [0, 96], sizes = [8, 32], strides = [1, 1]} : vector<8x128xf32> to vector<8x32xf32>
    %54 = arith.negf %53 : vector<8x32xf32>
    %55 = math.exp %54 : vector<8x32xf32>
    %cst_15 = arith.constant 1.000000e+00 : f32
    %56 = vector.broadcast %cst_15 : f32 to vector<8x32xf32>
    %57 = arith.addf %56, %55 : vector<8x32xf32>
    %58 = arith.divf %56, %57 : vector<8x32xf32>
    %59 = arith.mulf %50, %33 : vector<8x32xf32>
    %60 = arith.mulf %44, %52 : vector<8x32xf32>
    %61 = arith.addf %59, %60 : vector<8x32xf32>
    %62 = math.tanh %61 : vector<8x32xf32>
    %63 = arith.mulf %58, %62 : vector<8x32xf32>
    %64 = vector.extract_strided_slice %4 {offsets = [16, 0], sizes = [8, 128], strides = [1, 1]} : vector<64x128xf32> to vector<8x128xf32>
    %cst_16 = arith.constant dense<0.000000e+00> : vector<8x128xf32>
    %65 = tpu.matmul %63, %5, %cst_16 {dimension_numbers = #tpu.dot_dimension_numbers<[1], [0], [0], [1], [0, 0, 1, 1], [], []>} : vector<8x32xf32>, vector<32x128xf32>, vector<8x128xf32> -> vector<8x128xf32>
    %66 = arith.addf %64, %65 : vector<8x128xf32>
    %67 = vector.extract_strided_slice %66 {offsets = [0, 0], sizes = [8, 32], strides = [1, 1]} : vector<8x128xf32> to vector<8x32xf32>
    %68 = arith.negf %67 : vector<8x32xf32>
    %69 = math.exp %68 : vector<8x32xf32>
    %cst_17 = arith.constant 1.000000e+00 : f32
    %70 = vector.broadcast %cst_17 : f32 to vector<8x32xf32>
    %71 = arith.addf %70, %69 : vector<8x32xf32>
    %72 = arith.divf %70, %71 : vector<8x32xf32>
    %73 = vector.extract_strided_slice %66 {offsets = [0, 32], sizes = [8, 32], strides = [1, 1]} : vector<8x128xf32> to vector<8x32xf32>
    %74 = arith.negf %73 : vector<8x32xf32>
    %75 = math.exp %74 : vector<8x32xf32>
    %cst_18 = arith.constant 1.000000e+00 : f32
    %76 = vector.broadcast %cst_18 : f32 to vector<8x32xf32>
    %77 = arith.addf %76, %75 : vector<8x32xf32>
    %78 = arith.divf %76, %77 : vector<8x32xf32>
    %79 = vector.extract_strided_slice %66 {offsets = [0, 64], sizes = [8, 32], strides = [1, 1]} : vector<8x128xf32> to vector<8x32xf32>
    %80 = math.tanh %79 : vector<8x32xf32>
    %81 = vector.extract_strided_slice %66 {offsets = [0, 96], sizes = [8, 32], strides = [1, 1]} : vector<8x128xf32> to vector<8x32xf32>
    %82 = arith.negf %81 : vector<8x32xf32>
    %83 = math.exp %82 : vector<8x32xf32>
    %cst_19 = arith.constant 1.000000e+00 : f32
    %84 = vector.broadcast %cst_19 : f32 to vector<8x32xf32>
    %85 = arith.addf %84, %83 : vector<8x32xf32>
    %86 = arith.divf %84, %85 : vector<8x32xf32>
    %87 = arith.mulf %78, %61 : vector<8x32xf32>
    %88 = arith.mulf %72, %80 : vector<8x32xf32>
    %89 = arith.addf %87, %88 : vector<8x32xf32>
    %90 = math.tanh %89 : vector<8x32xf32>
    %91 = arith.mulf %86, %90 : vector<8x32xf32>
    %92 = vector.extract_strided_slice %4 {offsets = [24, 0], sizes = [8, 128], strides = [1, 1]} : vector<64x128xf32> to vector<8x128xf32>
    %cst_20 = arith.constant dense<0.000000e+00> : vector<8x128xf32>
    %93 = tpu.matmul %91, %5, %cst_20 {dimension_numbers = #tpu.dot_dimension_numbers<[1], [0], [0], [1], [0, 0, 1, 1], [], []>} : vector<8x32xf32>, vector<32x128xf32>, vector<8x128xf32> -> vector<8x128xf32>
    %94 = arith.addf %92, %93 : vector<8x128xf32>
    %95 = vector.extract_strided_slice %94 {offsets = [0, 0], sizes = [8, 32], strides = [1, 1]} : vector<8x128xf32> to vector<8x32xf32>
    %96 = arith.negf %95 : vector<8x32xf32>
    %97 = math.exp %96 : vector<8x32xf32>
    %cst_21 = arith.constant 1.000000e+00 : f32
    %98 = vector.broadcast %cst_21 : f32 to vector<8x32xf32>
    %99 = arith.addf %98, %97 : vector<8x32xf32>
    %100 = arith.divf %98, %99 : vector<8x32xf32>
    %101 = vector.extract_strided_slice %94 {offsets = [0, 32], sizes = [8, 32], strides = [1, 1]} : vector<8x128xf32> to vector<8x32xf32>
    %102 = arith.negf %101 : vector<8x32xf32>
    %103 = math.exp %102 : vector<8x32xf32>
    %cst_22 = arith.constant 1.000000e+00 : f32
    %104 = vector.broadcast %cst_22 : f32 to vector<8x32xf32>
    %105 = arith.addf %104, %103 : vector<8x32xf32>
    %106 = arith.divf %104, %105 : vector<8x32xf32>
    %107 = vector.extract_strided_slice %94 {offsets = [0, 64], sizes = [8, 32], strides = [1, 1]} : vector<8x128xf32> to vector<8x32xf32>
    %108 = math.tanh %107 : vector<8x32xf32>
    %109 = vector.extract_strided_slice %94 {offsets = [0, 96], sizes = [8, 32], strides = [1, 1]} : vector<8x128xf32> to vector<8x32xf32>
    %110 = arith.negf %109 : vector<8x32xf32>
    %111 = math.exp %110 : vector<8x32xf32>
    %cst_23 = arith.constant 1.000000e+00 : f32
    %112 = vector.broadcast %cst_23 : f32 to vector<8x32xf32>
    %113 = arith.addf %112, %111 : vector<8x32xf32>
    %114 = arith.divf %112, %113 : vector<8x32xf32>
    %115 = arith.mulf %106, %89 : vector<8x32xf32>
    %116 = arith.mulf %100, %108 : vector<8x32xf32>
    %117 = arith.addf %115, %116 : vector<8x32xf32>
    %118 = math.tanh %117 : vector<8x32xf32>
    %119 = arith.mulf %114, %118 : vector<8x32xf32>
    %120 = vector.extract_strided_slice %4 {offsets = [32, 0], sizes = [8, 128], strides = [1, 1]} : vector<64x128xf32> to vector<8x128xf32>
    %cst_24 = arith.constant dense<0.000000e+00> : vector<8x128xf32>
    %121 = tpu.matmul %119, %5, %cst_24 {dimension_numbers = #tpu.dot_dimension_numbers<[1], [0], [0], [1], [0, 0, 1, 1], [], []>} : vector<8x32xf32>, vector<32x128xf32>, vector<8x128xf32> -> vector<8x128xf32>
    %122 = arith.addf %120, %121 : vector<8x128xf32>
    %123 = vector.extract_strided_slice %122 {offsets = [0, 0], sizes = [8, 32], strides = [1, 1]} : vector<8x128xf32> to vector<8x32xf32>
    %124 = arith.negf %123 : vector<8x32xf32>
    %125 = math.exp %124 : vector<8x32xf32>
    %cst_25 = arith.constant 1.000000e+00 : f32
    %126 = vector.broadcast %cst_25 : f32 to vector<8x32xf32>
    %127 = arith.addf %126, %125 : vector<8x32xf32>
    %128 = arith.divf %126, %127 : vector<8x32xf32>
    %129 = vector.extract_strided_slice %122 {offsets = [0, 32], sizes = [8, 32], strides = [1, 1]} : vector<8x128xf32> to vector<8x32xf32>
    %130 = arith.negf %129 : vector<8x32xf32>
    %131 = math.exp %130 : vector<8x32xf32>
    %cst_26 = arith.constant 1.000000e+00 : f32
    %132 = vector.broadcast %cst_26 : f32 to vector<8x32xf32>
    %133 = arith.addf %132, %131 : vector<8x32xf32>
    %134 = arith.divf %132, %133 : vector<8x32xf32>
    %135 = vector.extract_strided_slice %122 {offsets = [0, 64], sizes = [8, 32], strides = [1, 1]} : vector<8x128xf32> to vector<8x32xf32>
    %136 = math.tanh %135 : vector<8x32xf32>
    %137 = vector.extract_strided_slice %122 {offsets = [0, 96], sizes = [8, 32], strides = [1, 1]} : vector<8x128xf32> to vector<8x32xf32>
    %138 = arith.negf %137 : vector<8x32xf32>
    %139 = math.exp %138 : vector<8x32xf32>
    %cst_27 = arith.constant 1.000000e+00 : f32
    %140 = vector.broadcast %cst_27 : f32 to vector<8x32xf32>
    %141 = arith.addf %140, %139 : vector<8x32xf32>
    %142 = arith.divf %140, %141 : vector<8x32xf32>
    %143 = arith.mulf %134, %117 : vector<8x32xf32>
    %144 = arith.mulf %128, %136 : vector<8x32xf32>
    %145 = arith.addf %143, %144 : vector<8x32xf32>
    %146 = math.tanh %145 : vector<8x32xf32>
    %147 = arith.mulf %142, %146 : vector<8x32xf32>
    %148 = vector.extract_strided_slice %4 {offsets = [40, 0], sizes = [8, 128], strides = [1, 1]} : vector<64x128xf32> to vector<8x128xf32>
    %cst_28 = arith.constant dense<0.000000e+00> : vector<8x128xf32>
    %149 = tpu.matmul %147, %5, %cst_28 {dimension_numbers = #tpu.dot_dimension_numbers<[1], [0], [0], [1], [0, 0, 1, 1], [], []>} : vector<8x32xf32>, vector<32x128xf32>, vector<8x128xf32> -> vector<8x128xf32>
    %150 = arith.addf %148, %149 : vector<8x128xf32>
    %151 = vector.extract_strided_slice %150 {offsets = [0, 0], sizes = [8, 32], strides = [1, 1]} : vector<8x128xf32> to vector<8x32xf32>
    %152 = arith.negf %151 : vector<8x32xf32>
    %153 = math.exp %152 : vector<8x32xf32>
    %cst_29 = arith.constant 1.000000e+00 : f32
    %154 = vector.broadcast %cst_29 : f32 to vector<8x32xf32>
    %155 = arith.addf %154, %153 : vector<8x32xf32>
    %156 = arith.divf %154, %155 : vector<8x32xf32>
    %157 = vector.extract_strided_slice %150 {offsets = [0, 32], sizes = [8, 32], strides = [1, 1]} : vector<8x128xf32> to vector<8x32xf32>
    %158 = arith.negf %157 : vector<8x32xf32>
    %159 = math.exp %158 : vector<8x32xf32>
    %cst_30 = arith.constant 1.000000e+00 : f32
    %160 = vector.broadcast %cst_30 : f32 to vector<8x32xf32>
    %161 = arith.addf %160, %159 : vector<8x32xf32>
    %162 = arith.divf %160, %161 : vector<8x32xf32>
    %163 = vector.extract_strided_slice %150 {offsets = [0, 64], sizes = [8, 32], strides = [1, 1]} : vector<8x128xf32> to vector<8x32xf32>
    %164 = math.tanh %163 : vector<8x32xf32>
    %165 = vector.extract_strided_slice %150 {offsets = [0, 96], sizes = [8, 32], strides = [1, 1]} : vector<8x128xf32> to vector<8x32xf32>
    %166 = arith.negf %165 : vector<8x32xf32>
    %167 = math.exp %166 : vector<8x32xf32>
    %cst_31 = arith.constant 1.000000e+00 : f32
    %168 = vector.broadcast %cst_31 : f32 to vector<8x32xf32>
    %169 = arith.addf %168, %167 : vector<8x32xf32>
    %170 = arith.divf %168, %169 : vector<8x32xf32>
    %171 = arith.mulf %162, %145 : vector<8x32xf32>
    %172 = arith.mulf %156, %164 : vector<8x32xf32>
    %173 = arith.addf %171, %172 : vector<8x32xf32>
    %174 = math.tanh %173 : vector<8x32xf32>
    %175 = arith.mulf %170, %174 : vector<8x32xf32>
    %176 = vector.extract_strided_slice %4 {offsets = [48, 0], sizes = [8, 128], strides = [1, 1]} : vector<64x128xf32> to vector<8x128xf32>
    %cst_32 = arith.constant dense<0.000000e+00> : vector<8x128xf32>
    %177 = tpu.matmul %175, %5, %cst_32 {dimension_numbers = #tpu.dot_dimension_numbers<[1], [0], [0], [1], [0, 0, 1, 1], [], []>} : vector<8x32xf32>, vector<32x128xf32>, vector<8x128xf32> -> vector<8x128xf32>
    %178 = arith.addf %176, %177 : vector<8x128xf32>
    %179 = vector.extract_strided_slice %178 {offsets = [0, 0], sizes = [8, 32], strides = [1, 1]} : vector<8x128xf32> to vector<8x32xf32>
    %180 = arith.negf %179 : vector<8x32xf32>
    %181 = math.exp %180 : vector<8x32xf32>
    %cst_33 = arith.constant 1.000000e+00 : f32
    %182 = vector.broadcast %cst_33 : f32 to vector<8x32xf32>
    %183 = arith.addf %182, %181 : vector<8x32xf32>
    %184 = arith.divf %182, %183 : vector<8x32xf32>
    %185 = vector.extract_strided_slice %178 {offsets = [0, 32], sizes = [8, 32], strides = [1, 1]} : vector<8x128xf32> to vector<8x32xf32>
    %186 = arith.negf %185 : vector<8x32xf32>
    %187 = math.exp %186 : vector<8x32xf32>
    %cst_34 = arith.constant 1.000000e+00 : f32
    %188 = vector.broadcast %cst_34 : f32 to vector<8x32xf32>
    %189 = arith.addf %188, %187 : vector<8x32xf32>
    %190 = arith.divf %188, %189 : vector<8x32xf32>
    %191 = vector.extract_strided_slice %178 {offsets = [0, 64], sizes = [8, 32], strides = [1, 1]} : vector<8x128xf32> to vector<8x32xf32>
    %192 = math.tanh %191 : vector<8x32xf32>
    %193 = vector.extract_strided_slice %178 {offsets = [0, 96], sizes = [8, 32], strides = [1, 1]} : vector<8x128xf32> to vector<8x32xf32>
    %194 = arith.negf %193 : vector<8x32xf32>
    %195 = math.exp %194 : vector<8x32xf32>
    %cst_35 = arith.constant 1.000000e+00 : f32
    %196 = vector.broadcast %cst_35 : f32 to vector<8x32xf32>
    %197 = arith.addf %196, %195 : vector<8x32xf32>
    %198 = arith.divf %196, %197 : vector<8x32xf32>
    %199 = arith.mulf %190, %173 : vector<8x32xf32>
    %200 = arith.mulf %184, %192 : vector<8x32xf32>
    %201 = arith.addf %199, %200 : vector<8x32xf32>
    %202 = math.tanh %201 : vector<8x32xf32>
    %203 = arith.mulf %198, %202 : vector<8x32xf32>
    %204 = vector.extract_strided_slice %4 {offsets = [56, 0], sizes = [8, 128], strides = [1, 1]} : vector<64x128xf32> to vector<8x128xf32>
    %cst_36 = arith.constant dense<0.000000e+00> : vector<8x128xf32>
    %205 = tpu.matmul %203, %5, %cst_36 {dimension_numbers = #tpu.dot_dimension_numbers<[1], [0], [0], [1], [0, 0, 1, 1], [], []>} : vector<8x32xf32>, vector<32x128xf32>, vector<8x128xf32> -> vector<8x128xf32>
    %206 = arith.addf %204, %205 : vector<8x128xf32>
    %207 = vector.extract_strided_slice %206 {offsets = [0, 0], sizes = [8, 32], strides = [1, 1]} : vector<8x128xf32> to vector<8x32xf32>
    %208 = arith.negf %207 : vector<8x32xf32>
    %209 = math.exp %208 : vector<8x32xf32>
    %cst_37 = arith.constant 1.000000e+00 : f32
    %210 = vector.broadcast %cst_37 : f32 to vector<8x32xf32>
    %211 = arith.addf %210, %209 : vector<8x32xf32>
    %212 = arith.divf %210, %211 : vector<8x32xf32>
    %213 = vector.extract_strided_slice %206 {offsets = [0, 32], sizes = [8, 32], strides = [1, 1]} : vector<8x128xf32> to vector<8x32xf32>
    %214 = arith.negf %213 : vector<8x32xf32>
    %215 = math.exp %214 : vector<8x32xf32>
    %cst_38 = arith.constant 1.000000e+00 : f32
    %216 = vector.broadcast %cst_38 : f32 to vector<8x32xf32>
    %217 = arith.addf %216, %215 : vector<8x32xf32>
    %218 = arith.divf %216, %217 : vector<8x32xf32>
    %219 = vector.extract_strided_slice %206 {offsets = [0, 64], sizes = [8, 32], strides = [1, 1]} : vector<8x128xf32> to vector<8x32xf32>
    %220 = math.tanh %219 : vector<8x32xf32>
    %221 = vector.extract_strided_slice %206 {offsets = [0, 96], sizes = [8, 32], strides = [1, 1]} : vector<8x128xf32> to vector<8x32xf32>
    %222 = arith.negf %221 : vector<8x32xf32>
    %223 = math.exp %222 : vector<8x32xf32>
    %cst_39 = arith.constant 1.000000e+00 : f32
    %224 = vector.broadcast %cst_39 : f32 to vector<8x32xf32>
    %225 = arith.addf %224, %223 : vector<8x32xf32>
    %226 = arith.divf %224, %225 : vector<8x32xf32>
    %227 = arith.mulf %218, %201 : vector<8x32xf32>
    %228 = arith.mulf %212, %220 : vector<8x32xf32>
    %229 = arith.addf %227, %228 : vector<8x32xf32>
    %230 = math.tanh %229 : vector<8x32xf32>
    %231 = arith.mulf %226, %230 : vector<8x32xf32>
    %c0_40 = arith.constant 0 : index
    %c0_41 = arith.constant 0 : index
    %232 = vector.load %arg6[%c0_40, %c0_41] : memref<8x32xf32, #tpu.memory_space<vmem>>, vector<8x32xf32>
    tpu.vector_store %arg6[%c0_40, %c0_41], %231 {strides = array<i32>} : memref<8x32xf32, #tpu.memory_space<vmem>>, vector<8x32xf32>,
    %c0_42 = arith.constant 0 : index
    %c0_43 = arith.constant 0 : index
    %233 = vector.load %arg7[%c0_42, %c0_43] : memref<8x32xf32, #tpu.memory_space<vmem>>, vector<8x32xf32>
    tpu.vector_store %arg7[%c0_42, %c0_43], %229 {strides = array<i32>} : memref<8x32xf32, #tpu.memory_space<vmem>>, vector<8x32xf32>,
    %234 = tpu.concatenate %35, %63, %91, %119, %147, %175, %203, %231 in 0 : vector<8x32xf32>, vector<8x32xf32>, vector<8x32xf32>, vector<8x32xf32>, vector<8x32xf32>, vector<8x32xf32>, vector<8x32xf32>, vector<8x32xf32> -> vector<64x32xf32>
    %c0_44 = arith.constant 0 : index
    %c0_45 = arith.constant 0 : index
    %235 = vector.load %arg3[%c0_44, %c0_45] : memref<32x6xf32, #tpu.memory_space<vmem>>, vector<32x6xf32>
    %cst_46 = arith.constant dense<0.000000e+00> : vector<64x6xf32>
    %236 = tpu.matmul %234, %235, %cst_46 {dimension_numbers = #tpu.dot_dimension_numbers<[1], [0], [0], [1], [0, 0, 1, 1], [], []>} : vector<64x32xf32>, vector<32x6xf32>, vector<64x6xf32> -> vector<64x6xf32>
    %c0_47 = arith.constant 0 : index
    %c0_48 = arith.constant 0 : index
    %237 = vector.load %arg4[%c0_47, %c0_48] : memref<1x6xf32, #tpu.memory_space<vmem>>, vector<1x6xf32>
    %238 = vector.broadcast %237 : vector<1x6xf32> to vector<64x6xf32>
    %239 = arith.addf %236, %238 : vector<64x6xf32>
    %c0_49 = arith.constant 0 : index
    %c0_50 = arith.constant 0 : index
    %c0_51 = arith.constant 0 : index
    %240 = vector.load %arg5[%c0_49, %c0_50, %c0_51] : memref<1x64x6xf32, #tpu.memory_space<vmem>>, vector<1x64x6xf32>
    %241 = vector.shape_cast %240 : vector<1x64x6xf32> to vector<64x6xf32>
    %242 = vector.shape_cast %239 : vector<64x6xf32> to vector<1x64x6xf32>
    tpu.vector_store %arg5[%c0_49, %c0_50, %c0_51], %242 {strides = array<i32>} : memref<1x64x6xf32, #tpu.memory_space<vmem>>, vector<1x64x6xf32>,
    return
  }
  func.func @transform_0(%arg0: i32) -> (i32, i32, i32) {
    %c0_i32 = arith.constant 0 : i32
    %c0_i32_0 = arith.constant 0 : i32
    %c0_i32_1 = arith.constant 0 : i32
    return %arg0, %c0_i32, %c0_i32_0 : i32, i32, i32
  }
  func.func @transform_1(%arg0: i32) -> (i32, i32) {
    %c0_i32 = arith.constant 0 : i32
    %c0_i32_0 = arith.constant 0 : i32
    %c0_i32_1 = arith.constant 0 : i32
    return %c0_i32, %c0_i32_0 : i32, i32
  }
  func.func @transform_2(%arg0: i32) -> (i32, i32) {
    %c0_i32 = arith.constant 0 : i32
    %c0_i32_0 = arith.constant 0 : i32
    %c0_i32_1 = arith.constant 0 : i32
    return %c0_i32, %c0_i32_0 : i32, i32
  }
  func.func @transform_3(%arg0: i32) -> (i32, i32) {
    %c0_i32 = arith.constant 0 : i32
    %c0_i32_0 = arith.constant 0 : i32
    %c0_i32_1 = arith.constant 0 : i32
    return %c0_i32, %c0_i32_0 : i32, i32
  }
  func.func @transform_4(%arg0: i32) -> (i32, i32, i32) {
    %c0_i32 = arith.constant 0 : i32
    %c0_i32_0 = arith.constant 0 : i32
    %c0_i32_1 = arith.constant 0 : i32
    return %arg0, %c0_i32, %c0_i32_0 : i32, i32, i32
  }
}

</mosaic_0001>

<llo_original>
// kernel: rnn_decoder_forward.3
$region0: #{rnn_decoder_forward.3}
  #allocation0 [shape = 'u32[]', space=smem, size = 0x4, offset = 0x4, fixed_abs, tag = 'smem constant byte address 0x4 - core index']
  #allocation1 [shape = 'u32[144,128]{1,0:T(1,128)}', space=vmem, size = 0x12000, scoped, tag = 'internal scratch']
  %s0 = inlined_call_operand.vmem [shape: f32[64,4], index: 0, kind: input, shape index: {}]
  %s1 = inlined_call_operand.vmem [shape: f32[4,16], index: 1, kind: input, shape index: {}]
  %s2 = inlined_call_operand.vmem [shape: f32[1,16], index: 2, kind: input, shape index: {}]
  %s3 = inlined_call_operand.vmem [shape: f32[16,128], index: 3, kind: input, shape index: {}]
  %s4 = inlined_call_operand.vmem [shape: f32[1,128], index: 4, kind: input, shape index: {}]
  %s5 = inlined_call_operand.vmem [shape: f32[1,64,128], index: 5, kind: output, shape index: {}]
  %s6 = sld [smem:[#allocation0]]
  $region30: #{rnn_decoder_forward.3} parent=0
    _
  %s8 = ssub.s32 1, %s6
  %s9 = scalar_select 0, %s8, %s6
  // Predicated region
  $region2: #{rnn_decoder_forward.3} parent=0 // pred_check
    _
  $region3: #{rnn_decoder_forward.3} parent=0 // pred_check_branch
    %11 = sbr.rel (0) target = $region5
  $region4: #{rnn_decoder_forward.3} parent=0 // pred_region
    _
  $region5: #{rnn_decoder_forward.3} parent=0 // pred_fallthru
    _
  // Predicated region
  $region6: #{rnn_decoder_forward.3} parent=0 // pred_check
    _
  $region7: #{rnn_decoder_forward.3} parent=0 // pred_check_branch
    %13 = sbr.rel (0) target = $region9
  $region8: #{rnn_decoder_forward.3} parent=0 // pred_region
    _
  $region9: #{rnn_decoder_forward.3} parent=0 // pred_fallthru
    _
  // Predicated region
  $region10: #{rnn_decoder_forward.3} parent=0 // pred_check
    _
  $region11: #{rnn_decoder_forward.3} parent=0 // pred_check_branch
    %15 = sbr.rel (0) target = $region13
  $region12: #{rnn_decoder_forward.3} parent=0 // pred_region
    _
  $region13: #{rnn_decoder_forward.3} parent=0 // pred_fallthru
    _
  // Predicated region
  $region14: #{rnn_decoder_forward.3} parent=0 // pred_check
    _
  $region15: #{rnn_decoder_forward.3} parent=0 // pred_check_branch
    %17 = sbr.rel (0) target = $region17
  $region16: #{rnn_decoder_forward.3} parent=0 // pred_region
    _
  $region17: #{rnn_decoder_forward.3} parent=0 // pred_fallthru
    _
  // Predicated region
  $region18: #{rnn_decoder_forward.3} parent=0 // pred_check
    _
  $region19: #{rnn_decoder_forward.3} parent=0 // pred_check_branch
    %19 = sbr.rel (0) target = $region21
  $region20: #{rnn_decoder_forward.3} parent=0 // pred_region
    _
  $region21: #{rnn_decoder_forward.3} parent=0 // pred_fallthru
    _
  %v20 = vld [vmem:[%s0] sm:$0xff]
  %v21 = vld [vmem:[%s0 + $0x8] sm:$0xff]
  %v22 = vld [vmem:[%s0 + $0x10] sm:$0xff]
  %v23 = vld [vmem:[%s0 + $0x18] sm:$0xff]
  %v24 = vld [vmem:[%s0 + $0x20] sm:$0xff]
  %v25 = vld [vmem:[%s0 + $0x28] sm:$0xff]
  %v26 = vld [vmem:[%s0 + $0x30] sm:$0xff]
  %v27 = vld [vmem:[%s0 + $0x38] sm:$0xff]
  %v28 = vld [vmem:[%s1] sm:$0xf]
  %v29 = vld [vmem:[%s2] sm:$0x1]
  %v31 = vlaneseq
  %v32 = vshrl.u32 %v31, 7
  %v33 = vsub.s32 0, %v32
  %v34 = vrot.slane %v29, %v33
  %vm36 = vcmask 31744
  %v38 = vsel %vm36, %v20, 0
  %v41 = vsel %vm36, %v21, 0
  %v44 = vsel %vm36, %v22, 0
  %v47 = vsel %vm36, %v23, 0
  %v50 = vsel %vm36, %v24, 0
  %v53 = vsel %vm36, %v25, 0
  %v56 = vsel %vm36, %v26, 0
  %v59 = vsel %vm36, %v27, 0
  %vm61 = vcmask 1043456
  %v63 = vsel %vm61, %v28, 0
  %65 = vmatprep.subr.mxu0 0.0
  %66 = vmatpush1.msra.mxu0 %v63
  %67 = vmatprep.subr.mxu0 0.0
  %68 = vmatpush1.msra.mxu0 0.0
  %69 = vmatprep.subr.mxu0 0.0
  %70 = vmatpush1.msra.mxu0 0.0
  %71 = vmatprep.subr.mxu0 0.0
  %72 = vmatpush1.msra.mxu0 0.0
  %73 = vmatprep.subr.mxu0 0.0
  %74 = vmatpush1.msra.mxu0 0.0
  %75 = vmatprep.subr.mxu0 0.0
  %76 = vmatpush1.msra.mxu0 0.0
  %77 = vmatprep.subr.mxu0 0.0
  %78 = vmatpush1.msra.mxu0 0.0
  %79 = vmatprep.subr.mxu0 0.0
  %80 = vmatpush1.msra.mxu0 0.0
  %81 = vmatprep.subr.mxu0 0.0
  %82 = vmatpush1.msra.mxu0 0.0
  %83 = vmatprep.subr.mxu0 0.0
  %84 = vmatpush1.msra.mxu0 0.0
  %85 = vmatprep.subr.mxu0 0.0
  %86 = vmatpush1.msra.mxu0 0.0
  %87 = vmatprep.subr.mxu0 0.0
  %88 = vmatpush1.msra.mxu0 0.0
  %89 = vmatprep.subr.mxu0 0.0
  %90 = vmatpush1.msra.mxu0 0.0
  %91 = vmatprep.subr.mxu0 0.0
  %92 = vmatpush1.msra.mxu0 0.0
  %93 = vmatprep.subr.mxu0 0.0
  %94 = vmatpush1.msra.mxu0 0.0
  %95 = vmatprep.subr.mxu0 0.0
  %96 = vmatpush1.msra.mxu0 0.0
  %97 = vmatprep.subr.mxu0 0.0
  %98 = vmatpush1.msra.mxu0 0.0
  %99 = vmatprep.subr.mxu0 0.0
  %100 = vmatpush1.msra.mxu0 0.0
  %101 = vmatprep.subr.mxu0 0.0
  %102 = vmatpush1.msra.mxu0 0.0
  %103 = vmatprep.subr.mxu0 0.0
  %104 = vmatpush1.msra.mxu0 0.0
  %105 = vmatprep.subr.mxu0 0.0
  %106 = vmatpush1.msra.mxu0 0.0
  %107 = vmatprep.subr.mxu0 0.0
  %108 = vmatpush1.msra.mxu0 0.0
  %109 = vmatprep.subr.mxu0 0.0
  %110 = vmatpush1.msra.mxu0 0.0
  %111 = vmatprep.subr.mxu0 0.0
  %112 = vmatpush1.msra.mxu0 0.0
  %113 = vmatprep.subr.mxu0 0.0
  %114 = vmatpush1.msra.mxu0 0.0
  %115 = vmatprep.subr.mxu0 0.0
  %116 = vmatpush1.msra.mxu0 0.0
  %117 = vmatprep.subr.mxu0 0.0
  %118 = vmatpush1.msra.mxu0 0.0
  %119 = vmatprep.subr.mxu0 0.0
  %120 = vmatpush1.msra.mxu0 0.0
  %121 = vmatprep.subr.mxu0 0.0
  %122 = vmatpush1.msra.mxu0 0.0
  %123 = vmatprep.subr.mxu0 0.0
  %124 = vmatpush1.msra.mxu0 0.0
  %125 = vmatprep.subr.mxu0 0.0
  %126 = vmatpush1.msra.mxu0 0.0
  %127 = vmatprep.subr.mxu0 0.0
  %128 = vmatpush1.msra.mxu0 0.0
  %129 = vmatprep.mubr.f32.mxu0 0.0
  %130 = vmatmul.mubr.f32.gmra.mrb[0].mxu0 %v38
  %v131 = vpop.f32.mrb[0].mxu0
  %v132 = vadd.f32 %v34, %v131
  %v133 = vpop.f32.mrb[0].mxu0
  %134 = vmatprep.mubr.f32.mxu0 0.0
  %135 = vmatmul.mubr.f32.gmra.mrb[0].mxu0 %v41
  %v136 = vpop.f32.mrb[0].mxu0
  %v137 = vadd.f32 %v34, %v136
  %v138 = vpop.f32.mrb[0].mxu0
  %139 = vmatprep.mubr.f32.mxu0 0.0
  %140 = vmatmul.mubr.f32.gmra.mrb[0].mxu0 %v44
  %v141 = vpop.f32.mrb[0].mxu0
  %v142 = vadd.f32 %v34, %v141
  %v143 = vpop.f32.mrb[0].mxu0
  %144 = vmatprep.mubr.f32.mxu0 0.0
  %145 = vmatmul.mubr.f32.gmra.mrb[0].mxu0 %v47
  %v146 = vpop.f32.mrb[0].mxu0
  %v147 = vadd.f32 %v34, %v146
  %v148 = vpop.f32.mrb[0].mxu0
  %149 = vmatprep.mubr.f32.mxu0 0.0
  %150 = vmatmul.mubr.f32.gmra.mrb[0].mxu0 %v50
  %v151 = vpop.f32.mrb[0].mxu0
  %v152 = vadd.f32 %v34, %v151
  %v153 = vpop.f32.mrb[0].mxu0
  %154 = vmatprep.mubr.f32.mxu0 0.0
  %155 = vmatmul.mubr.f32.gmra.mrb[0].mxu0 %v53
  %v156 = vpop.f32.mrb[0].mxu0
  %v157 = vadd.f32 %v34, %v156
  %v158 = vpop.f32.mrb[0].mxu0
  %159 = vmatprep.mubr.f32.mxu0 0.0
  %160 = vmatmul.mubr.f32.gmra.mrb[0].mxu0 %v56
  %v161 = vpop.f32.mrb[0].mxu0
  %v162 = vadd.f32 %v34, %v161
  %v163 = vpop.f32.mrb[0].mxu0
  %164 = vmatprep.mubr.f32.mxu0 0.0
  %165 = vmatmul.mubr.f32.gmra.mrb[0].mxu0 %v59
  %v166 = vpop.f32.mrb[0].mxu0
  %v167 = vadd.f32 %v34, %v166
  %v168 = vpop.f32.mrb[0].mxu0
  %169 = vdwg.mxu0
  %v170 = vtanh.pop %v132
  %v171 = vtanh.pop %v137
  %v172 = vtanh.pop %v142
  %v173 = vtanh.pop %v147
  %v174 = vtanh.pop %v152
  %v175 = vtanh.pop %v157
  %v176 = vtanh.pop %v162
  %v177 = vtanh.pop %v167
  %v178 = vld [vmem:[%s3] sm:$0xff]
  %v179 = vld [vmem:[%s3 + $0x8] sm:$0xff]
  %v180 = vld [vmem:[%s4] sm:$0x1]
  %v182 = vlaneseq
  %v183 = vshrl.u32 %v182, 7
  %v184 = vsub.s32 0, %v183
  %v185 = vrot.slane %v180, %v184
  %vm187 = vcmask 130048
  %v189 = vsel %vm187, %v170, 0
  %v192 = vsel %vm187, %v171, 0
  %v195 = vsel %vm187, %v172, 0
  %v198 = vsel %vm187, %v173, 0
  %v201 = vsel %vm187, %v174, 0
  %v204 = vsel %vm187, %v175, 0
  %v207 = vsel %vm187, %v176, 0
  %v210 = vsel %vm187, %v177, 0
  %212 = vmatprep.subr.mxu0 0.0
  %213 = vmatpush1.msra.mxu0 %v178
  %214 = vmatprep.subr.mxu0 0.0
  %215 = vmatpush1.msra.mxu0 %v179
  %216 = vmatprep.subr.mxu0 0.0
  %217 = vmatpush1.msra.mxu0 0.0
  %218 = vmatprep.subr.mxu0 0.0
  %219 = vmatpush1.msra.mxu0 0.0
  %220 = vmatprep.subr.mxu0 0.0
  %221 = vmatpush1.msra.mxu0 0.0
  %222 = vmatprep.subr.mxu0 0.0
  %223 = vmatpush1.msra.mxu0 0.0
  %224 = vmatprep.subr.mxu0 0.0
  %225 = vmatpush1.msra.mxu0 0.0
  %226 = vmatprep.subr.mxu0 0.0
  %227 = vmatpush1.msra.mxu0 0.0
  %228 = vmatprep.subr.mxu0 0.0
  %229 = vmatpush1.msra.mxu0 0.0
  %230 = vmatprep.subr.mxu0 0.0
  %231 = vmatpush1.msra.mxu0 0.0
  %232 = vmatprep.subr.mxu0 0.0
  %233 = vmatpush1.msra.mxu0 0.0
  %234 = vmatprep.subr.mxu0 0.0
  %235 = vmatpush1.msra.mxu0 0.0
  %236 = vmatprep.subr.mxu0 0.0
  %237 = vmatpush1.msra.mxu0 0.0
  %238 = vmatprep.subr.mxu0 0.0
  %239 = vmatpush1.msra.mxu0 0.0
  %240 = vmatprep.subr.mxu0 0.0
  %241 = vmatpush1.msra.mxu0 0.0
  %242 = vmatprep.subr.mxu0 0.0
  %243 = vmatpush1.msra.mxu0 0.0
  %244 = vmatprep.subr.mxu0 0.0
  %245 = vmatpush1.msra.mxu0 0.0
  %246 = vmatprep.subr.mxu0 0.0
  %247 = vmatpush1.msra.mxu0 0.0
  %248 = vmatprep.subr.mxu0 0.0
  %249 = vmatpush1.msra.mxu0 0.0
  %250 = vmatprep.subr.mxu0 0.0
  %251 = vmatpush1.msra.mxu0 0.0
  %252 = vmatprep.subr.mxu0 0.0
  %253 = vmatpush1.msra.mxu0 0.0
  %254 = vmatprep.subr.mxu0 0.0
  %255 = vmatpush1.msra.mxu0 0.0
  %256 = vmatprep.subr.mxu0 0.0
  %257 = vmatpush1.msra.mxu0 0.0
  %258 = vmatprep.subr.mxu0 0.0
  %259 = vmatpush1.msra.mxu0 0.0
  %260 = vmatprep.subr.mxu0 0.0
  %261 = vmatpush1.msra.mxu0 0.0
  %262 = vmatprep.subr.mxu0 0.0
  %263 = vmatpush1.msra.mxu0 0.0
  %264 = vmatprep.subr.mxu0 0.0
  %265 = vmatpush1.msra.mxu0 0.0
  %266 = vmatprep.subr.mxu0 0.0
  %267 = vmatpush1.msra.mxu0 0.0
  %268 = vmatprep.subr.mxu0 0.0
  %269 = vmatpush1.msra.mxu0 0.0
  %270 = vmatprep.subr.mxu0 0.0
  %271 = vmatpush1.msra.mxu0 0.0
  %272 = vmatprep.subr.mxu0 0.0
  %273 = vmatpush1.msra.mxu0 0.0
  %274 = vmatprep.subr.mxu0 0.0
  %275 = vmatpush1.msra.mxu0 0.0
  %276 = vmatprep.mubr.f32.mxu0 0.0
  %277 = vmatmul.mubr.f32.gmra.mrb[0].mxu0 %v189
  %v278 = vpop.f32.mrb[0].mxu0
  %v279 = vadd.f32 %v185, %v278
  %v280 = vpop.f32.mrb[0].mxu0
  %281 = vmatprep.mubr.f32.mxu0 0.0
  %282 = vmatmul.mubr.f32.gmra.mrb[0].mxu0 %v192
  %v283 = vpop.f32.mrb[0].mxu0
  %v284 = vadd.f32 %v185, %v283
  %v285 = vpop.f32.mrb[0].mxu0
  %286 = vmatprep.mubr.f32.mxu0 0.0
  %287 = vmatmul.mubr.f32.gmra.mrb[0].mxu0 %v195
  %v288 = vpop.f32.mrb[0].mxu0
  %v289 = vadd.f32 %v185, %v288
  %v290 = vpop.f32.mrb[0].mxu0
  %291 = vmatprep.mubr.f32.mxu0 0.0
  %292 = vmatmul.mubr.f32.gmra.mrb[0].mxu0 %v198
  %v293 = vpop.f32.mrb[0].mxu0
  %v294 = vadd.f32 %v185, %v293
  %v295 = vpop.f32.mrb[0].mxu0
  %296 = vmatprep.mubr.f32.mxu0 0.0
  %297 = vmatmul.mubr.f32.gmra.mrb[0].mxu0 %v201
  %v298 = vpop.f32.mrb[0].mxu0
  %v299 = vadd.f32 %v185, %v298
  %v300 = vpop.f32.mrb[0].mxu0
  %301 = vmatprep.mubr.f32.mxu0 0.0
  %302 = vmatmul.mubr.f32.gmra.mrb[0].mxu0 %v204
  %v303 = vpop.f32.mrb[0].mxu0
  %v304 = vadd.f32 %v185, %v303
  %v305 = vpop.f32.mrb[0].mxu0
  %306 = vmatprep.mubr.f32.mxu0 0.0
  %307 = vmatmul.mubr.f32.gmra.mrb[0].mxu0 %v207
  %v308 = vpop.f32.mrb[0].mxu0
  %v309 = vadd.f32 %v185, %v308
  %v310 = vpop.f32.mrb[0].mxu0
  %311 = vmatprep.mubr.f32.mxu0 0.0
  %312 = vmatmul.mubr.f32.gmra.mrb[0].mxu0 %v210
  %v313 = vpop.f32.mrb[0].mxu0
  %v314 = vadd.f32 %v185, %v313
  %v315 = vpop.f32.mrb[0].mxu0
  %316 = vdwg.mxu0
  %317 = vst [vmem:[%s5] sm:$0xff] %v279
  %318 = vst [vmem:[%s5 + $0x8] sm:$0xff] %v284
  %319 = vst [vmem:[%s5 + $0x10] sm:$0xff] %v289
  %320 = vst [vmem:[%s5 + $0x18] sm:$0xff] %v294
  %321 = vst [vmem:[%s5 + $0x20] sm:$0xff] %v299
  %322 = vst [vmem:[%s5 + $0x28] sm:$0xff] %v304
  %323 = vst [vmem:[%s5 + $0x30] sm:$0xff] %v309
  %324 = vst [vmem:[%s5 + $0x38] sm:$0xff] %v314
  // Predicated region
  $region22: #{rnn_decoder_forward.3} parent=0 // pred_check
    _
  $region23: #{rnn_decoder_forward.3} parent=0 // pred_check_branch
    %326 = sbr.rel (0) target = $region25
  $region24: #{rnn_decoder_forward.3} parent=0 // pred_region
    _
  $region25: #{rnn_decoder_forward.3} parent=0 // pred_fallthru
    _
  // Predicated region
  $region26: #{rnn_decoder_forward.3} parent=0 // pred_check
    _
  $region27: #{rnn_decoder_forward.3} parent=0 // pred_check_branch
    %328 = sbr.rel (0) target = $region29
  $region28: #{rnn_decoder_forward.3} parent=0 // pred_region
    _
  $region29: #{rnn_decoder_forward.3} parent=0 // pred_fallthru
    _

// kernel: rnn_decoder_forward.4
$region0: #{rnn_decoder_forward.4}
  #allocation0 [shape = 'u32[]', space=smem, size = 0x4, offset = 0x4, fixed_abs, tag = 'smem constant byte address 0x4 - core index']
  #allocation1 [shape = 'u32[144,128]{1,0:T(1,128)}', space=vmem, size = 0x12000, scoped, tag = 'internal scratch']
  #allocation2 [shape = 'f32[8,32]{1,0:T(8,128)}', space=vmem, size = 0x1000, scoped, tag = 'scratch operand']
  #allocation3 [shape = 'f32[8,32]{1,0:T(8,128)}', space=vmem, size = 0x1000, scoped, tag = 'scratch operand']
  %s0 = inlined_call_operand.vmem [shape: f32[1,64,128], index: 0, kind: input, shape index: {}]
  %s1 = inlined_call_operand.vmem [shape: f32[32,128], index: 1, kind: input, shape index: {}]
  %s2 = inlined_call_operand.vmem [shape: f32[32,128], index: 2, kind: input, shape index: {}]
  %s3 = inlined_call_operand.vmem [shape: f32[1,128], index: 3, kind: input, shape index: {}]
  %s4 = inlined_call_operand.vmem [shape: f32[1,64,128], index: 4, kind: output, shape index: {}]
  %s5 = sld [smem:[#allocation0]]
  $region30: #{rnn_decoder_forward.4} parent=0
    _
  %s7 = ssub.s32 1, %s5
  %s8 = scalar_select 0, %s7, %s5
  // Predicated region
  $region2: #{rnn_decoder_forward.4} parent=0 // pred_check
    _
  $region3: #{rnn_decoder_forward.4} parent=0 // pred_check_branch
    %10 = sbr.rel (0) target = $region5
  $region4: #{rnn_decoder_forward.4} parent=0 // pred_region
    _
  $region5: #{rnn_decoder_forward.4} parent=0 // pred_fallthru
    _
  // Predicated region
  $region6: #{rnn_decoder_forward.4} parent=0 // pred_check
    _
  $region7: #{rnn_decoder_forward.4} parent=0 // pred_check_branch
    %12 = sbr.rel (0) target = $region9
  $region8: #{rnn_decoder_forward.4} parent=0 // pred_region
    _
  $region9: #{rnn_decoder_forward.4} parent=0 // pred_fallthru
    _
  // Predicated region
  $region10: #{rnn_decoder_forward.4} parent=0 // pred_check
    _
  $region11: #{rnn_decoder_forward.4} parent=0 // pred_check_branch
    %14 = sbr.rel (0) target = $region13
  $region12: #{rnn_decoder_forward.4} parent=0 // pred_region
    _
  $region13: #{rnn_decoder_forward.4} parent=0 // pred_fallthru
    _
  // Predicated region
  $region14: #{rnn_decoder_forward.4} parent=0 // pred_check
    _
  $region15: #{rnn_decoder_forward.4} parent=0 // pred_check_branch
    %16 = sbr.rel (0) target = $region17
  $region16: #{rnn_decoder_forward.4} parent=0 // pred_region
    _
  $region17: #{rnn_decoder_forward.4} parent=0 // pred_fallthru
    _
  %p17 = scmp.eq.s32.totalorder 0, 0
  // Predicated region
  $region18: #{rnn_decoder_forward.4} parent=0 // pred_check
    %p18 = pneg %p17
  $region19: #{rnn_decoder_forward.4} parent=0 // pred_check_branch
    %20 = sbr.rel (%p18) target = $region21
  $region20: #{rnn_decoder_forward.4} parent=0 // pred_region
    %vm21 = vcmask 261120
    %22 = vst.msk [vmem:[#allocation2] sm:$0xff] %vm21, 0.0
    %23 = vst.msk [vmem:[#allocation3] sm:$0xff] %vm21, 0.0
  $region21: #{rnn_decoder_forward.4} parent=0 // pred_fallthru
    _
  %v24 = vld [vmem:[%s0] sm:$0xff]
  %v25 = vld [vmem:[%s0 + $0x8] sm:$0xff]
  %v26 = vld [vmem:[%s0 + $0x10] sm:$0xff]
  %v27 = vld [vmem:[%s0 + $0x18] sm:$0xff]
  %v28 = vld [vmem:[%s0 + $0x20] sm:$0xff]
  %v29 = vld [vmem:[%s0 + $0x28] sm:$0xff]
  %v30 = vld [vmem:[%s0 + $0x30] sm:$0xff]
  %v31 = vld [vmem:[%s0 + $0x38] sm:$0xff]
  %v32 = vld [vmem:[%s1] sm:$0xff]
  %v33 = vld [vmem:[%s1 + $0x8] sm:$0xff]
  %v34 = vld [vmem:[%s1 + $0x10] sm:$0xff]
  %v35 = vld [vmem:[%s1 + $0x18] sm:$0xff]
  %v36 = vld [vmem:[#allocation2] sm:$0xff]
  %v37 = vld [vmem:[#allocation3] sm:$0xff]
  %vm38 = vcmask 261120
  %v40 = vsel %vm38, %v36, 0
  %42 = vmatprep.subr.mxu0 0.0
  %43 = vmatpush1.msra.mxu0 %v32
  %44 = vmatprep.subr.mxu0 0.0
  %45 = vmatpush1.msra.mxu0 %v33
  %46 = vmatprep.subr.mxu0 0.0
  %47 = vmatpush1.msra.mxu0 %v34
  %48 = vmatprep.subr.mxu0 0.0
  %49 = vmatpush1.msra.mxu0 %v35
  %50 = vmatprep.subr.mxu0 0.0
  %51 = vmatpush1.msra.mxu0 0.0
  %52 = vmatprep.subr.mxu0 0.0
  %53 = vmatpush1.msra.mxu0 0.0
  %54 = vmatprep.subr.mxu0 0.0
  %55 = vmatpush1.msra.mxu0 0.0
  %56 = vmatprep.subr.mxu0 0.0
  %57 = vmatpush1.msra.mxu0 0.0
  %58 = vmatprep.subr.mxu0 0.0
  %59 = vmatpush1.msra.mxu0 0.0
  %60 = vmatprep.subr.mxu0 0.0
  %61 = vmatpush1.msra.mxu0 0.0
  %62 = vmatprep.subr.mxu0 0.0
  %63 = vmatpush1.msra.mxu0 0.0
  %64 = vmatprep.subr.mxu0 0.0
  %65 = vmatpush1.msra.mxu0 0.0
  %66 = vmatprep.subr.mxu0 0.0
  %67 = vmatpush1.msra.mxu0 0.0
  %68 = vmatprep.subr.mxu0 0.0
  %69 = vmatpush1.msra.mxu0 0.0
  %70 = vmatprep.subr.mxu0 0.0
  %71 = vmatpush1.msra.mxu0 0.0
  %72 = vmatprep.subr.mxu0 0.0
  %73 = vmatpush1.msra.mxu0 0.0
  %74 = vmatprep.subr.mxu0 0.0
  %75 = vmatpush1.msra.mxu0 0.0
  %76 = vmatprep.subr.mxu0 0.0
  %77 = vmatpush1.msra.mxu0 0.0
  %78 = vmatprep.subr.mxu0 0.0
  %79 = vmatpush1.msra.mxu0 0.0
  %80 = vmatprep.subr.mxu0 0.0
  %81 = vmatpush1.msra.mxu0 0.0
  %82 = vmatprep.subr.mxu0 0.0
  %83 = vmatpush1.msra.mxu0 0.0
  %84 = vmatprep.subr.mxu0 0.0
  %85 = vmatpush1.msra.mxu0 0.0
  %86 = vmatprep.subr.mxu0 0.0
  %87 = vmatpush1.msra.mxu0 0.0
  %88 = vmatprep.subr.mxu0 0.0
  %89 = vmatpush1.msra.mxu0 0.0
  %90 = vmatprep.subr.mxu0 0.0
  %91 = vmatpush1.msra.mxu0 0.0
  %92 = vmatprep.subr.mxu0 0.0
  %93 = vmatpush1.msra.mxu0 0.0
  %94 = vmatprep.subr.mxu0 0.0
  %95 = vmatpush1.msra.mxu0 0.0
  %96 = vmatprep.subr.mxu0 0.0
  %97 = vmatpush1.msra.mxu0 0.0
  %98 = vmatprep.subr.mxu0 0.0
  %99 = vmatpush1.msra.mxu0 0.0
  %100 = vmatprep.subr.mxu0 0.0
  %101 = vmatpush1.msra.mxu0 0.0
  %102 = vmatprep.subr.mxu0 0.0
  %103 = vmatpush1.msra.mxu0 0.0
  %104 = vmatprep.subr.mxu0 0.0
  %105 = vmatpush1.msra.mxu0 0.0
  %106 = vmatprep.mubr.f32.mxu0 0.0
  %107 = vmatmul.mubr.f32.gmra.mrb[0].mxu0 %v40
  %v108 = vpop.f32.mrb[0].mxu0
  %v109 = vadd.f32 0.0, %v108
  %v110 = vpop.f32.mrb[0].mxu0
  %111 = vdwg.mxu0
  %v112 = vadd.f32 %v24, %v109
  %v113 = vxor.u32 %v112, 2147483648
  %v114 = vmul.f32 %v113, 1.442695
  %v115 = vpow.pop %v114
  %v116 = vadd.f32 %v115, 1.0
  %v117 = vrcp.pop %v116
  %v118 = vmul.f32 1.0, %v117
  %v119 = vtanh.pop %v112
  %121 = vrot.lane.b32.xlu0 %v37, 32
  %v122 = vpop.permute.xlu0 %121
  %v124 = vmul.f32 %v118, %v122
  %126 = vrot.lane.b32.xlu0 %v119, 64
  %v127 = vpop.permute.xlu0 %126
  %v129 = vmul.f32 %v118, %v127
  %131 = vrot.lane.b32.xlu0 %v129, 32
  %v132 = vpop.permute.xlu0 %131
  %v134 = vadd.f32 %v124, %v132
  %v135 = vtanh.pop %v134
  %137 = vrot.lane.b32.xlu0 %v135, 64
  %v138 = vpop.permute.xlu0 %137
  %v140 = vmul.f32 %v118, %v138
  %142 = vrot.lane.b32.xlu0 %v140, 32
  %v143 = vpop.permute.xlu0 %142
  %v144 = vsel %vm38, %v143, 0
  %146 = vmatprep.subr.mxu0 0.0
  %147 = vmatpush1.msra.mxu0 %v32
  %148 = vmatprep.subr.mxu0 0.0
  %149 = vmatpush1.msra.mxu0 %v33
  %150 = vmatprep.subr.mxu0 0.0
  %151 = vmatpush1.msra.mxu0 %v34
  %152 = vmatprep.subr.mxu0 0.0
  %153 = vmatpush1.msra.mxu0 %v35
  %154 = vmatprep.subr.mxu0 0.0
  %155 = vmatpush1.msra.mxu0 0.0
  %156 = vmatprep.subr.mxu0 0.0
  %157 = vmatpush1.msra.mxu0 0.0
  %158 = vmatprep.subr.mxu0 0.0
  %159 = vmatpush1.msra.mxu0 0.0
  %160 = vmatprep.subr.mxu0 0.0
  %161 = vmatpush1.msra.mxu0 0.0
  %162 = vmatprep.subr.mxu0 0.0
  %163 = vmatpush1.msra.mxu0 0.0
  %164 = vmatprep.subr.mxu0 0.0
  %165 = vmatpush1.msra.mxu0 0.0
  %166 = vmatprep.subr.mxu0 0.0
  %167 = vmatpush1.msra.mxu0 0.0
  %168 = vmatprep.subr.mxu0 0.0
  %169 = vmatpush1.msra.mxu0 0.0
  %170 = vmatprep.subr.mxu0 0.0
  %171 = vmatpush1.msra.mxu0 0.0
  %172 = vmatprep.subr.mxu0 0.0
  %173 = vmatpush1.msra.mxu0 0.0
  %174 = vmatprep.subr.mxu0 0.0
  %175 = vmatpush1.msra.mxu0 0.0
  %176 = vmatprep.subr.mxu0 0.0
  %177 = vmatpush1.msra.mxu0 0.0
  %178 = vmatprep.subr.mxu0 0.0
  %179 = vmatpush1.msra.mxu0 0.0
  %180 = vmatprep.subr.mxu0 0.0
  %181 = vmatpush1.msra.mxu0 0.0
  %182 = vmatprep.subr.mxu0 0.0
  %183 = vmatpush1.msra.mxu0 0.0
  %184 = vmatprep.subr.mxu0 0.0
  %185 = vmatpush1.msra.mxu0 0.0
  %186 = vmatprep.subr.mxu0 0.0
  %187 = vmatpush1.msra.mxu0 0.0
  %188 = vmatprep.subr.mxu0 0.0
  %189 = vmatpush1.msra.mxu0 0.0
  %190 = vmatprep.subr.mxu0 0.0
  %191 = vmatpush1.msra.mxu0 0.0
  %192 = vmatprep.subr.mxu0 0.0
  %193 = vmatpush1.msra.mxu0 0.0
  %194 = vmatprep.subr.mxu0 0.0
  %195 = vmatpush1.msra.mxu0 0.0
  %196 = vmatprep.subr.mxu0 0.0
  %197 = vmatpush1.msra.mxu0 0.0
  %198 = vmatprep.subr.mxu0 0.0
  %199 = vmatpush1.msra.mxu0 0.0
  %200 = vmatprep.subr.mxu0 0.0
  %201 = vmatpush1.msra.mxu0 0.0
  %202 = vmatprep.subr.mxu0 0.0
  %203 = vmatpush1.msra.mxu0 0.0
  %204 = vmatprep.subr.mxu0 0.0
  %205 = vmatpush1.msra.mxu0 0.0
  %206 = vmatprep.subr.mxu0 0.0
  %207 = vmatpush1.msra.mxu0 0.0
  %208 = vmatprep.subr.mxu0 0.0
  %209 = vmatpush1.msra.mxu0 0.0
  %210 = vmatprep.mubr.f32.mxu0 0.0
  %211 = vmatmul.mubr.f32.gmra.mrb[0].mxu0 %v144
  %v212 = vpop.f32.mrb[0].mxu0
  %v213 = vadd.f32 0.0, %v212
  %v214 = vpop.f32.mrb[0].mxu0
  %215 = vdwg.mxu0
  %v216 = vadd.f32 %v25, %v213
  %v217 = vxor.u32 %v216, 2147483648
  %v218 = vmul.f32 %v217, 1.442695
  %v219 = vpow.pop %v218
  %v220 = vadd.f32 %v219, 1.0
  %v221 = vrcp.pop %v220
  %v222 = vmul.f32 1.0, %v221
  %v223 = vtanh.pop %v216
  %v224 = vmul.f32 %v222, %v134
  %226 = vrot.lane.b32.xlu0 %v223, 64
  %v227 = vpop.permute.xlu0 %226
  %v229 = vmul.f32 %v222, %v227
  %231 = vrot.lane.b32.xlu0 %v229, 32
  %v232 = vpop.permute.xlu0 %231
  %v234 = vadd.f32 %v224, %v232
  %v235 = vtanh.pop %v234
  %237 = vrot.lane.b32.xlu0 %v235, 64
  %v238 = vpop.permute.xlu0 %237
  %v240 = vmul.f32 %v222, %v238
  %242 = vrot.lane.b32.xlu0 %v240, 32
  %v243 = vpop.permute.xlu0 %242
  %v244 = vsel %vm38, %v243, 0
  %246 = vmatprep.subr.mxu0 0.0
  %247 = vmatpush1.msra.mxu0 %v32
  %248 = vmatprep.subr.mxu0 0.0
  %249 = vmatpush1.msra.mxu0 %v33
  %250 = vmatprep.subr.mxu0 0.0
  %251 = vmatpush1.msra.mxu0 %v34
  %252 = vmatprep.subr.mxu0 0.0
  %253 = vmatpush1.msra.mxu0 %v35
  %254 = vmatprep.subr.mxu0 0.0
  %255 = vmatpush1.msra.mxu0 0.0
  %256 = vmatprep.subr.mxu0 0.0
  %257 = vmatpush1.msra.mxu0 0.0
  %258 = vmatprep.subr.mxu0 0.0
  %259 = vmatpush1.msra.mxu0 0.0
  %260 = vmatprep.subr.mxu0 0.0
  %261 = vmatpush1.msra.mxu0 0.0
  %262 = vmatprep.subr.mxu0 0.0
  %263 = vmatpush1.msra.mxu0 0.0
  %264 = vmatprep.subr.mxu0 0.0
  %265 = vmatpush1.msra.mxu0 0.0
  %266 = vmatprep.subr.mxu0 0.0
  %267 = vmatpush1.msra.mxu0 0.0
  %268 = vmatprep.subr.mxu0 0.0
  %269 = vmatpush1.msra.mxu0 0.0
  %270 = vmatprep.subr.mxu0 0.0
  %271 = vmatpush1.msra.mxu0 0.0
  %272 = vmatprep.subr.mxu0 0.0
  %273 = vmatpush1.msra.mxu0 0.0
  %274 = vmatprep.subr.mxu0 0.0
  %275 = vmatpush1.msra.mxu0 0.0
  %276 = vmatprep.subr.mxu0 0.0
  %277 = vmatpush1.msra.mxu0 0.0
  %278 = vmatprep.subr.mxu0 0.0
  %279 = vmatpush1.msra.mxu0 0.0
  %280 = vmatprep.subr.mxu0 0.0
  %281 = vmatpush1.msra.mxu0 0.0
  %282 = vmatprep.subr.mxu0 0.0
  %283 = vmatpush1.msra.mxu0 0.0
  %284 = vmatprep.subr.mxu0 0.0
  %285 = vmatpush1.msra.mxu0 0.0
  %286 = vmatprep.subr.mxu0 0.0
  %287 = vmatpush1.msra.mxu0 0.0
  %288 = vmatprep.subr.mxu0 0.0
  %289 = vmatpush1.msra.mxu0 0.0
  %290 = vmatprep.subr.mxu0 0.0
  %291 = vmatpush1.msra.mxu0 0.0
  %292 = vmatprep.subr.mxu0 0.0
  %293 = vmatpush1.msra.mxu0 0.0
  %294 = vmatprep.subr.mxu0 0.0
  %295 = vmatpush1.msra.mxu0 0.0
  %296 = vmatprep.subr.mxu0 0.0
  %297 = vmatpush1.msra.mxu0 0.0
  %298 = vmatprep.subr.mxu0 0.0
  %299 = vmatpush1.msra.mxu0 0.0
  %300 = vmatprep.subr.mxu0 0.0
  %301 = vmatpush1.msra.mxu0 0.0
  %302 = vmatprep.subr.mxu0 0.0
  %303 = vmatpush1.msra.mxu0 0.0
  %304 = vmatprep.subr.mxu0 0.0
  %305 = vmatpush1.msra.mxu0 0.0
  %306 = vmatprep.subr.mxu0 0.0
  %307 = vmatpush1.msra.mxu0 0.0
  %308 = vmatprep.subr.mxu0 0.0
  %309 = vmatpush1.msra.mxu0 0.0
  %310 = vmatprep.mubr.f32.mxu0 0.0
  %311 = vmatmul.mubr.f32.gmra.mrb[0].mxu0 %v244
  %v312 = vpop.f32.mrb[0].mxu0
  %v313 = vadd.f32 0.0, %v312
  %v314 = vpop.f32.mrb[0].mxu0
  %315 = vdwg.mxu0
  %v316 = vadd.f32 %v26, %v313
  %v317 = vxor.u32 %v316, 2147483648
  %v318 = vmul.f32 %v317, 1.442695
  %v319 = vpow.pop %v318
  %v320 = vadd.f32 %v319, 1.0
  %v321 = vrcp.pop %v320
  %v322 = vmul.f32 1.0, %v321
  %v323 = vtanh.pop %v316
  %v324 = vmul.f32 %v322, %v234
  %326 = vrot.lane.b32.xlu0 %v323, 64
  %v327 = vpop.permute.xlu0 %326
  %v329 = vmul.f32 %v322, %v327
  %331 = vrot.lane.b32.xlu0 %v329, 32
  %v332 = vpop.permute.xlu0 %331
  %v334 = vadd.f32 %v324, %v332
  %v335 = vtanh.pop %v334
  %337 = vrot.lane.b32.xlu0 %v335, 64
  %v338 = vpop.permute.xlu0 %337
  %v340 = vmul.f32 %v322, %v338
  %342 = vrot.lane.b32.xlu0 %v340, 32
  %v343 = vpop.permute.xlu0 %342
  %v344 = vsel %vm38, %v343, 0
  %346 = vmatprep.subr.mxu0 0.0
  %347 = vmatpush1.msra.mxu0 %v32
  %348 = vmatprep.subr.mxu0 0.0
  %349 = vmatpush1.msra.mxu0 %v33
  %350 = vmatprep.subr.mxu0 0.0
  %351 = vmatpush1.msra.mxu0 %v34
  %352 = vmatprep.subr.mxu0 0.0
  %353 = vmatpush1.msra.mxu0 %v35
  %354 = vmatprep.subr.mxu0 0.0
  %355 = vmatpush1.msra.mxu0 0.0
  %356 = vmatprep.subr.mxu0 0.0
  %357 = vmatpush1.msra.mxu0 0.0
  %358 = vmatprep.subr.mxu0 0.0
  %359 = vmatpush1.msra.mxu0 0.0
  %360 = vmatprep.subr.mxu0 0.0
  %361 = vmatpush1.msra.mxu0 0.0
  %362 = vmatprep.subr.mxu0 0.0
  %363 = vmatpush1.msra.mxu0 0.0
  %364 = vmatprep.subr.mxu0 0.0
  %365 = vmatpush1.msra.mxu0 0.0
  %366 = vmatprep.subr.mxu0 0.0
  %367 = vmatpush1.msra.mxu0 0.0
  %368 = vmatprep.subr.mxu0 0.0
  %369 = vmatpush1.msra.mxu0 0.0
  %370 = vmatprep.subr.mxu0 0.0
  %371 = vmatpush1.msra.mxu0 0.0
  %372 = vmatprep.subr.mxu0 0.0
  %373 = vmatpush1.msra.mxu0 0.0
  %374 = vmatprep.subr.mxu0 0.0
  %375 = vmatpush1.msra.mxu0 0.0
  %376 = vmatprep.subr.mxu0 0.0
  %377 = vmatpush1.msra.mxu0 0.0
  %378 = vmatprep.subr.mxu0 0.0
  %379 = vmatpush1.msra.mxu0 0.0
  %380 = vmatprep.subr.mxu0 0.0
  %381 = vmatpush1.msra.mxu0 0.0
  %382 = vmatprep.subr.mxu0 0.0
  %383 = vmatpush1.msra.mxu0 0.0
  %384 = vmatprep.subr.mxu0 0.0
  %385 = vmatpush1.msra.mxu0 0.0
  %386 = vmatprep.subr.mxu0 0.0
  %387 = vmatpush1.msra.mxu0 0.0
  %388 = vmatprep.subr.mxu0 0.0
  %389 = vmatpush1.msra.mxu0 0.0
  %390 = vmatprep.subr.mxu0 0.0
  %391 = vmatpush1.msra.mxu0 0.0
  %392 = vmatprep.subr.mxu0 0.0
  %393 = vmatpush1.msra.mxu0 0.0
  %394 = vmatprep.subr.mxu0 0.0
  %395 = vmatpush1.msra.mxu0 0.0
  %396 = vmatprep.subr.mxu0 0.0
  %397 = vmatpush1.msra.mxu0 0.0
  %398 = vmatprep.subr.mxu0 0.0
  %399 = vmatpush1.msra.mxu0 0.0
  %400 = vmatprep.subr.mxu0 0.0
  %401 = vmatpush1.msra.mxu0 0.0
  %402 = vmatprep.subr.mxu0 0.0
  %403 = vmatpush1.msra.mxu0 0.0
  %404 = vmatprep.subr.mxu0 0.0
  %405 = vmatpush1.msra.mxu0 0.0
  %406 = vmatprep.subr.mxu0 0.0
  %407 = vmatpush1.msra.mxu0 0.0
  %408 = vmatprep.subr.mxu0 0.0
  %409 = vmatpush1.msra.mxu0 0.0
  %410 = vmatprep.mubr.f32.mxu0 0.0
  %411 = vmatmul.mubr.f32.gmra.mrb[0].mxu0 %v344
  %v412 = vpop.f32.mrb[0].mxu0
  %v413 = vadd.f32 0.0, %v412
  %v414 = vpop.f32.mrb[0].mxu0
  %415 = vdwg.mxu0
  %v416 = vadd.f32 %v27, %v413
  %v417 = vxor.u32 %v416, 2147483648
  %v418 = vmul.f32 %v417, 1.442695
  %v419 = vpow.pop %v418
  %v420 = vadd.f32 %v419, 1.0
  %v421 = vrcp.pop %v420
  %v422 = vmul.f32 1.0, %v421
  %v423 = vtanh.pop %v416
  %v424 = vmul.f32 %v422, %v334
  %426 = vrot.lane.b32.xlu0 %v423, 64
  %v427 = vpop.permute.xlu0 %426
  %v429 = vmul.f32 %v422, %v427
  %431 = vrot.lane.b32.xlu0 %v429, 32
  %v432 = vpop.permute.xlu0 %431
  %v434 = vadd.f32 %v424, %v432
  %v435 = vtanh.pop %v434
  %437 = vrot.lane.b32.xlu0 %v435, 64
  %v438 = vpop.permute.xlu0 %437
  %v440 = vmul.f32 %v422, %v438
  %442 = vrot.lane.b32.xlu0 %v440, 32
  %v443 = vpop.permute.xlu0 %442
  %v444 = vsel %vm38, %v443, 0
  %446 = vmatprep.subr.mxu0 0.0
  %447 = vmatpush1.msra.mxu0 %v32
  %448 = vmatprep.subr.mxu0 0.0
  %449 = vmatpush1.msra.mxu0 %v33
  %450 = vmatprep.subr.mxu0 0.0
  %451 = vmatpush1.msra.mxu0 %v34
  %452 = vmatprep.subr.mxu0 0.0
  %453 = vmatpush1.msra.mxu0 %v35
  %454 = vmatprep.subr.mxu0 0.0
  %455 = vmatpush1.msra.mxu0 0.0
  %456 = vmatprep.subr.mxu0 0.0
  %457 = vmatpush1.msra.mxu0 0.0
  %458 = vmatprep.subr.mxu0 0.0
  %459 = vmatpush1.msra.mxu0 0.0
  %460 = vmatprep.subr.mxu0 0.0
  %461 = vmatpush1.msra.mxu0 0.0
  %462 = vmatprep.subr.mxu0 0.0
  %463 = vmatpush1.msra.mxu0 0.0
  %464 = vmatprep.subr.mxu0 0.0
  %465 = vmatpush1.msra.mxu0 0.0
  %466 = vmatprep.subr.mxu0 0.0
  %467 = vmatpush1.msra.mxu0 0.0
  %468 = vmatprep.subr.mxu0 0.0
  %469 = vmatpush1.msra.mxu0 0.0
  %470 = vmatprep.subr.mxu0 0.0
  %471 = vmatpush1.msra.mxu0 0.0
  %472 = vmatprep.subr.mxu0 0.0
  %473 = vmatpush1.msra.mxu0 0.0
  %474 = vmatprep.subr.mxu0 0.0
  %475 = vmatpush1.msra.mxu0 0.0
  %476 = vmatprep.subr.mxu0 0.0
  %477 = vmatpush1.msra.mxu0 0.0
  %478 = vmatprep.subr.mxu0 0.0
  %479 = vmatpush1.msra.mxu0 0.0
  %480 = vmatprep.subr.mxu0 0.0
  %481 = vmatpush1.msra.mxu0 0.0
  %482 = vmatprep.subr.mxu0 0.0
  %483 = vmatpush1.msra.mxu0 0.0
  %484 = vmatprep.subr.mxu0 0.0
  %485 = vmatpush1.msra.mxu0 0.0
  %486 = vmatprep.subr.mxu0 0.0
  %487 = vmatpush1.msra.mxu0 0.0
  %488 = vmatprep.subr.mxu0 0.0
  %489 = vmatpush1.msra.mxu0 0.0
  %490 = vmatprep.subr.mxu0 0.0
  %491 = vmatpush1.msra.mxu0 0.0
  %492 = vmatprep.subr.mxu0 0.0
  %493 = vmatpush1.msra.mxu0 0.0
  %494 = vmatprep.subr.mxu0 0.0
  %495 = vmatpush1.msra.mxu0 0.0
  %496 = vmatprep.subr.mxu0 0.0
  %497 = vmatpush1.msra.mxu0 0.0
  %498 = vmatprep.subr.mxu0 0.0
  %499 = vmatpush1.msra.mxu0 0.0
  %500 = vmatprep.subr.mxu0 0.0
  %501 = vmatpush1.msra.mxu0 0.0
  %502 = vmatprep.subr.mxu0 0.0
  %503 = vmatpush1.msra.mxu0 0.0
  %504 = vmatprep.subr.mxu0 0.0
  %505 = vmatpush1.msra.mxu0 0.0
  %506 = vmatprep.subr.mxu0 0.0
  %507 = vmatpush1.msra.mxu0 0.0
  %508 = vmatprep.subr.mxu0 0.0
  %509 = vmatpush1.msra.mxu0 0.0
  %510 = vmatprep.mubr.f32.mxu0 0.0
  %511 = vmatmul.mubr.f32.gmra.mrb[0].mxu0 %v444
  %v512 = vpop.f32.mrb[0].mxu0
  %v513 = vadd.f32 0.0, %v512
  %v514 = vpop.f32.mrb[0].mxu0
  %515 = vdwg.mxu0
  %v516 = vadd.f32 %v28, %v513
  %v517 = vxor.u32 %v516, 2147483648
  %v518 = vmul.f32 %v517, 1.442695
  %v519 = vpow.pop %v518
  %v520 = vadd.f32 %v519, 1.0
  %v521 = vrcp.pop %v520
  %v522 = vmul.f32 1.0, %v521
  %v523 = vtanh.pop %v516
  %v524 = vmul.f32 %v522, %v434
  %526 = vrot.lane.b32.xlu0 %v523, 64
  %v527 = vpop.permute.xlu0 %526
  %v529 = vmul.f32 %v522, %v527
  %531 = vrot.lane.b32.xlu0 %v529, 32
  %v532 = vpop.permute.xlu0 %531
  %v534 = vadd.f32 %v524, %v532
  %v535 = vtanh.pop %v534
  %537 = vrot.lane.b32.xlu0 %v535, 64
  %v538 = vpop.permute.xlu0 %537
  %v540 = vmul.f32 %v522, %v538
  %542 = vrot.lane.b32.xlu0 %v540, 32
  %v543 = vpop.permute.xlu0 %542
  %v544 = vsel %vm38, %v543, 0
  %546 = vmatprep.subr.mxu0 0.0
  %547 = vmatpush1.msra.mxu0 %v32
  %548 = vmatprep.subr.mxu0 0.0
  %549 = vmatpush1.msra.mxu0 %v33
  %550 = vmatprep.subr.mxu0 0.0
  %551 = vmatpush1.msra.mxu0 %v34
  %552 = vmatprep.subr.mxu0 0.0
  %553 = vmatpush1.msra.mxu0 %v35
  %554 = vmatprep.subr.mxu0 0.0
  %555 = vmatpush1.msra.mxu0 0.0
  %556 = vmatprep.subr.mxu0 0.0
  %557 = vmatpush1.msra.mxu0 0.0
  %558 = vmatprep.subr.mxu0 0.0
  %559 = vmatpush1.msra.mxu0 0.0
  %560 = vmatprep.subr.mxu0 0.0
  %561 = vmatpush1.msra.mxu0 0.0
  %562 = vmatprep.subr.mxu0 0.0
  %563 = vmatpush1.msra.mxu0 0.0
  %564 = vmatprep.subr.mxu0 0.0
  %565 = vmatpush1.msra.mxu0 0.0
  %566 = vmatprep.subr.mxu0 0.0
  %567 = vmatpush1.msra.mxu0 0.0
  %568 = vmatprep.subr.mxu0 0.0
  %569 = vmatpush1.msra.mxu0 0.0
  %570 = vmatprep.subr.mxu0 0.0
  %571 = vmatpush1.msra.mxu0 0.0
  %572 = vmatprep.subr.mxu0 0.0
  %573 = vmatpush1.msra.mxu0 0.0
  %574 = vmatprep.subr.mxu0 0.0
  %575 = vmatpush1.msra.mxu0 0.0
  %576 = vmatprep.subr.mxu0 0.0
  %577 = vmatpush1.msra.mxu0 0.0
  %578 = vmatprep.subr.mxu0 0.0
  %579 = vmatpush1.msra.mxu0 0.0
  %580 = vmatprep.subr.mxu0 0.0
  %581 = vmatpush1.msra.mxu0 0.0
  %582 = vmatprep.subr.mxu0 0.0
  %583 = vmatpush1.msra.mxu0 0.0
  %584 = vmatprep.subr.mxu0 0.0
  %585 = vmatpush1.msra.mxu0 0.0
  %586 = vmatprep.subr.mxu0 0.0
  %587 = vmatpush1.msra.mxu0 0.0
  %588 = vmatprep.subr.mxu0 0.0
  %589 = vmatpush1.msra.mxu0 0.0
  %590 = vmatprep.subr.mxu0 0.0
  %591 = vmatpush1.msra.mxu0 0.0
  %592 = vmatprep.subr.mxu0 0.0
  %593 = vmatpush1.msra.mxu0 0.0
  %594 = vmatprep.subr.mxu0 0.0
  %595 = vmatpush1.msra.mxu0 0.0
  %596 = vmatprep.subr.mxu0 0.0
  %597 = vmatpush1.msra.mxu0 0.0
  %598 = vmatprep.subr.mxu0 0.0
  %599 = vmatpush1.msra.mxu0 0.0
  %600 = vmatprep.subr.mxu0 0.0
  %601 = vmatpush1.msra.mxu0 0.0
  %602 = vmatprep.subr.mxu0 0.0
  %603 = vmatpush1.msra.mxu0 0.0
  %604 = vmatprep.subr.mxu0 0.0
  %605 = vmatpush1.msra.mxu0 0.0
  %606 = vmatprep.subr.mxu0 0.0
  %607 = vmatpush1.msra.mxu0 0.0
  %608 = vmatprep.subr.mxu0 0.0
  %609 = vmatpush1.msra.mxu0 0.0
  %610 = vmatprep.mubr.f32.mxu0 0.0
  %611 = vmatmul.mubr.f32.gmra.mrb[0].mxu0 %v544
  %v612 = vpop.f32.mrb[0].mxu0
  %v613 = vadd.f32 0.0, %v612
  %v614 = vpop.f32.mrb[0].mxu0
  %615 = vdwg.mxu0
  %v616 = vadd.f32 %v29, %v613
  %v617 = vxor.u32 %v616, 2147483648
  %v618 = vmul.f32 %v617, 1.442695
  %v619 = vpow.pop %v618
  %v620 = vadd.f32 %v619, 1.0
  %v621 = vrcp.pop %v620
  %v622 = vmul.f32 1.0, %v621
  %v623 = vtanh.pop %v616
  %v624 = vmul.f32 %v622, %v534
  %626 = vrot.lane.b32.xlu0 %v623, 64
  %v627 = vpop.permute.xlu0 %626
  %v629 = vmul.f32 %v622, %v627
  %631 = vrot.lane.b32.xlu0 %v629, 32
  %v632 = vpop.permute.xlu0 %631
  %v634 = vadd.f32 %v624, %v632
  %v635 = vtanh.pop %v634
  %637 = vrot.lane.b32.xlu0 %v635, 64
  %v638 = vpop.permute.xlu0 %637
  %v640 = vmul.f32 %v622, %v638
  %642 = vrot.lane.b32.xlu0 %v640, 32
  %v643 = vpop.permute.xlu0 %642
  %v644 = vsel %vm38, %v643, 0
  %646 = vmatprep.subr.mxu0 0.0
  %647 = vmatpush1.msra.mxu0 %v32
  %648 = vmatprep.subr.mxu0 0.0
  %649 = vmatpush1.msra.mxu0 %v33
  %650 = vmatprep.subr.mxu0 0.0
  %651 = vmatpush1.msra.mxu0 %v34
  %652 = vmatprep.subr.mxu0 0.0
  %653 = vmatpush1.msra.mxu0 %v35
  %654 = vmatprep.subr.mxu0 0.0
  %655 = vmatpush1.msra.mxu0 0.0
  %656 = vmatprep.subr.mxu0 0.0
  %657 = vmatpush1.msra.mxu0 0.0
  %658 = vmatprep.subr.mxu0 0.0
  %659 = vmatpush1.msra.mxu0 0.0
  %660 = vmatprep.subr.mxu0 0.0
  %661 = vmatpush1.msra.mxu0 0.0
  %662 = vmatprep.subr.mxu0 0.0
  %663 = vmatpush1.msra.mxu0 0.0
  %664 = vmatprep.subr.mxu0 0.0
  %665 = vmatpush1.msra.mxu0 0.0
  %666 = vmatprep.subr.mxu0 0.0
  %667 = vmatpush1.msra.mxu0 0.0
  %668 = vmatprep.subr.mxu0 0.0
  %669 = vmatpush1.msra.mxu0 0.0
  %670 = vmatprep.subr.mxu0 0.0
  %671 = vmatpush1.msra.mxu0 0.0
  %672 = vmatprep.subr.mxu0 0.0
  %673 = vmatpush1.msra.mxu0 0.0
  %674 = vmatprep.subr.mxu0 0.0
  %675 = vmatpush1.msra.mxu0 0.0
  %676 = vmatprep.subr.mxu0 0.0
  %677 = vmatpush1.msra.mxu0 0.0
  %678 = vmatprep.subr.mxu0 0.0
  %679 = vmatpush1.msra.mxu0 0.0
  %680 = vmatprep.subr.mxu0 0.0
  %681 = vmatpush1.msra.mxu0 0.0
  %682 = vmatprep.subr.mxu0 0.0
  %683 = vmatpush1.msra.mxu0 0.0
  %684 = vmatprep.subr.mxu0 0.0
  %685 = vmatpush1.msra.mxu0 0.0
  %686 = vmatprep.subr.mxu0 0.0
  %687 = vmatpush1.msra.mxu0 0.0
  %688 = vmatprep.subr.mxu0 0.0
  %689 = vmatpush1.msra.mxu0 0.0
  %690 = vmatprep.subr.mxu0 0.0
  %691 = vmatpush1.msra.mxu0 0.0
  %692 = vmatprep.subr.mxu0 0.0
  %693 = vmatpush1.msra.mxu0 0.0
  %694 = vmatprep.subr.mxu0 0.0
  %695 = vmatpush1.msra.mxu0 0.0
  %696 = vmatprep.subr.mxu0 0.0
  %697 = vmatpush1.msra.mxu0 0.0
  %698 = vmatprep.subr.mxu0 0.0
  %699 = vmatpush1.msra.mxu0 0.0
  %700 = vmatprep.subr.mxu0 0.0
  %701 = vmatpush1.msra.mxu0 0.0
  %702 = vmatprep.subr.mxu0 0.0
  %703 = vmatpush1.msra.mxu0 0.0
  %704 = vmatprep.subr.mxu0 0.0
  %705 = vmatpush1.msra.mxu0 0.0
  %706 = vmatprep.subr.mxu0 0.0
  %707 = vmatpush1.msra.mxu0 0.0
  %708 = vmatprep.subr.mxu0 0.0
  %709 = vmatpush1.msra.mxu0 0.0
  %710 = vmatprep.mubr.f32.mxu0 0.0
  %711 = vmatmul.mubr.f32.gmra.mrb[0].mxu0 %v644
  %v712 = vpop.f32.mrb[0].mxu0
  %v713 = vadd.f32 0.0, %v712
  %v714 = vpop.f32.mrb[0].mxu0
  %715 = vdwg.mxu0
  %v716 = vadd.f32 %v30, %v713
  %v717 = vxor.u32 %v716, 2147483648
  %v718 = vmul.f32 %v717, 1.442695
  %v719 = vpow.pop %v718
  %v720 = vadd.f32 %v719, 1.0
  %v721 = vrcp.pop %v720
  %v722 = vmul.f32 1.0, %v721
  %v723 = vtanh.pop %v716
  %v724 = vmul.f32 %v722, %v634
  %726 = vrot.lane.b32.xlu0 %v723, 64
  %v727 = vpop.permute.xlu0 %726
  %v729 = vmul.f32 %v722, %v727
  %731 = vrot.lane.b32.xlu0 %v729, 32
  %v732 = vpop.permute.xlu0 %731
  %v734 = vadd.f32 %v724, %v732
  %v735 = vtanh.pop %v734
  %737 = vrot.lane.b32.xlu0 %v735, 64
  %v738 = vpop.permute.xlu0 %737
  %v740 = vmul.f32 %v722, %v738
  %742 = vrot.lane.b32.xlu0 %v740, 32
  %v743 = vpop.permute.xlu0 %742
  %v744 = vsel %vm38, %v743, 0
  %746 = vmatprep.subr.mxu0 0.0
  %747 = vmatpush1.msra.mxu0 %v32
  %748 = vmatprep.subr.mxu0 0.0
  %749 = vmatpush1.msra.mxu0 %v33
  %750 = vmatprep.subr.mxu0 0.0
  %751 = vmatpush1.msra.mxu0 %v34
  %752 = vmatprep.subr.mxu0 0.0
  %753 = vmatpush1.msra.mxu0 %v35
  %754 = vmatprep.subr.mxu0 0.0
  %755 = vmatpush1.msra.mxu0 0.0
  %756 = vmatprep.subr.mxu0 0.0
  %757 = vmatpush1.msra.mxu0 0.0
  %758 = vmatprep.subr.mxu0 0.0
  %759 = vmatpush1.msra.mxu0 0.0
  %760 = vmatprep.subr.mxu0 0.0
  %761 = vmatpush1.msra.mxu0 0.0
  %762 = vmatprep.subr.mxu0 0.0
  %763 = vmatpush1.msra.mxu0 0.0
  %764 = vmatprep.subr.mxu0 0.0
  %765 = vmatpush1.msra.mxu0 0.0
  %766 = vmatprep.subr.mxu0 0.0
  %767 = vmatpush1.msra.mxu0 0.0
  %768 = vmatprep.subr.mxu0 0.0
  %769 = vmatpush1.msra.mxu0 0.0
  %770 = vmatprep.subr.mxu0 0.0
  %771 = vmatpush1.msra.mxu0 0.0
  %772 = vmatprep.subr.mxu0 0.0
  %773 = vmatpush1.msra.mxu0 0.0
  %774 = vmatprep.subr.mxu0 0.0
  %775 = vmatpush1.msra.mxu0 0.0
  %776 = vmatprep.subr.mxu0 0.0
  %777 = vmatpush1.msra.mxu0 0.0
  %778 = vmatprep.subr.mxu0 0.0
  %779 = vmatpush1.msra.mxu0 0.0
  %780 = vmatprep.subr.mxu0 0.0
  %781 = vmatpush1.msra.mxu0 0.0
  %782 = vmatprep.subr.mxu0 0.0
  %783 = vmatpush1.msra.mxu0 0.0
  %784 = vmatprep.subr.mxu0 0.0
  %785 = vmatpush1.msra.mxu0 0.0
  %786 = vmatprep.subr.mxu0 0.0
  %787 = vmatpush1.msra.mxu0 0.0
  %788 = vmatprep.subr.mxu0 0.0
  %789 = vmatpush1.msra.mxu0 0.0
  %790 = vmatprep.subr.mxu0 0.0
  %791 = vmatpush1.msra.mxu0 0.0
  %792 = vmatprep.subr.mxu0 0.0
  %793 = vmatpush1.msra.mxu0 0.0
  %794 = vmatprep.subr.mxu0 0.0
  %795 = vmatpush1.msra.mxu0 0.0
  %796 = vmatprep.subr.mxu0 0.0
  %797 = vmatpush1.msra.mxu0 0.0
  %798 = vmatprep.subr.mxu0 0.0
  %799 = vmatpush1.msra.mxu0 0.0
  %800 = vmatprep.subr.mxu0 0.0
  %801 = vmatpush1.msra.mxu0 0.0
  %802 = vmatprep.subr.mxu0 0.0
  %803 = vmatpush1.msra.mxu0 0.0
  %804 = vmatprep.subr.mxu0 0.0
  %805 = vmatpush1.msra.mxu0 0.0
  %806 = vmatprep.subr.mxu0 0.0
  %807 = vmatpush1.msra.mxu0 0.0
  %808 = vmatprep.subr.mxu0 0.0
  %809 = vmatpush1.msra.mxu0 0.0
  %810 = vmatprep.mubr.f32.mxu0 0.0
  %811 = vmatmul.mubr.f32.gmra.mrb[0].mxu0 %v744
  %v812 = vpop.f32.mrb[0].mxu0
  %v813 = vadd.f32 0.0, %v812
  %v814 = vpop.f32.mrb[0].mxu0
  %815 = vdwg.mxu0
  %v816 = vadd.f32 %v31, %v813
  %v817 = vxor.u32 %v816, 2147483648
  %v818 = vmul.f32 %v817, 1.442695
  %v819 = vpow.pop %v818
  %v820 = vadd.f32 %v819, 1.0
  %v821 = vrcp.pop %v820
  %v822 = vmul.f32 1.0, %v821
  %v823 = vtanh.pop %v816
  %v824 = vmul.f32 %v822, %v734
  %826 = vrot.lane.b32.xlu0 %v823, 64
  %v827 = vpop.permute.xlu0 %826
  %v829 = vmul.f32 %v822, %v827
  %831 = vrot.lane.b32.xlu0 %v829, 32
  %v832 = vpop.permute.xlu0 %831
  %v834 = vadd.f32 %v824, %v832
  %v835 = vtanh.pop %v834
  %837 = vrot.lane.b32.xlu0 %v835, 64
  %v838 = vpop.permute.xlu0 %837
  %v840 = vmul.f32 %v822, %v838
  %842 = vrot.lane.b32.xlu0 %v840, 32
  %v843 = vpop.permute.xlu0 %842
  %845 = vst.msk [vmem:[#allocation2] sm:$0xff] %vm38, %v843
  %847 = vrot.lane.b32.xlu0 %v834, 96
  %v848 = vpop.permute.xlu0 %847
  %850 = vst.msk [vmem:[#allocation3] sm:$0xff] %vm38, %v848
  %v851 = vld [vmem:[%s2] sm:$0xff]
  %v852 = vld [vmem:[%s2 + $0x8] sm:$0xff]
  %v853 = vld [vmem:[%s2 + $0x10] sm:$0xff]
  %v854 = vld [vmem:[%s2 + $0x18] sm:$0xff]
  %v855 = vld [vmem:[%s3] sm:$0x1]
  %v857 = vlaneseq
  %v858 = vshrl.u32 %v857, 7
  %v859 = vsub.s32 0, %v858
  %v860 = vrot.slane %v855, %v859
  %v862 = vsel %vm38, %v843, 0
  %864 = vmatprep.subr.mxu0 0.0
  %865 = vmatpush1.msra.mxu0 %v851
  %866 = vmatprep.subr.mxu0 0.0
  %867 = vmatpush1.msra.mxu0 %v852
  %868 = vmatprep.subr.mxu0 0.0
  %869 = vmatpush1.msra.mxu0 %v853
  %870 = vmatprep.subr.mxu0 0.0
  %871 = vmatpush1.msra.mxu0 %v854
  %872 = vmatprep.subr.mxu0 0.0
  %873 = vmatpush1.msra.mxu0 0.0
  %874 = vmatprep.subr.mxu0 0.0
  %875 = vmatpush1.msra.mxu0 0.0
  %876 = vmatprep.subr.mxu0 0.0
  %877 = vmatpush1.msra.mxu0 0.0
  %878 = vmatprep.subr.mxu0 0.0
  %879 = vmatpush1.msra.mxu0 0.0
  %880 = vmatprep.subr.mxu0 0.0
  %881 = vmatpush1.msra.mxu0 0.0
  %882 = vmatprep.subr.mxu0 0.0
  %883 = vmatpush1.msra.mxu0 0.0
  %884 = vmatprep.subr.mxu0 0.0
  %885 = vmatpush1.msra.mxu0 0.0
  %886 = vmatprep.subr.mxu0 0.0
  %887 = vmatpush1.msra.mxu0 0.0
  %888 = vmatprep.subr.mxu0 0.0
  %889 = vmatpush1.msra.mxu0 0.0
  %890 = vmatprep.subr.mxu0 0.0
  %891 = vmatpush1.msra.mxu0 0.0
  %892 = vmatprep.subr.mxu0 0.0
  %893 = vmatpush1.msra.mxu0 0.0
  %894 = vmatprep.subr.mxu0 0.0
  %895 = vmatpush1.msra.mxu0 0.0
  %896 = vmatprep.subr.mxu0 0.0
  %897 = vmatpush1.msra.mxu0 0.0
  %898 = vmatprep.subr.mxu0 0.0
  %899 = vmatpush1.msra.mxu0 0.0
  %900 = vmatprep.subr.mxu0 0.0
  %901 = vmatpush1.msra.mxu0 0.0
  %902 = vmatprep.subr.mxu0 0.0
  %903 = vmatpush1.msra.mxu0 0.0
  %904 = vmatprep.subr.mxu0 0.0
  %905 = vmatpush1.msra.mxu0 0.0
  %906 = vmatprep.subr.mxu0 0.0
  %907 = vmatpush1.msra.mxu0 0.0
  %908 = vmatprep.subr.mxu0 0.0
  %909 = vmatpush1.msra.mxu0 0.0
  %910 = vmatprep.subr.mxu0 0.0
  %911 = vmatpush1.msra.mxu0 0.0
  %912 = vmatprep.subr.mxu0 0.0
  %913 = vmatpush1.msra.mxu0 0.0
  %914 = vmatprep.subr.mxu0 0.0
  %915 = vmatpush1.msra.mxu0 0.0
  %916 = vmatprep.subr.mxu0 0.0
  %917 = vmatpush1.msra.mxu0 0.0
  %918 = vmatprep.subr.mxu0 0.0
  %919 = vmatpush1.msra.mxu0 0.0
  %920 = vmatprep.subr.mxu0 0.0
  %921 = vmatpush1.msra.mxu0 0.0
  %922 = vmatprep.subr.mxu0 0.0
  %923 = vmatpush1.msra.mxu0 0.0
  %924 = vmatprep.subr.mxu0 0.0
  %925 = vmatpush1.msra.mxu0 0.0
  %926 = vmatprep.subr.mxu0 0.0
  %927 = vmatpush1.msra.mxu0 0.0
  %928 = vmatprep.mubr.f32.mxu0 0.0
  %929 = vmatmul.mubr.f32.gmra.mrb[0].mxu0 %v144
  %v930 = vpop.f32.mrb[0].mxu0
  %v931 = vadd.f32 %v860, %v930
  %v932 = vpop.f32.mrb[0].mxu0
  %933 = vmatprep.mubr.f32.mxu0 0.0
  %934 = vmatmul.mubr.f32.gmra.mrb[0].mxu0 %v244
  %v935 = vpop.f32.mrb[0].mxu0
  %v936 = vadd.f32 %v860, %v935
  %v937 = vpop.f32.mrb[0].mxu0
  %938 = vmatprep.mubr.f32.mxu0 0.0
  %939 = vmatmul.mubr.f32.gmra.mrb[0].mxu0 %v344
  %v940 = vpop.f32.mrb[0].mxu0
  %v941 = vadd.f32 %v860, %v940
  %v942 = vpop.f32.mrb[0].mxu0
  %943 = vmatprep.mubr.f32.mxu0 0.0
  %944 = vmatmul.mubr.f32.gmra.mrb[0].mxu0 %v444
  %v945 = vpop.f32.mrb[0].mxu0
  %v946 = vadd.f32 %v860, %v945
  %v947 = vpop.f32.mrb[0].mxu0
  %948 = vmatprep.mubr.f32.mxu0 0.0
  %949 = vmatmul.mubr.f32.gmra.mrb[0].mxu0 %v544
  %v950 = vpop.f32.mrb[0].mxu0
  %v951 = vadd.f32 %v860, %v950
  %v952 = vpop.f32.mrb[0].mxu0
  %953 = vmatprep.mubr.f32.mxu0 0.0
  %954 = vmatmul.mubr.f32.gmra.mrb[0].mxu0 %v644
  %v955 = vpop.f32.mrb[0].mxu0
  %v956 = vadd.f32 %v860, %v955
  %v957 = vpop.f32.mrb[0].mxu0
  %958 = vmatprep.mubr.f32.mxu0 0.0
  %959 = vmatmul.mubr.f32.gmra.mrb[0].mxu0 %v744
  %v960 = vpop.f32.mrb[0].mxu0
  %v961 = vadd.f32 %v860, %v960
  %v962 = vpop.f32.mrb[0].mxu0
  %963 = vmatprep.mubr.f32.mxu0 0.0
  %964 = vmatmul.mubr.f32.gmra.mrb[0].mxu0 %v862
  %v965 = vpop.f32.mrb[0].mxu0
  %v966 = vadd.f32 %v860, %v965
  %v967 = vpop.f32.mrb[0].mxu0
  %968 = vdwg.mxu0
  %969 = vst [vmem:[%s4] sm:$0xff] %v931
  %970 = vst [vmem:[%s4 + $0x8] sm:$0xff] %v936
  %971 = vst [vmem:[%s4 + $0x10] sm:$0xff] %v941
  %972 = vst [vmem:[%s4 + $0x18] sm:$0xff] %v946
  %973 = vst [vmem:[%s4 + $0x20] sm:$0xff] %v951
  %974 = vst [vmem:[%s4 + $0x28] sm:$0xff] %v956
  %975 = vst [vmem:[%s4 + $0x30] sm:$0xff] %v961
  %976 = vst [vmem:[%s4 + $0x38] sm:$0xff] %v966
  // Predicated region
  $region22: #{rnn_decoder_forward.4} parent=0 // pred_check
    _
  $region23: #{rnn_decoder_forward.4} parent=0 // pred_check_branch
    %978 = sbr.rel (0) target = $region25
  $region24: #{rnn_decoder_forward.4} parent=0 // pred_region
    _
  $region25: #{rnn_decoder_forward.4} parent=0 // pred_fallthru
    _
  // Predicated region
  $region26: #{rnn_decoder_forward.4} parent=0 // pred_check
    _
  $region27: #{rnn_decoder_forward.4} parent=0 // pred_check_branch
    %980 = sbr.rel (0) target = $region29
  $region28: #{rnn_decoder_forward.4} parent=0 // pred_region
    _
  $region29: #{rnn_decoder_forward.4} parent=0 // pred_fallthru
    _

// kernel: rnn_decoder_forward.5
$region0: #{rnn_decoder_forward.5}
  #allocation0 [shape = 'u32[]', space=smem, size = 0x4, offset = 0x4, fixed_abs, tag = 'smem constant byte address 0x4 - core index']
  #allocation1 [shape = 'u32[144,128]{1,0:T(1,128)}', space=vmem, size = 0x12000, scoped, tag = 'internal scratch']
  #allocation2 [shape = 'f32[8,32]{1,0:T(8,128)}', space=vmem, size = 0x1000, scoped, tag = 'scratch operand']
  #allocation3 [shape = 'f32[8,32]{1,0:T(8,128)}', space=vmem, size = 0x1000, scoped, tag = 'scratch operand']
  %s0 = inlined_call_operand.vmem [shape: f32[1,64,128], index: 0, kind: input, shape index: {}]
  %s1 = inlined_call_operand.vmem [shape: f32[32,128], index: 1, kind: input, shape index: {}]
  %s2 = inlined_call_operand.vmem [shape: f32[32,6], index: 2, kind: input, shape index: {}]
  %s3 = inlined_call_operand.vmem [shape: f32[1,6], index: 3, kind: input, shape index: {}]
  %s4 = inlined_call_operand.vmem [shape: f32[1,64,6], index: 4, kind: output, shape index: {}]
  %s5 = sld [smem:[#allocation0]]
  $region30: #{rnn_decoder_forward.5} parent=0
    _
  %s7 = ssub.s32 1, %s5
  %s8 = scalar_select 0, %s7, %s5
  // Predicated region
  $region2: #{rnn_decoder_forward.5} parent=0 // pred_check
    _
  $region3: #{rnn_decoder_forward.5} parent=0 // pred_check_branch
    %10 = sbr.rel (0) target = $region5
  $region4: #{rnn_decoder_forward.5} parent=0 // pred_region
    _
  $region5: #{rnn_decoder_forward.5} parent=0 // pred_fallthru
    _
  // Predicated region
  $region6: #{rnn_decoder_forward.5} parent=0 // pred_check
    _
  $region7: #{rnn_decoder_forward.5} parent=0 // pred_check_branch
    %12 = sbr.rel (0) target = $region9
  $region8: #{rnn_decoder_forward.5} parent=0 // pred_region
    _
  $region9: #{rnn_decoder_forward.5} parent=0 // pred_fallthru
    _
  // Predicated region
  $region10: #{rnn_decoder_forward.5} parent=0 // pred_check
    _
  $region11: #{rnn_decoder_forward.5} parent=0 // pred_check_branch
    %14 = sbr.rel (0) target = $region13
  $region12: #{rnn_decoder_forward.5} parent=0 // pred_region
    _
  $region13: #{rnn_decoder_forward.5} parent=0 // pred_fallthru
    _
  // Predicated region
  $region14: #{rnn_decoder_forward.5} parent=0 // pred_check
    _
  $region15: #{rnn_decoder_forward.5} parent=0 // pred_check_branch
    %16 = sbr.rel (0) target = $region17
  $region16: #{rnn_decoder_forward.5} parent=0 // pred_region
    _
  $region17: #{rnn_decoder_forward.5} parent=0 // pred_fallthru
    _
  %p17 = scmp.eq.s32.totalorder 0, 0
  // Predicated region
  $region18: #{rnn_decoder_forward.5} parent=0 // pred_check
    %p18 = pneg %p17
  $region19: #{rnn_decoder_forward.5} parent=0 // pred_check_branch
    %20 = sbr.rel (%p18) target = $region21
  $region20: #{rnn_decoder_forward.5} parent=0 // pred_region
    %vm21 = vcmask 261120
    %22 = vst.msk [vmem:[#allocation2] sm:$0xff] %vm21, 0.0
    %23 = vst.msk [vmem:[#allocation3] sm:$0xff] %vm21, 0.0
  $region21: #{rnn_decoder_forward.5} parent=0 // pred_fallthru
    _
  %v24 = vld [vmem:[%s0] sm:$0xff]
  %v25 = vld [vmem:[%s0 + $0x8] sm:$0xff]
  %v26 = vld [vmem:[%s0 + $0x10] sm:$0xff]
  %v27 = vld [vmem:[%s0 + $0x18] sm:$0xff]
  %v28 = vld [vmem:[%s0 + $0x20] sm:$0xff]
  %v29 = vld [vmem:[%s0 + $0x28] sm:$0xff]
  %v30 = vld [vmem:[%s0 + $0x30] sm:$0xff]
  %v31 = vld [vmem:[%s0 + $0x38] sm:$0xff]
  %v32 = vld [vmem:[%s1] sm:$0xff]
  %v33 = vld [vmem:[%s1 + $0x8] sm:$0xff]
  %v34 = vld [vmem:[%s1 + $0x10] sm:$0xff]
  %v35 = vld [vmem:[%s1 + $0x18] sm:$0xff]
  %v36 = vld [vmem:[#allocation2] sm:$0xff]
  %v37 = vld [vmem:[#allocation3] sm:$0xff]
  %vm38 = vcmask 261120
  %v40 = vsel %vm38, %v36, 0
  %42 = vmatprep.subr.mxu0 0.0
  %43 = vmatpush1.msra.mxu0 %v32
  %44 = vmatprep.subr.mxu0 0.0
  %45 = vmatpush1.msra.mxu0 %v33
  %46 = vmatprep.subr.mxu0 0.0
  %47 = vmatpush1.msra.mxu0 %v34
  %48 = vmatprep.subr.mxu0 0.0
  %49 = vmatpush1.msra.mxu0 %v35
  %50 = vmatprep.subr.mxu0 0.0
  %51 = vmatpush1.msra.mxu0 0.0
  %52 = vmatprep.subr.mxu0 0.0
  %53 = vmatpush1.msra.mxu0 0.0
  %54 = vmatprep.subr.mxu0 0.0
  %55 = vmatpush1.msra.mxu0 0.0
  %56 = vmatprep.subr.mxu0 0.0
  %57 = vmatpush1.msra.mxu0 0.0
  %58 = vmatprep.subr.mxu0 0.0
  %59 = vmatpush1.msra.mxu0 0.0
  %60 = vmatprep.subr.mxu0 0.0
  %61 = vmatpush1.msra.mxu0 0.0
  %62 = vmatprep.subr.mxu0 0.0
  %63 = vmatpush1.msra.mxu0 0.0
  %64 = vmatprep.subr.mxu0 0.0
  %65 = vmatpush1.msra.mxu0 0.0
  %66 = vmatprep.subr.mxu0 0.0
  %67 = vmatpush1.msra.mxu0 0.0
  %68 = vmatprep.subr.mxu0 0.0
  %69 = vmatpush1.msra.mxu0 0.0
  %70 = vmatprep.subr.mxu0 0.0
  %71 = vmatpush1.msra.mxu0 0.0
  %72 = vmatprep.subr.mxu0 0.0
  %73 = vmatpush1.msra.mxu0 0.0
  %74 = vmatprep.subr.mxu0 0.0
  %75 = vmatpush1.msra.mxu0 0.0
  %76 = vmatprep.subr.mxu0 0.0
  %77 = vmatpush1.msra.mxu0 0.0
  %78 = vmatprep.subr.mxu0 0.0
  %79 = vmatpush1.msra.mxu0 0.0
  %80 = vmatprep.subr.mxu0 0.0
  %81 = vmatpush1.msra.mxu0 0.0
  %82 = vmatprep.subr.mxu0 0.0
  %83 = vmatpush1.msra.mxu0 0.0
  %84 = vmatprep.subr.mxu0 0.0
  %85 = vmatpush1.msra.mxu0 0.0
  %86 = vmatprep.subr.mxu0 0.0
  %87 = vmatpush1.msra.mxu0 0.0
  %88 = vmatprep.subr.mxu0 0.0
  %89 = vmatpush1.msra.mxu0 0.0
  %90 = vmatprep.subr.mxu0 0.0
  %91 = vmatpush1.msra.mxu0 0.0
  %92 = vmatprep.subr.mxu0 0.0
  %93 = vmatpush1.msra.mxu0 0.0
  %94 = vmatprep.subr.mxu0 0.0
  %95 = vmatpush1.msra.mxu0 0.0
  %96 = vmatprep.subr.mxu0 0.0
  %97 = vmatpush1.msra.mxu0 0.0
  %98 = vmatprep.subr.mxu0 0.0
  %99 = vmatpush1.msra.mxu0 0.0
  %100 = vmatprep.subr.mxu0 0.0
  %101 = vmatpush1.msra.mxu0 0.0
  %102 = vmatprep.subr.mxu0 0.0
  %103 = vmatpush1.msra.mxu0 0.0
  %104 = vmatprep.subr.mxu0 0.0
  %105 = vmatpush1.msra.mxu0 0.0
  %106 = vmatprep.mubr.f32.mxu0 0.0
  %107 = vmatmul.mubr.f32.gmra.mrb[0].mxu0 %v40
  %v108 = vpop.f32.mrb[0].mxu0
  %v109 = vadd.f32 0.0, %v108
  %v110 = vpop.f32.mrb[0].mxu0
  %111 = vdwg.mxu0
  %v112 = vadd.f32 %v24, %v109
  %v113 = vxor.u32 %v112, 2147483648
  %v114 = vmul.f32 %v113, 1.442695
  %v115 = vpow.pop %v114
  %v116 = vadd.f32 %v115, 1.0
  %v117 = vrcp.pop %v116
  %v118 = vmul.f32 1.0, %v117
  %v119 = vtanh.pop %v112
  %121 = vrot.lane.b32.xlu0 %v37, 32
  %v122 = vpop.permute.xlu0 %121
  %v124 = vmul.f32 %v118, %v122
  %126 = vrot.lane.b32.xlu0 %v119, 64
  %v127 = vpop.permute.xlu0 %126
  %v129 = vmul.f32 %v118, %v127
  %131 = vrot.lane.b32.xlu0 %v129, 32
  %v132 = vpop.permute.xlu0 %131
  %v134 = vadd.f32 %v124, %v132
  %v135 = vtanh.pop %v134
  %137 = vrot.lane.b32.xlu0 %v135, 64
  %v138 = vpop.permute.xlu0 %137
  %v140 = vmul.f32 %v118, %v138
  %142 = vrot.lane.b32.xlu0 %v140, 32
  %v143 = vpop.permute.xlu0 %142
  %v144 = vsel %vm38, %v143, 0
  %146 = vmatprep.subr.mxu0 0.0
  %147 = vmatpush1.msra.mxu0 %v32
  %148 = vmatprep.subr.mxu0 0.0
  %149 = vmatpush1.msra.mxu0 %v33
  %150 = vmatprep.subr.mxu0 0.0
  %151 = vmatpush1.msra.mxu0 %v34
  %152 = vmatprep.subr.mxu0 0.0
  %153 = vmatpush1.msra.mxu0 %v35
  %154 = vmatprep.subr.mxu0 0.0
  %155 = vmatpush1.msra.mxu0 0.0
  %156 = vmatprep.subr.mxu0 0.0
  %157 = vmatpush1.msra.mxu0 0.0
  %158 = vmatprep.subr.mxu0 0.0
  %159 = vmatpush1.msra.mxu0 0.0
  %160 = vmatprep.subr.mxu0 0.0
  %161 = vmatpush1.msra.mxu0 0.0
  %162 = vmatprep.subr.mxu0 0.0
  %163 = vmatpush1.msra.mxu0 0.0
  %164 = vmatprep.subr.mxu0 0.0
  %165 = vmatpush1.msra.mxu0 0.0
  %166 = vmatprep.subr.mxu0 0.0
  %167 = vmatpush1.msra.mxu0 0.0
  %168 = vmatprep.subr.mxu0 0.0
  %169 = vmatpush1.msra.mxu0 0.0
  %170 = vmatprep.subr.mxu0 0.0
  %171 = vmatpush1.msra.mxu0 0.0
  %172 = vmatprep.subr.mxu0 0.0
  %173 = vmatpush1.msra.mxu0 0.0
  %174 = vmatprep.subr.mxu0 0.0
  %175 = vmatpush1.msra.mxu0 0.0
  %176 = vmatprep.subr.mxu0 0.0
  %177 = vmatpush1.msra.mxu0 0.0
  %178 = vmatprep.subr.mxu0 0.0
  %179 = vmatpush1.msra.mxu0 0.0
  %180 = vmatprep.subr.mxu0 0.0
  %181 = vmatpush1.msra.mxu0 0.0
  %182 = vmatprep.subr.mxu0 0.0
  %183 = vmatpush1.msra.mxu0 0.0
  %184 = vmatprep.subr.mxu0 0.0
  %185 = vmatpush1.msra.mxu0 0.0
  %186 = vmatprep.subr.mxu0 0.0
  %187 = vmatpush1.msra.mxu0 0.0
  %188 = vmatprep.subr.mxu0 0.0
  %189 = vmatpush1.msra.mxu0 0.0
  %190 = vmatprep.subr.mxu0 0.0
  %191 = vmatpush1.msra.mxu0 0.0
  %192 = vmatprep.subr.mxu0 0.0
  %193 = vmatpush1.msra.mxu0 0.0
  %194 = vmatprep.subr.mxu0 0.0
  %195 = vmatpush1.msra.mxu0 0.0
  %196 = vmatprep.subr.mxu0 0.0
  %197 = vmatpush1.msra.mxu0 0.0
  %198 = vmatprep.subr.mxu0 0.0
  %199 = vmatpush1.msra.mxu0 0.0
  %200 = vmatprep.subr.mxu0 0.0
  %201 = vmatpush1.msra.mxu0 0.0
  %202 = vmatprep.subr.mxu0 0.0
  %203 = vmatpush1.msra.mxu0 0.0
  %204 = vmatprep.subr.mxu0 0.0
  %205 = vmatpush1.msra.mxu0 0.0
  %206 = vmatprep.subr.mxu0 0.0
  %207 = vmatpush1.msra.mxu0 0.0
  %208 = vmatprep.subr.mxu0 0.0
  %209 = vmatpush1.msra.mxu0 0.0
  %210 = vmatprep.mubr.f32.mxu0 0.0
  %211 = vmatmul.mubr.f32.gmra.mrb[0].mxu0 %v144
  %v212 = vpop.f32.mrb[0].mxu0
  %v213 = vadd.f32 0.0, %v212
  %v214 = vpop.f32.mrb[0].mxu0
  %215 = vdwg.mxu0
  %v216 = vadd.f32 %v25, %v213
  %v217 = vxor.u32 %v216, 2147483648
  %v218 = vmul.f32 %v217, 1.442695
  %v219 = vpow.pop %v218
  %v220 = vadd.f32 %v219, 1.0
  %v221 = vrcp.pop %v220
  %v222 = vmul.f32 1.0, %v221
  %v223 = vtanh.pop %v216
  %v224 = vmul.f32 %v222, %v134
  %226 = vrot.lane.b32.xlu0 %v223, 64
  %v227 = vpop.permute.xlu0 %226
  %v229 = vmul.f32 %v222, %v227
  %231 = vrot.lane.b32.xlu0 %v229, 32
  %v232 = vpop.permute.xlu0 %231
  %v234 = vadd.f32 %v224, %v232
  %v235 = vtanh.pop %v234
  %237 = vrot.lane.b32.xlu0 %v235, 64
  %v238 = vpop.permute.xlu0 %237
  %v240 = vmul.f32 %v222, %v238
  %242 = vrot.lane.b32.xlu0 %v240, 32
  %v243 = vpop.permute.xlu0 %242
  %v244 = vsel %vm38, %v243, 0
  %246 = vmatprep.subr.mxu0 0.0
  %247 = vmatpush1.msra.mxu0 %v32
  %248 = vmatprep.subr.mxu0 0.0
  %249 = vmatpush1.msra.mxu0 %v33
  %250 = vmatprep.subr.mxu0 0.0
  %251 = vmatpush1.msra.mxu0 %v34
  %252 = vmatprep.subr.mxu0 0.0
  %253 = vmatpush1.msra.mxu0 %v35
  %254 = vmatprep.subr.mxu0 0.0
  %255 = vmatpush1.msra.mxu0 0.0
  %256 = vmatprep.subr.mxu0 0.0
  %257 = vmatpush1.msra.mxu0 0.0
  %258 = vmatprep.subr.mxu0 0.0
  %259 = vmatpush1.msra.mxu0 0.0
  %260 = vmatprep.subr.mxu0 0.0
  %261 = vmatpush1.msra.mxu0 0.0
  %262 = vmatprep.subr.mxu0 0.0
  %263 = vmatpush1.msra.mxu0 0.0
  %264 = vmatprep.subr.mxu0 0.0
  %265 = vmatpush1.msra.mxu0 0.0
  %266 = vmatprep.subr.mxu0 0.0
  %267 = vmatpush1.msra.mxu0 0.0
  %268 = vmatprep.subr.mxu0 0.0
  %269 = vmatpush1.msra.mxu0 0.0
  %270 = vmatprep.subr.mxu0 0.0
  %271 = vmatpush1.msra.mxu0 0.0
  %272 = vmatprep.subr.mxu0 0.0
  %273 = vmatpush1.msra.mxu0 0.0
  %274 = vmatprep.subr.mxu0 0.0
  %275 = vmatpush1.msra.mxu0 0.0
  %276 = vmatprep.subr.mxu0 0.0
  %277 = vmatpush1.msra.mxu0 0.0
  %278 = vmatprep.subr.mxu0 0.0
  %279 = vmatpush1.msra.mxu0 0.0
  %280 = vmatprep.subr.mxu0 0.0
  %281 = vmatpush1.msra.mxu0 0.0
  %282 = vmatprep.subr.mxu0 0.0
  %283 = vmatpush1.msra.mxu0 0.0
  %284 = vmatprep.subr.mxu0 0.0
  %285 = vmatpush1.msra.mxu0 0.0
  %286 = vmatprep.subr.mxu0 0.0
  %287 = vmatpush1.msra.mxu0 0.0
  %288 = vmatprep.subr.mxu0 0.0
  %289 = vmatpush1.msra.mxu0 0.0
  %290 = vmatprep.subr.mxu0 0.0
  %291 = vmatpush1.msra.mxu0 0.0
  %292 = vmatprep.subr.mxu0 0.0
  %293 = vmatpush1.msra.mxu0 0.0
  %294 = vmatprep.subr.mxu0 0.0
  %295 = vmatpush1.msra.mxu0 0.0
  %296 = vmatprep.subr.mxu0 0.0
  %297 = vmatpush1.msra.mxu0 0.0
  %298 = vmatprep.subr.mxu0 0.0
  %299 = vmatpush1.msra.mxu0 0.0
  %300 = vmatprep.subr.mxu0 0.0
  %301 = vmatpush1.msra.mxu0 0.0
  %302 = vmatprep.subr.mxu0 0.0
  %303 = vmatpush1.msra.mxu0 0.0
  %304 = vmatprep.subr.mxu0 0.0
  %305 = vmatpush1.msra.mxu0 0.0
  %306 = vmatprep.subr.mxu0 0.0
  %307 = vmatpush1.msra.mxu0 0.0
  %308 = vmatprep.subr.mxu0 0.0
  %309 = vmatpush1.msra.mxu0 0.0
  %310 = vmatprep.mubr.f32.mxu0 0.0
  %311 = vmatmul.mubr.f32.gmra.mrb[0].mxu0 %v244
  %v312 = vpop.f32.mrb[0].mxu0
  %v313 = vadd.f32 0.0, %v312
  %v314 = vpop.f32.mrb[0].mxu0
  %315 = vdwg.mxu0
  %v316 = vadd.f32 %v26, %v313
  %v317 = vxor.u32 %v316, 2147483648
  %v318 = vmul.f32 %v317, 1.442695
  %v319 = vpow.pop %v318
  %v320 = vadd.f32 %v319, 1.0
  %v321 = vrcp.pop %v320
  %v322 = vmul.f32 1.0, %v321
  %v323 = vtanh.pop %v316
  %v324 = vmul.f32 %v322, %v234
  %326 = vrot.lane.b32.xlu0 %v323, 64
  %v327 = vpop.permute.xlu0 %326
  %v329 = vmul.f32 %v322, %v327
  %331 = vrot.lane.b32.xlu0 %v329, 32
  %v332 = vpop.permute.xlu0 %331
  %v334 = vadd.f32 %v324, %v332
  %v335 = vtanh.pop %v334
  %337 = vrot.lane.b32.xlu0 %v335, 64
  %v338 = vpop.permute.xlu0 %337
  %v340 = vmul.f32 %v322, %v338
  %342 = vrot.lane.b32.xlu0 %v340, 32
  %v343 = vpop.permute.xlu0 %342
  %v344 = vsel %vm38, %v343, 0
  %346 = vmatprep.subr.mxu0 0.0
  %347 = vmatpush1.msra.mxu0 %v32
  %348 = vmatprep.subr.mxu0 0.0
  %349 = vmatpush1.msra.mxu0 %v33
  %350 = vmatprep.subr.mxu0 0.0
  %351 = vmatpush1.msra.mxu0 %v34
  %352 = vmatprep.subr.mxu0 0.0
  %353 = vmatpush1.msra.mxu0 %v35
  %354 = vmatprep.subr.mxu0 0.0
  %355 = vmatpush1.msra.mxu0 0.0
  %356 = vmatprep.subr.mxu0 0.0
  %357 = vmatpush1.msra.mxu0 0.0
  %358 = vmatprep.subr.mxu0 0.0
  %359 = vmatpush1.msra.mxu0 0.0
  %360 = vmatprep.subr.mxu0 0.0
  %361 = vmatpush1.msra.mxu0 0.0
  %362 = vmatprep.subr.mxu0 0.0
  %363 = vmatpush1.msra.mxu0 0.0
  %364 = vmatprep.subr.mxu0 0.0
  %365 = vmatpush1.msra.mxu0 0.0
  %366 = vmatprep.subr.mxu0 0.0
  %367 = vmatpush1.msra.mxu0 0.0
  %368 = vmatprep.subr.mxu0 0.0
  %369 = vmatpush1.msra.mxu0 0.0
  %370 = vmatprep.subr.mxu0 0.0
  %371 = vmatpush1.msra.mxu0 0.0
  %372 = vmatprep.subr.mxu0 0.0
  %373 = vmatpush1.msra.mxu0 0.0
  %374 = vmatprep.subr.mxu0 0.0
  %375 = vmatpush1.msra.mxu0 0.0
  %376 = vmatprep.subr.mxu0 0.0
  %377 = vmatpush1.msra.mxu0 0.0
  %378 = vmatprep.subr.mxu0 0.0
  %379 = vmatpush1.msra.mxu0 0.0
  %380 = vmatprep.subr.mxu0 0.0
  %381 = vmatpush1.msra.mxu0 0.0
  %382 = vmatprep.subr.mxu0 0.0
  %383 = vmatpush1.msra.mxu0 0.0
  %384 = vmatprep.subr.mxu0 0.0
  %385 = vmatpush1.msra.mxu0 0.0
  %386 = vmatprep.subr.mxu0 0.0
  %387 = vmatpush1.msra.mxu0 0.0
  %388 = vmatprep.subr.mxu0 0.0
  %389 = vmatpush1.msra.mxu0 0.0
  %390 = vmatprep.subr.mxu0 0.0
  %391 = vmatpush1.msra.mxu0 0.0
  %392 = vmatprep.subr.mxu0 0.0
  %393 = vmatpush1.msra.mxu0 0.0
  %394 = vmatprep.subr.mxu0 0.0
  %395 = vmatpush1.msra.mxu0 0.0
  %396 = vmatprep.subr.mxu0 0.0
  %397 = vmatpush1.msra.mxu0 0.0
  %398 = vmatprep.subr.mxu0 0.0
  %399 = vmatpush1.msra.mxu0 0.0
  %400 = vmatprep.subr.mxu0 0.0
  %401 = vmatpush1.msra.mxu0 0.0
  %402 = vmatprep.subr.mxu0 0.0
  %403 = vmatpush1.msra.mxu0 0.0
  %404 = vmatprep.subr.mxu0 0.0
  %405 = vmatpush1.msra.mxu0 0.0
  %406 = vmatprep.subr.mxu0 0.0
  %407 = vmatpush1.msra.mxu0 0.0
  %408 = vmatprep.subr.mxu0 0.0
  %409 = vmatpush1.msra.mxu0 0.0
  %410 = vmatprep.mubr.f32.mxu0 0.0
  %411 = vmatmul.mubr.f32.gmra.mrb[0].mxu0 %v344
  %v412 = vpop.f32.mrb[0].mxu0
  %v413 = vadd.f32 0.0, %v412
  %v414 = vpop.f32.mrb[0].mxu0
  %415 = vdwg.mxu0
  %v416 = vadd.f32 %v27, %v413
  %v417 = vxor.u32 %v416, 2147483648
  %v418 = vmul.f32 %v417, 1.442695
  %v419 = vpow.pop %v418
  %v420 = vadd.f32 %v419, 1.0
  %v421 = vrcp.pop %v420
  %v422 = vmul.f32 1.0, %v421
  %v423 = vtanh.pop %v416
  %v424 = vmul.f32 %v422, %v334
  %426 = vrot.lane.b32.xlu0 %v423, 64
  %v427 = vpop.permute.xlu0 %426
  %v429 = vmul.f32 %v422, %v427
  %431 = vrot.lane.b32.xlu0 %v429, 32
  %v432 = vpop.permute.xlu0 %431
  %v434 = vadd.f32 %v424, %v432
  %v435 = vtanh.pop %v434
  %437 = vrot.lane.b32.xlu0 %v435, 64
  %v438 = vpop.permute.xlu0 %437
  %v440 = vmul.f32 %v422, %v438
  %442 = vrot.lane.b32.xlu0 %v440, 32
  %v443 = vpop.permute.xlu0 %442
  %v444 = vsel %vm38, %v443, 0
  %446 = vmatprep.subr.mxu0 0.0
  %447 = vmatpush1.msra.mxu0 %v32
  %448 = vmatprep.subr.mxu0 0.0
  %449 = vmatpush1.msra.mxu0 %v33
  %450 = vmatprep.subr.mxu0 0.0
  %451 = vmatpush1.msra.mxu0 %v34
  %452 = vmatprep.subr.mxu0 0.0
  %453 = vmatpush1.msra.mxu0 %v35
  %454 = vmatprep.subr.mxu0 0.0
  %455 = vmatpush1.msra.mxu0 0.0
  %456 = vmatprep.subr.mxu0 0.0
  %457 = vmatpush1.msra.mxu0 0.0
  %458 = vmatprep.subr.mxu0 0.0
  %459 = vmatpush1.msra.mxu0 0.0
  %460 = vmatprep.subr.mxu0 0.0
  %461 = vmatpush1.msra.mxu0 0.0
  %462 = vmatprep.subr.mxu0 0.0
  %463 = vmatpush1.msra.mxu0 0.0
  %464 = vmatprep.subr.mxu0 0.0
  %465 = vmatpush1.msra.mxu0 0.0
  %466 = vmatprep.subr.mxu0 0.0
  %467 = vmatpush1.msra.mxu0 0.0
  %468 = vmatprep.subr.mxu0 0.0
  %469 = vmatpush1.msra.mxu0 0.0
  %470 = vmatprep.subr.mxu0 0.0
  %471 = vmatpush1.msra.mxu0 0.0
  %472 = vmatprep.subr.mxu0 0.0
  %473 = vmatpush1.msra.mxu0 0.0
  %474 = vmatprep.subr.mxu0 0.0
  %475 = vmatpush1.msra.mxu0 0.0
  %476 = vmatprep.subr.mxu0 0.0
  %477 = vmatpush1.msra.mxu0 0.0
  %478 = vmatprep.subr.mxu0 0.0
  %479 = vmatpush1.msra.mxu0 0.0
  %480 = vmatprep.subr.mxu0 0.0
  %481 = vmatpush1.msra.mxu0 0.0
  %482 = vmatprep.subr.mxu0 0.0
  %483 = vmatpush1.msra.mxu0 0.0
  %484 = vmatprep.subr.mxu0 0.0
  %485 = vmatpush1.msra.mxu0 0.0
  %486 = vmatprep.subr.mxu0 0.0
  %487 = vmatpush1.msra.mxu0 0.0
  %488 = vmatprep.subr.mxu0 0.0
  %489 = vmatpush1.msra.mxu0 0.0
  %490 = vmatprep.subr.mxu0 0.0
  %491 = vmatpush1.msra.mxu0 0.0
  %492 = vmatprep.subr.mxu0 0.0
  %493 = vmatpush1.msra.mxu0 0.0
  %494 = vmatprep.subr.mxu0 0.0
  %495 = vmatpush1.msra.mxu0 0.0
  %496 = vmatprep.subr.mxu0 0.0
  %497 = vmatpush1.msra.mxu0 0.0
  %498 = vmatprep.subr.mxu0 0.0
  %499 = vmatpush1.msra.mxu0 0.0
  %500 = vmatprep.subr.mxu0 0.0
  %501 = vmatpush1.msra.mxu0 0.0
  %502 = vmatprep.subr.mxu0 0.0
  %503 = vmatpush1.msra.mxu0 0.0
  %504 = vmatprep.subr.mxu0 0.0
  %505 = vmatpush1.msra.mxu0 0.0
  %506 = vmatprep.subr.mxu0 0.0
  %507 = vmatpush1.msra.mxu0 0.0
  %508 = vmatprep.subr.mxu0 0.0
  %509 = vmatpush1.msra.mxu0 0.0
  %510 = vmatprep.mubr.f32.mxu0 0.0
  %511 = vmatmul.mubr.f32.gmra.mrb[0].mxu0 %v444
  %v512 = vpop.f32.mrb[0].mxu0
  %v513 = vadd.f32 0.0, %v512
  %v514 = vpop.f32.mrb[0].mxu0
  %515 = vdwg.mxu0
  %v516 = vadd.f32 %v28, %v513
  %v517 = vxor.u32 %v516, 2147483648
  %v518 = vmul.f32 %v517, 1.442695
  %v519 = vpow.pop %v518
  %v520 = vadd.f32 %v519, 1.0
  %v521 = vrcp.pop %v520
  %v522 = vmul.f32 1.0, %v521
  %v523 = vtanh.pop %v516
  %v524 = vmul.f32 %v522, %v434
  %526 = vrot.lane.b32.xlu0 %v523, 64
  %v527 = vpop.permute.xlu0 %526
  %v529 = vmul.f32 %v522, %v527
  %531 = vrot.lane.b32.xlu0 %v529, 32
  %v532 = vpop.permute.xlu0 %531
  %v534 = vadd.f32 %v524, %v532
  %v535 = vtanh.pop %v534
  %537 = vrot.lane.b32.xlu0 %v535, 64
  %v538 = vpop.permute.xlu0 %537
  %v540 = vmul.f32 %v522, %v538
  %542 = vrot.lane.b32.xlu0 %v540, 32
  %v543 = vpop.permute.xlu0 %542
  %v544 = vsel %vm38, %v543, 0
  %546 = vmatprep.subr.mxu0 0.0
  %547 = vmatpush1.msra.mxu0 %v32
  %548 = vmatprep.subr.mxu0 0.0
  %549 = vmatpush1.msra.mxu0 %v33
  %550 = vmatprep.subr.mxu0 0.0
  %551 = vmatpush1.msra.mxu0 %v34
  %552 = vmatprep.subr.mxu0 0.0
  %553 = vmatpush1.msra.mxu0 %v35
  %554 = vmatprep.subr.mxu0 0.0
  %555 = vmatpush1.msra.mxu0 0.0
  %556 = vmatprep.subr.mxu0 0.0
  %557 = vmatpush1.msra.mxu0 0.0
  %558 = vmatprep.subr.mxu0 0.0
  %559 = vmatpush1.msra.mxu0 0.0
  %560 = vmatprep.subr.mxu0 0.0
  %561 = vmatpush1.msra.mxu0 0.0
  %562 = vmatprep.subr.mxu0 0.0
  %563 = vmatpush1.msra.mxu0 0.0
  %564 = vmatprep.subr.mxu0 0.0
  %565 = vmatpush1.msra.mxu0 0.0
  %566 = vmatprep.subr.mxu0 0.0
  %567 = vmatpush1.msra.mxu0 0.0
  %568 = vmatprep.subr.mxu0 0.0
  %569 = vmatpush1.msra.mxu0 0.0
  %570 = vmatprep.subr.mxu0 0.0
  %571 = vmatpush1.msra.mxu0 0.0
  %572 = vmatprep.subr.mxu0 0.0
  %573 = vmatpush1.msra.mxu0 0.0
  %574 = vmatprep.subr.mxu0 0.0
  %575 = vmatpush1.msra.mxu0 0.0
  %576 = vmatprep.subr.mxu0 0.0
  %577 = vmatpush1.msra.mxu0 0.0
  %578 = vmatprep.subr.mxu0 0.0
  %579 = vmatpush1.msra.mxu0 0.0
  %580 = vmatprep.subr.mxu0 0.0
  %581 = vmatpush1.msra.mxu0 0.0
  %582 = vmatprep.subr.mxu0 0.0
  %583 = vmatpush1.msra.mxu0 0.0
  %584 = vmatprep.subr.mxu0 0.0
  %585 = vmatpush1.msra.mxu0 0.0
  %586 = vmatprep.subr.mxu0 0.0
  %587 = vmatpush1.msra.mxu0 0.0
  %588 = vmatprep.subr.mxu0 0.0
  %589 = vmatpush1.msra.mxu0 0.0
  %590 = vmatprep.subr.mxu0 0.0
  %591 = vmatpush1.msra.mxu0 0.0
  %592 = vmatprep.subr.mxu0 0.0
  %593 = vmatpush1.msra.mxu0 0.0
  %594 = vmatprep.subr.mxu0 0.0
  %595 = vmatpush1.msra.mxu0 0.0
  %596 = vmatprep.subr.mxu0 0.0
  %597 = vmatpush1.msra.mxu0 0.0
  %598 = vmatprep.subr.mxu0 0.0
  %599 = vmatpush1.msra.mxu0 0.0
  %600 = vmatprep.subr.mxu0 0.0
  %601 = vmatpush1.msra.mxu0 0.0
  %602 = vmatprep.subr.mxu0 0.0
  %603 = vmatpush1.msra.mxu0 0.0
  %604 = vmatprep.subr.mxu0 0.0
  %605 = vmatpush1.msra.mxu0 0.0
  %606 = vmatprep.subr.mxu0 0.0
  %607 = vmatpush1.msra.mxu0 0.0
  %608 = vmatprep.subr.mxu0 0.0
  %609 = vmatpush1.msra.mxu0 0.0
  %610 = vmatprep.mubr.f32.mxu0 0.0
  %611 = vmatmul.mubr.f32.gmra.mrb[0].mxu0 %v544
  %v612 = vpop.f32.mrb[0].mxu0
  %v613 = vadd.f32 0.0, %v612
  %v614 = vpop.f32.mrb[0].mxu0
  %615 = vdwg.mxu0
  %v616 = vadd.f32 %v29, %v613
  %v617 = vxor.u32 %v616, 2147483648
  %v618 = vmul.f32 %v617, 1.442695
  %v619 = vpow.pop %v618
  %v620 = vadd.f32 %v619, 1.0
  %v621 = vrcp.pop %v620
  %v622 = vmul.f32 1.0, %v621
  %v623 = vtanh.pop %v616
  %v624 = vmul.f32 %v622, %v534
  %626 = vrot.lane.b32.xlu0 %v623, 64
  %v627 = vpop.permute.xlu0 %626
  %v629 = vmul.f32 %v622, %v627
  %631 = vrot.lane.b32.xlu0 %v629, 32
  %v632 = vpop.permute.xlu0 %631
  %v634 = vadd.f32 %v624, %v632
  %v635 = vtanh.pop %v634
  %637 = vrot.lane.b32.xlu0 %v635, 64
  %v638 = vpop.permute.xlu0 %637
  %v640 = vmul.f32 %v622, %v638
  %642 = vrot.lane.b32.xlu0 %v640, 32
  %v643 = vpop.permute.xlu0 %642
  %v644 = vsel %vm38, %v643, 0
  %646 = vmatprep.subr.mxu0 0.0
  %647 = vmatpush1.msra.mxu0 %v32
  %648 = vmatprep.subr.mxu0 0.0
  %649 = vmatpush1.msra.mxu0 %v33
  %650 = vmatprep.subr.mxu0 0.0
  %651 = vmatpush1.msra.mxu0 %v34
  %652 = vmatprep.subr.mxu0 0.0
  %653 = vmatpush1.msra.mxu0 %v35
  %654 = vmatprep.subr.mxu0 0.0
  %655 = vmatpush1.msra.mxu0 0.0
  %656 = vmatprep.subr.mxu0 0.0
  %657 = vmatpush1.msra.mxu0 0.0
  %658 = vmatprep.subr.mxu0 0.0
  %659 = vmatpush1.msra.mxu0 0.0
  %660 = vmatprep.subr.mxu0 0.0
  %661 = vmatpush1.msra.mxu0 0.0
  %662 = vmatprep.subr.mxu0 0.0
  %663 = vmatpush1.msra.mxu0 0.0
  %664 = vmatprep.subr.mxu0 0.0
  %665 = vmatpush1.msra.mxu0 0.0
  %666 = vmatprep.subr.mxu0 0.0
  %667 = vmatpush1.msra.mxu0 0.0
  %668 = vmatprep.subr.mxu0 0.0
  %669 = vmatpush1.msra.mxu0 0.0
  %670 = vmatprep.subr.mxu0 0.0
  %671 = vmatpush1.msra.mxu0 0.0
  %672 = vmatprep.subr.mxu0 0.0
  %673 = vmatpush1.msra.mxu0 0.0
  %674 = vmatprep.subr.mxu0 0.0
  %675 = vmatpush1.msra.mxu0 0.0
  %676 = vmatprep.subr.mxu0 0.0
  %677 = vmatpush1.msra.mxu0 0.0
  %678 = vmatprep.subr.mxu0 0.0
  %679 = vmatpush1.msra.mxu0 0.0
  %680 = vmatprep.subr.mxu0 0.0
  %681 = vmatpush1.msra.mxu0 0.0
  %682 = vmatprep.subr.mxu0 0.0
  %683 = vmatpush1.msra.mxu0 0.0
  %684 = vmatprep.subr.mxu0 0.0
  %685 = vmatpush1.msra.mxu0 0.0
  %686 = vmatprep.subr.mxu0 0.0
  %687 = vmatpush1.msra.mxu0 0.0
  %688 = vmatprep.subr.mxu0 0.0
  %689 = vmatpush1.msra.mxu0 0.0
  %690 = vmatprep.subr.mxu0 0.0
  %691 = vmatpush1.msra.mxu0 0.0
  %692 = vmatprep.subr.mxu0 0.0
  %693 = vmatpush1.msra.mxu0 0.0
  %694 = vmatprep.subr.mxu0 0.0
  %695 = vmatpush1.msra.mxu0 0.0
  %696 = vmatprep.subr.mxu0 0.0
  %697 = vmatpush1.msra.mxu0 0.0
  %698 = vmatprep.subr.mxu0 0.0
  %699 = vmatpush1.msra.mxu0 0.0
  %700 = vmatprep.subr.mxu0 0.0
  %701 = vmatpush1.msra.mxu0 0.0
  %702 = vmatprep.subr.mxu0 0.0
  %703 = vmatpush1.msra.mxu0 0.0
  %704 = vmatprep.subr.mxu0 0.0
  %705 = vmatpush1.msra.mxu0 0.0
  %706 = vmatprep.subr.mxu0 0.0
  %707 = vmatpush1.msra.mxu0 0.0
  %708 = vmatprep.subr.mxu0 0.0
  %709 = vmatpush1.msra.mxu0 0.0
  %710 = vmatprep.mubr.f32.mxu0 0.0
  %711 = vmatmul.mubr.f32.gmra.mrb[0].mxu0 %v644
  %v712 = vpop.f32.mrb[0].mxu0
  %v713 = vadd.f32 0.0, %v712
  %v714 = vpop.f32.mrb[0].mxu0
  %715 = vdwg.mxu0
  %v716 = vadd.f32 %v30, %v713
  %v717 = vxor.u32 %v716, 2147483648
  %v718 = vmul.f32 %v717, 1.442695
  %v719 = vpow.pop %v718
  %v720 = vadd.f32 %v719, 1.0
  %v721 = vrcp.pop %v720
  %v722 = vmul.f32 1.0, %v721
  %v723 = vtanh.pop %v716
  %v724 = vmul.f32 %v722, %v634
  %726 = vrot.lane.b32.xlu0 %v723, 64
  %v727 = vpop.permute.xlu0 %726
  %v729 = vmul.f32 %v722, %v727
  %731 = vrot.lane.b32.xlu0 %v729, 32
  %v732 = vpop.permute.xlu0 %731
  %v734 = vadd.f32 %v724, %v732
  %v735 = vtanh.pop %v734
  %737 = vrot.lane.b32.xlu0 %v735, 64
  %v738 = vpop.permute.xlu0 %737
  %v740 = vmul.f32 %v722, %v738
  %742 = vrot.lane.b32.xlu0 %v740, 32
  %v743 = vpop.permute.xlu0 %742
  %v744 = vsel %vm38, %v743, 0
  %746 = vmatprep.subr.mxu0 0.0
  %747 = vmatpush1.msra.mxu0 %v32
  %748 = vmatprep.subr.mxu0 0.0
  %749 = vmatpush1.msra.mxu0 %v33
  %750 = vmatprep.subr.mxu0 0.0
  %751 = vmatpush1.msra.mxu0 %v34
  %752 = vmatprep.subr.mxu0 0.0
  %753 = vmatpush1.msra.mxu0 %v35
  %754 = vmatprep.subr.mxu0 0.0
  %755 = vmatpush1.msra.mxu0 0.0
  %756 = vmatprep.subr.mxu0 0.0
  %757 = vmatpush1.msra.mxu0 0.0
  %758 = vmatprep.subr.mxu0 0.0
  %759 = vmatpush1.msra.mxu0 0.0
  %760 = vmatprep.subr.mxu0 0.0
  %761 = vmatpush1.msra.mxu0 0.0
  %762 = vmatprep.subr.mxu0 0.0
  %763 = vmatpush1.msra.mxu0 0.0
  %764 = vmatprep.subr.mxu0 0.0
  %765 = vmatpush1.msra.mxu0 0.0
  %766 = vmatprep.subr.mxu0 0.0
  %767 = vmatpush1.msra.mxu0 0.0
  %768 = vmatprep.subr.mxu0 0.0
  %769 = vmatpush1.msra.mxu0 0.0
  %770 = vmatprep.subr.mxu0 0.0
  %771 = vmatpush1.msra.mxu0 0.0
  %772 = vmatprep.subr.mxu0 0.0
  %773 = vmatpush1.msra.mxu0 0.0
  %774 = vmatprep.subr.mxu0 0.0
  %775 = vmatpush1.msra.mxu0 0.0
  %776 = vmatprep.subr.mxu0 0.0
  %777 = vmatpush1.msra.mxu0 0.0
  %778 = vmatprep.subr.mxu0 0.0
  %779 = vmatpush1.msra.mxu0 0.0
  %780 = vmatprep.subr.mxu0 0.0
  %781 = vmatpush1.msra.mxu0 0.0
  %782 = vmatprep.subr.mxu0 0.0
  %783 = vmatpush1.msra.mxu0 0.0
  %784 = vmatprep.subr.mxu0 0.0
  %785 = vmatpush1.msra.mxu0 0.0
  %786 = vmatprep.subr.mxu0 0.0
  %787 = vmatpush1.msra.mxu0 0.0
  %788 = vmatprep.subr.mxu0 0.0
  %789 = vmatpush1.msra.mxu0 0.0
  %790 = vmatprep.subr.mxu0 0.0
  %791 = vmatpush1.msra.mxu0 0.0
  %792 = vmatprep.subr.mxu0 0.0
  %793 = vmatpush1.msra.mxu0 0.0
  %794 = vmatprep.subr.mxu0 0.0
  %795 = vmatpush1.msra.mxu0 0.0
  %796 = vmatprep.subr.mxu0 0.0
  %797 = vmatpush1.msra.mxu0 0.0
  %798 = vmatprep.subr.mxu0 0.0
  %799 = vmatpush1.msra.mxu0 0.0
  %800 = vmatprep.subr.mxu0 0.0
  %801 = vmatpush1.msra.mxu0 0.0
  %802 = vmatprep.subr.mxu0 0.0
  %803 = vmatpush1.msra.mxu0 0.0
  %804 = vmatprep.subr.mxu0 0.0
  %805 = vmatpush1.msra.mxu0 0.0
  %806 = vmatprep.subr.mxu0 0.0
  %807 = vmatpush1.msra.mxu0 0.0
  %808 = vmatprep.subr.mxu0 0.0
  %809 = vmatpush1.msra.mxu0 0.0
  %810 = vmatprep.mubr.f32.mxu0 0.0
  %811 = vmatmul.mubr.f32.gmra.mrb[0].mxu0 %v744
  %v812 = vpop.f32.mrb[0].mxu0
  %v813 = vadd.f32 0.0, %v812
  %v814 = vpop.f32.mrb[0].mxu0
  %815 = vdwg.mxu0
  %v816 = vadd.f32 %v31, %v813
  %v817 = vxor.u32 %v816, 2147483648
  %v818 = vmul.f32 %v817, 1.442695
  %v819 = vpow.pop %v818
  %v820 = vadd.f32 %v819, 1.0
  %v821 = vrcp.pop %v820
  %v822 = vmul.f32 1.0, %v821
  %v823 = vtanh.pop %v816
  %v824 = vmul.f32 %v822, %v734
  %826 = vrot.lane.b32.xlu0 %v823, 64
  %v827 = vpop.permute.xlu0 %826
  %v829 = vmul.f32 %v822, %v827
  %831 = vrot.lane.b32.xlu0 %v829, 32
  %v832 = vpop.permute.xlu0 %831
  %v834 = vadd.f32 %v824, %v832
  %v835 = vtanh.pop %v834
  %837 = vrot.lane.b32.xlu0 %v835, 64
  %v838 = vpop.permute.xlu0 %837
  %v840 = vmul.f32 %v822, %v838
  %842 = vrot.lane.b32.xlu0 %v840, 32
  %v843 = vpop.permute.xlu0 %842
  %845 = vst.msk [vmem:[#allocation2] sm:$0xff] %vm38, %v843
  %847 = vrot.lane.b32.xlu0 %v834, 96
  %v848 = vpop.permute.xlu0 %847
  %850 = vst.msk [vmem:[#allocation3] sm:$0xff] %vm38, %v848
  %v851 = vld [vmem:[%s2] sm:$0xff]
  %v852 = vld [vmem:[%s2 + $0x8] sm:$0xff]
  %v853 = vld [vmem:[%s2 + $0x10] sm:$0xff]
  %v854 = vld [vmem:[%s2 + $0x18] sm:$0xff]
  %v855 = vld [vmem:[%s3] sm:$0x1]
  %v857 = vlaneseq
  %v858 = vshrl.u32 %v857, 7
  %v859 = vsub.s32 0, %v858
  %v860 = vrot.slane %v855, %v859
  %v862 = vsel %vm38, %v843, 0
  %864 = vmatprep.subr.mxu0 0.0
  %865 = vmatpush1.msra.mxu0 %v851
  %866 = vmatprep.subr.mxu0 0.0
  %867 = vmatpush1.msra.mxu0 %v852
  %868 = vmatprep.subr.mxu0 0.0
  %869 = vmatpush1.msra.mxu0 %v853
  %870 = vmatprep.subr.mxu0 0.0
  %871 = vmatpush1.msra.mxu0 %v854
  %872 = vmatprep.subr.mxu0 0.0
  %873 = vmatpush1.msra.mxu0 0.0
  %874 = vmatprep.subr.mxu0 0.0
  %875 = vmatpush1.msra.mxu0 0.0
  %876 = vmatprep.subr.mxu0 0.0
  %877 = vmatpush1.msra.mxu0 0.0
  %878 = vmatprep.subr.mxu0 0.0
  %879 = vmatpush1.msra.mxu0 0.0
  %880 = vmatprep.subr.mxu0 0.0
  %881 = vmatpush1.msra.mxu0 0.0
  %882 = vmatprep.subr.mxu0 0.0
  %883 = vmatpush1.msra.mxu0 0.0
  %884 = vmatprep.subr.mxu0 0.0
  %885 = vmatpush1.msra.mxu0 0.0
  %886 = vmatprep.subr.mxu0 0.0
  %887 = vmatpush1.msra.mxu0 0.0
  %888 = vmatprep.subr.mxu0 0.0
  %889 = vmatpush1.msra.mxu0 0.0
  %890 = vmatprep.subr.mxu0 0.0
  %891 = vmatpush1.msra.mxu0 0.0
  %892 = vmatprep.subr.mxu0 0.0
  %893 = vmatpush1.msra.mxu0 0.0
  %894 = vmatprep.subr.mxu0 0.0
  %895 = vmatpush1.msra.mxu0 0.0
  %896 = vmatprep.subr.mxu0 0.0
  %897 = vmatpush1.msra.mxu0 0.0
  %898 = vmatprep.subr.mxu0 0.0
  %899 = vmatpush1.msra.mxu0 0.0
  %900 = vmatprep.subr.mxu0 0.0
  %901 = vmatpush1.msra.mxu0 0.0
  %902 = vmatprep.subr.mxu0 0.0
  %903 = vmatpush1.msra.mxu0 0.0
  %904 = vmatprep.subr.mxu0 0.0
  %905 = vmatpush1.msra.mxu0 0.0
  %906 = vmatprep.subr.mxu0 0.0
  %907 = vmatpush1.msra.mxu0 0.0
  %908 = vmatprep.subr.mxu0 0.0
  %909 = vmatpush1.msra.mxu0 0.0
  %910 = vmatprep.subr.mxu0 0.0
  %911 = vmatpush1.msra.mxu0 0.0
  %912 = vmatprep.subr.mxu0 0.0
  %913 = vmatpush1.msra.mxu0 0.0
  %914 = vmatprep.subr.mxu0 0.0
  %915 = vmatpush1.msra.mxu0 0.0
  %916 = vmatprep.subr.mxu0 0.0
  %917 = vmatpush1.msra.mxu0 0.0
  %918 = vmatprep.subr.mxu0 0.0
  %919 = vmatpush1.msra.mxu0 0.0
  %920 = vmatprep.subr.mxu0 0.0
  %921 = vmatpush1.msra.mxu0 0.0
  %922 = vmatprep.subr.mxu0 0.0
  %923 = vmatpush1.msra.mxu0 0.0
  %924 = vmatprep.subr.mxu0 0.0
  %925 = vmatpush1.msra.mxu0 0.0
  %926 = vmatprep.subr.mxu0 0.0
  %927 = vmatpush1.msra.mxu0 0.0
  %928 = vmatprep.mubr.f32.mxu0 0.0
  %929 = vmatmul.mubr.f32.gmra.mrb[0].mxu0 %v144
  %v930 = vpop.f32.mrb[0].mxu0
  %v931 = vadd.f32 %v860, %v930
  %v932 = vpop.f32.mrb[0].mxu0
  %933 = vmatprep.mubr.f32.mxu0 0.0
  %934 = vmatmul.mubr.f32.gmra.mrb[0].mxu0 %v244
  %v935 = vpop.f32.mrb[0].mxu0
  %v936 = vadd.f32 %v860, %v935
  %v937 = vpop.f32.mrb[0].mxu0
  %938 = vmatprep.mubr.f32.mxu0 0.0
  %939 = vmatmul.mubr.f32.gmra.mrb[0].mxu0 %v344
  %v940 = vpop.f32.mrb[0].mxu0
  %v941 = vadd.f32 %v860, %v940
  %v942 = vpop.f32.mrb[0].mxu0
  %943 = vmatprep.mubr.f32.mxu0 0.0
  %944 = vmatmul.mubr.f32.gmra.mrb[0].mxu0 %v444
  %v945 = vpop.f32.mrb[0].mxu0
  %v946 = vadd.f32 %v860, %v945
  %v947 = vpop.f32.mrb[0].mxu0
  %948 = vmatprep.mubr.f32.mxu0 0.0
  %949 = vmatmul.mubr.f32.gmra.mrb[0].mxu0 %v544
  %v950 = vpop.f32.mrb[0].mxu0
  %v951 = vadd.f32 %v860, %v950
  %v952 = vpop.f32.mrb[0].mxu0
  %953 = vmatprep.mubr.f32.mxu0 0.0
  %954 = vmatmul.mubr.f32.gmra.mrb[0].mxu0 %v644
  %v955 = vpop.f32.mrb[0].mxu0
  %v956 = vadd.f32 %v860, %v955
  %v957 = vpop.f32.mrb[0].mxu0
  %958 = vmatprep.mubr.f32.mxu0 0.0
  %959 = vmatmul.mubr.f32.gmra.mrb[0].mxu0 %v744
  %v960 = vpop.f32.mrb[0].mxu0
  %v961 = vadd.f32 %v860, %v960
  %v962 = vpop.f32.mrb[0].mxu0
  %963 = vmatprep.mubr.f32.mxu0 0.0
  %964 = vmatmul.mubr.f32.gmra.mrb[0].mxu0 %v862
  %v965 = vpop.f32.mrb[0].mxu0
  %v966 = vadd.f32 %v860, %v965
  %v967 = vpop.f32.mrb[0].mxu0
  %968 = vdwg.mxu0
  %vm969 = vcmask 48128
  %970 = vst.msk [vmem:[%s4] sm:$0xff] %vm969, %v931
  %971 = vst.msk [vmem:[%s4 + $0x8] sm:$0xff] %vm969, %v936
  %972 = vst.msk [vmem:[%s4 + $0x10] sm:$0xff] %vm969, %v941
  %973 = vst.msk [vmem:[%s4 + $0x18] sm:$0xff] %vm969, %v946
  %974 = vst.msk [vmem:[%s4 + $0x20] sm:$0xff] %vm969, %v951
  %975 = vst.msk [vmem:[%s4 + $0x28] sm:$0xff] %vm969, %v956
  %976 = vst.msk [vmem:[%s4 + $0x30] sm:$0xff] %vm969, %v961
  %977 = vst.msk [vmem:[%s4 + $0x38] sm:$0xff] %vm969, %v966
  // Predicated region
  $region22: #{rnn_decoder_forward.5} parent=0 // pred_check
    _
  $region23: #{rnn_decoder_forward.5} parent=0 // pred_check_branch
    %979 = sbr.rel (0) target = $region25
  $region24: #{rnn_decoder_forward.5} parent=0 // pred_region
    _
  $region25: #{rnn_decoder_forward.5} parent=0 // pred_fallthru
    _
  // Predicated region
  $region26: #{rnn_decoder_forward.5} parent=0 // pred_check
    _
  $region27: #{rnn_decoder_forward.5} parent=0 // pred_check_branch
    %981 = sbr.rel (0) target = $region29
  $region28: #{rnn_decoder_forward.5} parent=0 // pred_region
    _
  $region29: #{rnn_decoder_forward.5} parent=0 // pred_fallthru
    _

</llo_original>
